<compile_context>
chip_gen: v7x
topology: tpu7x:2x2x1
jax: 0.10.0
libtpu: 0.0.40
codegen_flags: <defaults>
</compile_context>

<pallas_src>
import functools

import jax
import jax.numpy as jnp
from jax.experimental import pallas as pl
from jax.experimental.pallas import tpu as pltpu


# --------------------------------------------------------------------------- #
# Fused window-attention kernel: one grid step = WB windows, all heads.
# --------------------------------------------------------------------------- #
def _window_attn_kernel(*refs, num_heads, has_mask):
    if has_mask:
        (x_ref, wqkv_ref, bqkv_ref, wproj_ref, bproj_ref, rpb_ref, mask_ref,
         o_ref, qkv_scr, ctx_scr) = refs
    else:
        (x_ref, wqkv_ref, bqkv_ref, wproj_ref, bproj_ref, rpb_ref,
         o_ref, qkv_scr, ctx_scr) = refs
        mask_ref = None

    # x_ref:     (WB, N, C)         wqkv_ref: (C, 3C) bf16   bqkv_ref: (1, 3C) f32
    # wproj_ref: (C, C) bf16        bproj_ref:(1, C)  f32
    # rpb_ref:   (1, H, N, N) f32   mask_ref: (WB, N, N) f32 (optional)
    # o_ref:     (WB, N, C)
    # qkv_scr:   (WB*N, 3C) bf16    ctx_scr:  (WB*N, C) bf16
    WB, N, C = x_ref.shape
    Dh = C // num_heads

    # Fused QKV projection: one bf16 MXU matmul, f32 accumulation, then stage
    # the result in VMEM so per-head slices are cheap ref loads.
    xv = x_ref[...].reshape(WB * N, C).astype(jnp.bfloat16)
    qkv = jnp.dot(xv, wqkv_ref[...], preferred_element_type=jnp.float32)
    qkv_scr[...] = (qkv + bqkv_ref[...]).astype(qkv_scr.dtype)

    rpb = rpb_ref[0]                                       # (H, N, N) f32
    if has_mask:
        mask = mask_ref[...]                               # (WB, N, N) f32

    for h in range(num_heads):                             # static unroll
        qh = qkv_scr[:, h * Dh:(h + 1) * Dh].reshape(WB, N, Dh)          # bf16
        kh = qkv_scr[:, C + h * Dh:C + (h + 1) * Dh].reshape(WB, N, Dh)
        vh = qkv_scr[:, 2 * C + h * Dh:2 * C + (h + 1) * Dh].reshape(WB, N, Dh)

        s = jnp.einsum('bnd,bmd->bnm', qh, kh,
                       preferred_element_type=jnp.float32)               # (WB,N,N)
        s = s + rpb[h]
        if has_mask:
            s = s + mask
        s = s - jnp.max(s, axis=-1, keepdims=True)
        p = jnp.exp(s)
        p = p * pl.reciprocal(jnp.sum(p, axis=-1, keepdims=True), approx=True)

        av = jnp.einsum('bnm,bmd->bnd', p.astype(jnp.bfloat16), vh,
                        preferred_element_type=jnp.float32)              # (WB,N,Dh)
        # Write this head's context directly at its lane offset (no concat).
        ctx_scr[:, h * Dh:(h + 1) * Dh] = (
            av.reshape(WB * N, Dh).astype(ctx_scr.dtype))

    out = jnp.dot(ctx_scr[...], wproj_ref[...],
                  preferred_element_type=jnp.float32)
    out = out + bproj_ref[...]
    o_ref[...] = out.reshape(WB, N, C).astype(o_ref.dtype)


# --------------------------------------------------------------------------- #
# Helpers
# --------------------------------------------------------------------------- #
def relative_position_index(window_size):
    """Matches the PyTorch buffer construction (indexing='ij')."""
    Wh, Ww = window_size
    coords = jnp.stack(jnp.meshgrid(jnp.arange(Wh), jnp.arange(Ww),
                                    indexing='ij'))              # (2, Wh, Ww)
    flat = coords.reshape(2, -1)                                 # (2, N)
    rel = flat[:, :, None] - flat[:, None, :]                    # (2, N, N)
    rel = jnp.transpose(rel, (1, 2, 0))                          # (N, N, 2)
    rel = rel.at[:, :, 0].add(Wh - 1)
    rel = rel.at[:, :, 1].add(Ww - 1)
    rel = rel.at[:, :, 0].multiply(2 * Ww - 1)
    return rel.sum(-1)                                           # (N, N)


def _vmem_plan(B_, N, C, num_heads, nW, x_bytes):
    """Pick WB (windows per grid step) and an explicit VMEM limit.

    Targets: WB*N >= 256 matmul rows where possible; per-step working set
    under ~40 MiB (conservative so it also fits v7x's 64 MiB VMEM and a bumped
    v5e scoped limit); grid length >= 2 so the "parallel" axis can be sharded
    across v7x's two TensorCores.
    """
    budget = 40 << 20
    # Grid-invariant operands (assume double-buffered as the worst case):
    # bf16 W_qkv + W_proj, f32 biases, f32 rel-pos bias.
    resident = 2 * (4 * C * C * 2 + 4 * C * 4 + num_heads * N * N * 4)

    def step_bytes(wb):
        return (4 * wb * N * C * x_bytes          # 2x x block + 2x out block
                + wb * N * 4 * C * 2              # qkv + ctx bf16 scratch
                + 4 * wb * N * N * 4              # softmax temporaries (f32)
                + (2 * wb * N * N * 4 if nW is not None else 0))   # mask block

    cands = []
    for wb in range(1, B_ + 1):
        if B_ % wb:
            continue
        if nW is not None and nW % wb:
            continue
        if resident + step_bytes(wb) > budget:
            continue
        if B_ > 1 and wb > 1 and B_ // wb < 2:    # keep >=2 grid steps
            continue
        cands.append(wb)
    if not cands:
        cands = [1]
    full = [wb for wb in cands if wb * N >= 256]
    wb = min(full) if full else max(cands)

    vmem_limit = int(min(max(2 * (resident + step_bytes(wb)) + (8 << 20),
                             32 << 20), 100 << 20))
    return wb, vmem_limit


# --------------------------------------------------------------------------- #
# Wrapper
# --------------------------------------------------------------------------- #
def window_attention_pallas(x, params, *, num_heads, window_size, mask=None,
                            qk_scale=None):
    B_, N, C = x.shape
    assert C % num_heads == 0
    Dh = C // num_heads
    scale = qk_scale if qk_scale is not None else Dh ** (-0.5)

    # Relative-position-bias gather (parameter-only, tiny) done host-side.
    rpi = relative_position_index(window_size)                   # (N, N)
    rpb = params["rpb_table"][rpi.reshape(-1)]                   # (N*N, H)
    rpb = rpb.reshape(N, N, num_heads).transpose(2, 0, 1)        # (H, N, N)
    rpb = rpb[None].astype(jnp.float32)                          # (1, H, N, N)

    # Fold the qk scale into the q columns of W_qkv / b_qkv; cast weights bf16.
    wqkv_t = params["w_qkv"].T.astype(jnp.float32)               # (C, 3C)
    wqkv_t = wqkv_t.at[:, :C].multiply(scale)
    bqkv = params["b_qkv"].astype(jnp.float32)
    bqkv = bqkv.at[:C].multiply(scale).reshape(1, 3 * C)
    wqkv_bf = wqkv_t.astype(jnp.bfloat16)
    wproj_bf = params["w_proj"].T.astype(jnp.bfloat16)           # (C, C)
    bproj = params["b_proj"].reshape(1, C).astype(jnp.float32)

    nW = None
    if mask is not None:
        nW = mask.shape[0]
        # Standard Swin layout: batch index b corresponds to window b % nW
        # (windows-fastest ordering).
        assert B_ % nW == 0, "B_ must be batch * num_windows (windows-fastest)"
        mask = mask.astype(jnp.float32)

    WB, vmem_limit = _vmem_plan(B_, N, C, num_heads, nW, x.dtype.itemsize)
    grid = (B_ // WB,)

    kernel = functools.partial(_window_attn_kernel, num_heads=num_heads,
                               has_mask=mask is not None)

    def build(single_buffer):
        # Single-buffer grid-invariant operands (constant index_map) to halve
        # their VMEM footprint; fall back to default double-buffering if this
        # jax version does not accept pipeline_mode on a top-level pallas_call.
        inv = ({"pipeline_mode": pl.Buffered(buffer_count=1)}
               if single_buffer else {})
        in_specs = [
            pl.BlockSpec((WB, N, C), lambda g: (g, 0, 0)),
            pl.BlockSpec((C, 3 * C), lambda g: (0, 0), **inv),
            pl.BlockSpec((1, 3 * C), lambda g: (0, 0), **inv),
            pl.BlockSpec((C, C), lambda g: (0, 0), **inv),
            pl.BlockSpec((1, C), lambda g: (0, 0), **inv),
            pl.BlockSpec((1, num_heads, N, N), lambda g: (0, 0, 0, 0), **inv),
        ]
        args = [x, wqkv_bf, bqkv, wproj_bf, bproj, rpb]
        if mask is not None:
            nb = nW // WB
            in_specs.append(pl.BlockSpec((WB, N, N), lambda g: (g % nb, 0, 0)))
            args.append(mask)

        return pl.pallas_call(
            kernel,
            out_shape=jax.ShapeDtypeStruct((B_, N, C), x.dtype),
            grid_spec=pltpu.PrefetchScalarGridSpec(
                num_scalar_prefetch=0,
                grid=grid,
                in_specs=in_specs,
                out_specs=pl.BlockSpec((WB, N, C), lambda g: (g, 0, 0)),
                scratch_shapes=[
                    pltpu.VMEM((WB * N, 3 * C), jnp.bfloat16),   # staged qkv
                    pltpu.VMEM((WB * N, C), jnp.bfloat16),       # merged ctx
                ]),
            compiler_params=pltpu.CompilerParams(
                dimension_semantics=("parallel",),
                vmem_limit_bytes=vmem_limit),
        )(*args)

    try:
        return build(single_buffer=True)
    except Exception:
        # TODO(synk): pl.Buffered(1) rejected by this jax version for top-level
        # pallas_call pipelining; default double-buffering used instead.
        return build(single_buffer=False)


# --------------------------------------------------------------------------- #
# Pure-JAX reference (mirrors the PyTorch forward, f32)
# --------------------------------------------------------------------------- #
def ref_window_attention(x, params, *, num_heads, window_size, mask=None):
    B_, N, C = x.shape
    Dh = C // num_heads
    scale = Dh ** (-0.5)

    qkv = x @ params["w_qkv"].T + params["b_qkv"]                # (B_, N, 3C)
    qkv = qkv.reshape(B_, N, 3, num_heads, Dh).transpose(2, 0, 3, 1, 4)
    q, k, v = qkv[0], qkv[1], qkv[2]
    q = q * scale
    attn = jnp.einsum('bhnd,bhmd->bhnm', q, k)                   # (B_, H, N, N)

    rpi = relative_position_index(window_size)
    rpb = params["rpb_table"][rpi.reshape(-1)].reshape(N, N, num_heads)
    rpb = jnp.transpose(rpb, (2, 0, 1))                          # (H, N, N)
    attn = attn + rpb[None]

    if mask is not None:
        nW = mask.shape[0]
        attn = attn.reshape(B_ // nW, nW, num_heads, N, N) + mask[None, :, None]
        attn = attn.reshape(B_, num_heads, N, N)

    attn = jax.nn.softmax(attn, axis=-1)
    out = jnp.einsum('bhnm,bhmd->bhnd', attn, v)                 # (B_, H, N, Dh)
    out = out.transpose(0, 2, 1, 3).reshape(B_, N, C)
    return out @ params["w_proj"].T + params["b_proj"]


# --------------------------------------------------------------------------- #
if __name__ == "__main__":
    dim = 32
    window = (4, 4)
    num_heads = 4
    B, nW = 2, 4
    N = window[0] * window[1]
    B_ = B * nW

    key = jax.random.PRNGKey(0)
    ks = jax.random.split(key, 8)

    params = {
        # PyTorch nn.Linear layouts: W (out, in), b (out,)
        "w_qkv":  0.05 * jax.random.normal(ks[0], (3 * dim, dim), jnp.float32),
        "b_qkv":  0.05 * jax.random.normal(ks[1], (3 * dim,), jnp.float32),
        "w_proj": 0.05 * jax.random.normal(ks[2], (dim, dim), jnp.float32),
        "b_proj": 0.05 * jax.random.normal(ks[3], (dim,), jnp.float32),
        "rpb_table": 0.02 * jax.random.normal(
            ks[4], ((2 * window[0] - 1) * (2 * window[1] - 1), num_heads),
            jnp.float32),
    }

    x = jax.random.normal(ks[5], (B_, N, dim), jnp.float32)
    # shifted-window style additive mask (0 / -100), shape (nW, N, N)
    mask = jnp.where(jax.random.uniform(ks[6], (nW, N, N)) < 0.25,
                     -100.0, 0.0).astype(jnp.float32)

    out_nomask = jax.block_until_ready(window_attention_pallas(
        x, params, num_heads=num_heads, window_size=window, mask=None))
    out_masked = jax.block_until_ready(window_attention_pallas(
        x, params, num_heads=num_heads, window_size=window, mask=mask))

    ref_nomask = ref_window_attention(
        x, params, num_heads=num_heads, window_size=window, mask=None)
    ref_masked = ref_window_attention(
        x, params, num_heads=num_heads, window_size=window, mask=mask)

    assert out_nomask.shape == (B_, N, dim), out_nomask.shape
    # bf16 MXU path + approx reciprocal => loosened tolerance vs f32 reference.
    assert jnp.allclose(out_nomask, ref_nomask, rtol=1e-2, atol=1e-2), \
        float(jnp.max(jnp.abs(out_nomask - ref_nomask)))
    assert jnp.allclose(out_masked, ref_masked, rtol=1e-2, atol=1e-2), \
        float(jnp.max(jnp.abs(out_masked - ref_masked)))

    print("KERNEL_OK")
</pallas_src>

<mosaic_0001>
module attributes {stable_mosaic.version = 11 : i64} {
  func.func @_window_attn_kernel(%arg0: i32, %arg1: memref<4x16x32xf32, #tpu.memory_space<vmem>>, %arg2: memref<32x96xbf16, #tpu.memory_space<vmem>>, %arg3: memref<1x96xf32, #tpu.memory_space<vmem>>, %arg4: memref<32x32xbf16, #tpu.memory_space<vmem>>, %arg5: memref<1x32xf32, #tpu.memory_space<vmem>>, %arg6: memref<1x4x16x16xf32, #tpu.memory_space<vmem>>, %arg7: memref<4x16x32xf32, #tpu.memory_space<vmem>>, %arg8: memref<64x96xbf16, #tpu.memory_space<vmem>>, %arg9: memref<64x32xbf16, #tpu.memory_space<vmem>>) attributes {dimension_semantics = [#tpu.dimension_semantics<parallel>], iteration_bounds = array<i64: 2>, scalar_prefetch = 0 : i64, scratch_operands = 2 : i64, tpu.core_type = #tpu.core_type<tc>, window_params = [{transform_indices = @transform_0, window_bounds = array<i64: 4, 16, 32>}, {pipeline_mode = #tpu.pipeline_mode<synchronous>, transform_indices = @transform_1, window_bounds = array<i64: 32, 96>}, {pipeline_mode = #tpu.pipeline_mode<synchronous>, transform_indices = @transform_2, window_bounds = array<i64: 1, 96>}, {pipeline_mode = #tpu.pipeline_mode<synchronous>, transform_indices = @transform_3, window_bounds = array<i64: 32, 32>}, {pipeline_mode = #tpu.pipeline_mode<synchronous>, transform_indices = @transform_4, window_bounds = array<i64: 1, 32>}, {pipeline_mode = #tpu.pipeline_mode<synchronous>, transform_indices = @transform_5, window_bounds = array<i64: 1, 4, 16, 16>}, {transform_indices = @transform_6, window_bounds = array<i64: 4, 16, 32>}]} {
    %c0 = arith.constant 0 : index
    %c0_0 = arith.constant 0 : index
    %c0_1 = arith.constant 0 : index
    %0 = vector.load %arg1[%c0, %c0_0, %c0_1] : memref<4x16x32xf32, #tpu.memory_space<vmem>>, vector<4x16x32xf32>
    %1 = vector.shape_cast %0 : vector<4x16x32xf32> to vector<64x32xf32>
    %2 = arith.truncf %1 : vector<64x32xf32> to vector<64x32xbf16>
    %c0_2 = arith.constant 0 : index
    %c0_3 = arith.constant 0 : index
    %3 = vector.load %arg2[%c0_2, %c0_3] : memref<32x96xbf16, #tpu.memory_space<vmem>>, vector<32x96xbf16>
    %cst = arith.constant dense<0.000000e+00> : vector<64x96xf32>
    %4 = tpu.matmul %2, %3, %cst {dimension_numbers = #tpu.dot_dimension_numbers<[1], [0], [0], [1], [0, 0, 1, 1], [], []>} : vector<64x32xbf16>, vector<32x96xbf16>, vector<64x96xf32> -> vector<64x96xf32>
    %c0_4 = arith.constant 0 : index
    %c0_5 = arith.constant 0 : index
    %5 = vector.load %arg3[%c0_4, %c0_5] : memref<1x96xf32, #tpu.memory_space<vmem>>, vector<1x96xf32>
    %6 = vector.broadcast %5 : vector<1x96xf32> to vector<64x96xf32>
    %7 = arith.addf %4, %6 : vector<64x96xf32>
    %8 = arith.truncf %7 : vector<64x96xf32> to vector<64x96xbf16>
    %c0_6 = arith.constant 0 : index
    %c0_7 = arith.constant 0 : index
    %9 = vector.load %arg8[%c0_6, %c0_7] : memref<64x96xbf16, #tpu.memory_space<vmem>>, vector<64x96xbf16>
    tpu.vector_store %arg8[%c0_6, %c0_7], %8 {strides = array<i32>} : memref<64x96xbf16, #tpu.memory_space<vmem>>, vector<64x96xbf16>,
    %c0_8 = arith.constant 0 : index
    %c0_9 = arith.constant 0 : index
    %c0_10 = arith.constant 0 : index
    %c0_11 = arith.constant 0 : index
    %10 = vector.load %arg6[%c0_8, %c0_9, %c0_10, %c0_11] : memref<1x4x16x16xf32, #tpu.memory_space<vmem>>, vector<1x4x16x16xf32>
    %11 = vector.shape_cast %10 : vector<1x4x16x16xf32> to vector<4x16x16xf32>
    %c0_12 = arith.constant 0 : index
    %c0_13 = arith.constant 0 : index
    %12 = vector.load %arg8[%c0_12, %c0_13] : memref<64x96xbf16, #tpu.memory_space<vmem>>, vector<64x8xbf16>
    %13 = vector.shape_cast %12 : vector<64x8xbf16> to vector<4x16x8xbf16>
    %c0_14 = arith.constant 0 : index
    %c32 = arith.constant 32 : index
    %14 = vector.load %arg8[%c0_14, %c32] : memref<64x96xbf16, #tpu.memory_space<vmem>>, vector<64x8xbf16>
    %15 = vector.shape_cast %14 : vector<64x8xbf16> to vector<4x16x8xbf16>
    %c0_15 = arith.constant 0 : index
    %c64 = arith.constant 64 : index
    %16 = vector.load %arg8[%c0_15, %c64] : memref<64x96xbf16, #tpu.memory_space<vmem>>, vector<64x8xbf16>
    %17 = vector.shape_cast %16 : vector<64x8xbf16> to vector<4x16x8xbf16>
    "tpu.trace_start"() <{level = 10 : i32, message = "bnd,bmd->bnm"}> : () -> ()
    %cst_16 = arith.constant dense<0.000000e+00> : vector<4x16x16xf32>
    %18 = tpu.matmul %13, %15, %cst_16 {dimension_numbers = #tpu.dot_dimension_numbers<[2], [2], [1], [1], [0, 0, 0, 1, 1, 1], [0], [0]>} : vector<4x16x8xbf16>, vector<4x16x8xbf16>, vector<4x16x16xf32> -> vector<4x16x16xf32>
    "tpu.trace_stop"() : () -> ()
    %19 = vector.extract_strided_slice %11 {offsets = [0, 0, 0], sizes = [1, 16, 16], strides = [1, 1, 1]} : vector<4x16x16xf32> to vector<1x16x16xf32>
    %20 = vector.shape_cast %19 : vector<1x16x16xf32> to vector<16x16xf32>
    %21 = vector.shape_cast %20 : vector<16x16xf32> to vector<1x16x16xf32>
    %22 = vector.broadcast %21 : vector<1x16x16xf32> to vector<4x16x16xf32>
    %23 = arith.addf %18, %22 : vector<4x16x16xf32>
    %cst_17 = arith.constant dense<0xFF800000> : vector<4x16xf32>
    %24 = vector.multi_reduction <maximumf>, %23, %cst_17 [2] : vector<4x16x16xf32> to vector<4x16xf32>
    %25 = vector.shape_cast %24 : vector<4x16xf32> to vector<4x16x1xf32>
    %26 = vector.broadcast %25 : vector<4x16x1xf32> to vector<4x16x16xf32>
    %27 = arith.subf %23, %26 : vector<4x16x16xf32>
    %28 = math.exp %27 : vector<4x16x16xf32>
    %cst_18 = arith.constant dense<0.000000e+00> : vector<4x16xf32>
    %29 = vector.multi_reduction <add>, %28, %cst_18 [2] : vector<4x16x16xf32> to vector<4x16xf32>
    %30 = vector.shape_cast %29 : vector<4x16xf32> to vector<4x16x1xf32>
    %31 = tpu.reciprocal %30 {approx = true} : vector<4x16x1xf32> -> vector<4x16x1xf32>
    %32 = vector.broadcast %31 : vector<4x16x1xf32> to vector<4x16x16xf32>
    %33 = arith.mulf %28, %32 : vector<4x16x16xf32>
    %34 = arith.truncf %33 : vector<4x16x16xf32> to vector<4x16x16xbf16>
    "tpu.trace_start"() <{level = 10 : i32, message = "bnm,bmd->bnd"}> : () -> ()
    %cst_19 = arith.constant dense<0.000000e+00> : vector<4x16x8xf32>
    %35 = tpu.matmul %34, %17, %cst_19 {dimension_numbers = #tpu.dot_dimension_numbers<[2], [1], [1], [2], [0, 0, 0, 1, 1, 2], [0], [0]>} : vector<4x16x16xbf16>, vector<4x16x8xbf16>, vector<4x16x8xf32> -> vector<4x16x8xf32>
    "tpu.trace_stop"() : () -> ()
    %36 = vector.shape_cast %35 : vector<4x16x8xf32> to vector<64x8xf32>
    %37 = arith.truncf %36 : vector<64x8xf32> to vector<64x8xbf16>
    %c0_20 = arith.constant 0 : index
    %c0_21 = arith.constant 0 : index
    %38 = vector.load %arg9[%c0_20, %c0_21] : memref<64x32xbf16, #tpu.memory_space<vmem>>, vector<64x8xbf16>
    tpu.vector_store %arg9[%c0_20, %c0_21], %37 {strides = array<i32>} : memref<64x32xbf16, #tpu.memory_space<vmem>>, vector<64x8xbf16>,
    %c0_22 = arith.constant 0 : index
    %c8 = arith.constant 8 : index
    %39 = vector.load %arg8[%c0_22, %c8] : memref<64x96xbf16, #tpu.memory_space<vmem>>, vector<64x8xbf16>
    %40 = vector.shape_cast %39 : vector<64x8xbf16> to vector<4x16x8xbf16>
    %c0_23 = arith.constant 0 : index
    %c40 = arith.constant 40 : index
    %41 = vector.load %arg8[%c0_23, %c40] : memref<64x96xbf16, #tpu.memory_space<vmem>>, vector<64x8xbf16>
    %42 = vector.shape_cast %41 : vector<64x8xbf16> to vector<4x16x8xbf16>
    %c0_24 = arith.constant 0 : index
    %c72 = arith.constant 72 : index
    %43 = vector.load %arg8[%c0_24, %c72] : memref<64x96xbf16, #tpu.memory_space<vmem>>, vector<64x8xbf16>
    %44 = vector.shape_cast %43 : vector<64x8xbf16> to vector<4x16x8xbf16>
    "tpu.trace_start"() <{level = 10 : i32, message = "bnd,bmd->bnm"}> : () -> ()
    %cst_25 = arith.constant dense<0.000000e+00> : vector<4x16x16xf32>
    %45 = tpu.matmul %40, %42, %cst_25 {dimension_numbers = #tpu.dot_dimension_numbers<[2], [2], [1], [1], [0, 0, 0, 1, 1, 1], [0], [0]>} : vector<4x16x8xbf16>, vector<4x16x8xbf16>, vector<4x16x16xf32> -> vector<4x16x16xf32>
    "tpu.trace_stop"() : () -> ()
    %46 = vector.extract_strided_slice %11 {offsets = [1, 0, 0], sizes = [1, 16, 16], strides = [1, 1, 1]} : vector<4x16x16xf32> to vector<1x16x16xf32>
    %47 = vector.shape_cast %46 : vector<1x16x16xf32> to vector<16x16xf32>
    %48 = vector.shape_cast %47 : vector<16x16xf32> to vector<1x16x16xf32>
    %49 = vector.broadcast %48 : vector<1x16x16xf32> to vector<4x16x16xf32>
    %50 = arith.addf %45, %49 : vector<4x16x16xf32>
    %cst_26 = arith.constant dense<0xFF800000> : vector<4x16xf32>
    %51 = vector.multi_reduction <maximumf>, %50, %cst_26 [2] : vector<4x16x16xf32> to vector<4x16xf32>
    %52 = vector.shape_cast %51 : vector<4x16xf32> to vector<4x16x1xf32>
    %53 = vector.broadcast %52 : vector<4x16x1xf32> to vector<4x16x16xf32>
    %54 = arith.subf %50, %53 : vector<4x16x16xf32>
    %55 = math.exp %54 : vector<4x16x16xf32>
    %cst_27 = arith.constant dense<0.000000e+00> : vector<4x16xf32>
    %56 = vector.multi_reduction <add>, %55, %cst_27 [2] : vector<4x16x16xf32> to vector<4x16xf32>
    %57 = vector.shape_cast %56 : vector<4x16xf32> to vector<4x16x1xf32>
    %58 = tpu.reciprocal %57 {approx = true} : vector<4x16x1xf32> -> vector<4x16x1xf32>
    %59 = vector.broadcast %58 : vector<4x16x1xf32> to vector<4x16x16xf32>
    %60 = arith.mulf %55, %59 : vector<4x16x16xf32>
    %61 = arith.truncf %60 : vector<4x16x16xf32> to vector<4x16x16xbf16>
    "tpu.trace_start"() <{level = 10 : i32, message = "bnm,bmd->bnd"}> : () -> ()
    %cst_28 = arith.constant dense<0.000000e+00> : vector<4x16x8xf32>
    %62 = tpu.matmul %61, %44, %cst_28 {dimension_numbers = #tpu.dot_dimension_numbers<[2], [1], [1], [2], [0, 0, 0, 1, 1, 2], [0], [0]>} : vector<4x16x16xbf16>, vector<4x16x8xbf16>, vector<4x16x8xf32> -> vector<4x16x8xf32>
    "tpu.trace_stop"() : () -> ()
    %63 = vector.shape_cast %62 : vector<4x16x8xf32> to vector<64x8xf32>
    %64 = arith.truncf %63 : vector<64x8xf32> to vector<64x8xbf16>
    %c0_29 = arith.constant 0 : index
    %c8_30 = arith.constant 8 : index
    %65 = vector.load %arg9[%c0_29, %c8_30] : memref<64x32xbf16, #tpu.memory_space<vmem>>, vector<64x8xbf16>
    tpu.vector_store %arg9[%c0_29, %c8_30], %64 {strides = array<i32>} : memref<64x32xbf16, #tpu.memory_space<vmem>>, vector<64x8xbf16>,
    %c0_31 = arith.constant 0 : index
    %c16 = arith.constant 16 : index
    %66 = vector.load %arg8[%c0_31, %c16] : memref<64x96xbf16, #tpu.memory_space<vmem>>, vector<64x8xbf16>
    %67 = vector.shape_cast %66 : vector<64x8xbf16> to vector<4x16x8xbf16>
    %c0_32 = arith.constant 0 : index
    %c48 = arith.constant 48 : index
    %68 = vector.load %arg8[%c0_32, %c48] : memref<64x96xbf16, #tpu.memory_space<vmem>>, vector<64x8xbf16>
    %69 = vector.shape_cast %68 : vector<64x8xbf16> to vector<4x16x8xbf16>
    %c0_33 = arith.constant 0 : index
    %c80 = arith.constant 80 : index
    %70 = vector.load %arg8[%c0_33, %c80] : memref<64x96xbf16, #tpu.memory_space<vmem>>, vector<64x8xbf16>
    %71 = vector.shape_cast %70 : vector<64x8xbf16> to vector<4x16x8xbf16>
    "tpu.trace_start"() <{level = 10 : i32, message = "bnd,bmd->bnm"}> : () -> ()
    %cst_34 = arith.constant dense<0.000000e+00> : vector<4x16x16xf32>
    %72 = tpu.matmul %67, %69, %cst_34 {dimension_numbers = #tpu.dot_dimension_numbers<[2], [2], [1], [1], [0, 0, 0, 1, 1, 1], [0], [0]>} : vector<4x16x8xbf16>, vector<4x16x8xbf16>, vector<4x16x16xf32> -> vector<4x16x16xf32>
    "tpu.trace_stop"() : () -> ()
    %73 = vector.extract_strided_slice %11 {offsets = [2, 0, 0], sizes = [1, 16, 16], strides = [1, 1, 1]} : vector<4x16x16xf32> to vector<1x16x16xf32>
    %74 = vector.shape_cast %73 : vector<1x16x16xf32> to vector<16x16xf32>
    %75 = vector.shape_cast %74 : vector<16x16xf32> to vector<1x16x16xf32>
    %76 = vector.broadcast %75 : vector<1x16x16xf32> to vector<4x16x16xf32>
    %77 = arith.addf %72, %76 : vector<4x16x16xf32>
    %cst_35 = arith.constant dense<0xFF800000> : vector<4x16xf32>
    %78 = vector.multi_reduction <maximumf>, %77, %cst_35 [2] : vector<4x16x16xf32> to vector<4x16xf32>
    %79 = vector.shape_cast %78 : vector<4x16xf32> to vector<4x16x1xf32>
    %80 = vector.broadcast %79 : vector<4x16x1xf32> to vector<4x16x16xf32>
    %81 = arith.subf %77, %80 : vector<4x16x16xf32>
    %82 = math.exp %81 : vector<4x16x16xf32>
    %cst_36 = arith.constant dense<0.000000e+00> : vector<4x16xf32>
    %83 = vector.multi_reduction <add>, %82, %cst_36 [2] : vector<4x16x16xf32> to vector<4x16xf32>
    %84 = vector.shape_cast %83 : vector<4x16xf32> to vector<4x16x1xf32>
    %85 = tpu.reciprocal %84 {approx = true} : vector<4x16x1xf32> -> vector<4x16x1xf32>
    %86 = vector.broadcast %85 : vector<4x16x1xf32> to vector<4x16x16xf32>
    %87 = arith.mulf %82, %86 : vector<4x16x16xf32>
    %88 = arith.truncf %87 : vector<4x16x16xf32> to vector<4x16x16xbf16>
    "tpu.trace_start"() <{level = 10 : i32, message = "bnm,bmd->bnd"}> : () -> ()
    %cst_37 = arith.constant dense<0.000000e+00> : vector<4x16x8xf32>
    %89 = tpu.matmul %88, %71, %cst_37 {dimension_numbers = #tpu.dot_dimension_numbers<[2], [1], [1], [2], [0, 0, 0, 1, 1, 2], [0], [0]>} : vector<4x16x16xbf16>, vector<4x16x8xbf16>, vector<4x16x8xf32> -> vector<4x16x8xf32>
    "tpu.trace_stop"() : () -> ()
    %90 = vector.shape_cast %89 : vector<4x16x8xf32> to vector<64x8xf32>
    %91 = arith.truncf %90 : vector<64x8xf32> to vector<64x8xbf16>
    %c0_38 = arith.constant 0 : index
    %c16_39 = arith.constant 16 : index
    %92 = vector.load %arg9[%c0_38, %c16_39] : memref<64x32xbf16, #tpu.memory_space<vmem>>, vector<64x8xbf16>
    tpu.vector_store %arg9[%c0_38, %c16_39], %91 {strides = array<i32>} : memref<64x32xbf16, #tpu.memory_space<vmem>>, vector<64x8xbf16>,
    %c0_40 = arith.constant 0 : index
    %c24 = arith.constant 24 : index
    %93 = vector.load %arg8[%c0_40, %c24] : memref<64x96xbf16, #tpu.memory_space<vmem>>, vector<64x8xbf16>
    %94 = vector.shape_cast %93 : vector<64x8xbf16> to vector<4x16x8xbf16>
    %c0_41 = arith.constant 0 : index
    %c56 = arith.constant 56 : index
    %95 = vector.load %arg8[%c0_41, %c56] : memref<64x96xbf16, #tpu.memory_space<vmem>>, vector<64x8xbf16>
    %96 = vector.shape_cast %95 : vector<64x8xbf16> to vector<4x16x8xbf16>
    %c0_42 = arith.constant 0 : index
    %c88 = arith.constant 88 : index
    %97 = vector.load %arg8[%c0_42, %c88] : memref<64x96xbf16, #tpu.memory_space<vmem>>, vector<64x8xbf16>
    %98 = vector.shape_cast %97 : vector<64x8xbf16> to vector<4x16x8xbf16>
    "tpu.trace_start"() <{level = 10 : i32, message = "bnd,bmd->bnm"}> : () -> ()
    %cst_43 = arith.constant dense<0.000000e+00> : vector<4x16x16xf32>
    %99 = tpu.matmul %94, %96, %cst_43 {dimension_numbers = #tpu.dot_dimension_numbers<[2], [2], [1], [1], [0, 0, 0, 1, 1, 1], [0], [0]>} : vector<4x16x8xbf16>, vector<4x16x8xbf16>, vector<4x16x16xf32> -> vector<4x16x16xf32>
    "tpu.trace_stop"() : () -> ()
    %100 = vector.extract_strided_slice %11 {offsets = [3, 0, 0], sizes = [1, 16, 16], strides = [1, 1, 1]} : vector<4x16x16xf32> to vector<1x16x16xf32>
    %101 = vector.shape_cast %100 : vector<1x16x16xf32> to vector<16x16xf32>
    %102 = vector.shape_cast %101 : vector<16x16xf32> to vector<1x16x16xf32>
    %103 = vector.broadcast %102 : vector<1x16x16xf32> to vector<4x16x16xf32>
    %104 = arith.addf %99, %103 : vector<4x16x16xf32>
    %cst_44 = arith.constant dense<0xFF800000> : vector<4x16xf32>
    %105 = vector.multi_reduction <maximumf>, %104, %cst_44 [2] : vector<4x16x16xf32> to vector<4x16xf32>
    %106 = vector.shape_cast %105 : vector<4x16xf32> to vector<4x16x1xf32>
    %107 = vector.broadcast %106 : vector<4x16x1xf32> to vector<4x16x16xf32>
    %108 = arith.subf %104, %107 : vector<4x16x16xf32>
    %109 = math.exp %108 : vector<4x16x16xf32>
    %cst_45 = arith.constant dense<0.000000e+00> : vector<4x16xf32>
    %110 = vector.multi_reduction <add>, %109, %cst_45 [2] : vector<4x16x16xf32> to vector<4x16xf32>
    %111 = vector.shape_cast %110 : vector<4x16xf32> to vector<4x16x1xf32>
    %112 = tpu.reciprocal %111 {approx = true} : vector<4x16x1xf32> -> vector<4x16x1xf32>
    %113 = vector.broadcast %112 : vector<4x16x1xf32> to vector<4x16x16xf32>
    %114 = arith.mulf %109, %113 : vector<4x16x16xf32>
    %115 = arith.truncf %114 : vector<4x16x16xf32> to vector<4x16x16xbf16>
    "tpu.trace_start"() <{level = 10 : i32, message = "bnm,bmd->bnd"}> : () -> ()
    %cst_46 = arith.constant dense<0.000000e+00> : vector<4x16x8xf32>
    %116 = tpu.matmul %115, %98, %cst_46 {dimension_numbers = #tpu.dot_dimension_numbers<[2], [1], [1], [2], [0, 0, 0, 1, 1, 2], [0], [0]>} : vector<4x16x16xbf16>, vector<4x16x8xbf16>, vector<4x16x8xf32> -> vector<4x16x8xf32>
    "tpu.trace_stop"() : () -> ()
    %117 = vector.shape_cast %116 : vector<4x16x8xf32> to vector<64x8xf32>
    %118 = arith.truncf %117 : vector<64x8xf32> to vector<64x8xbf16>
    %c0_47 = arith.constant 0 : index
    %c24_48 = arith.constant 24 : index
    %119 = vector.load %arg9[%c0_47, %c24_48] : memref<64x32xbf16, #tpu.memory_space<vmem>>, vector<64x8xbf16>
    tpu.vector_store %arg9[%c0_47, %c24_48], %118 {strides = array<i32>} : memref<64x32xbf16, #tpu.memory_space<vmem>>, vector<64x8xbf16>,
    %c0_49 = arith.constant 0 : index
    %c0_50 = arith.constant 0 : index
    %120 = vector.load %arg9[%c0_49, %c0_50] : memref<64x32xbf16, #tpu.memory_space<vmem>>, vector<64x32xbf16>
    %c0_51 = arith.constant 0 : index
    %c0_52 = arith.constant 0 : index
    %121 = vector.load %arg4[%c0_51, %c0_52] : memref<32x32xbf16, #tpu.memory_space<vmem>>, vector<32x32xbf16>
    %cst_53 = arith.constant dense<0.000000e+00> : vector<64x32xf32>
    %122 = tpu.matmul %120, %121, %cst_53 {dimension_numbers = #tpu.dot_dimension_numbers<[1], [0], [0], [1], [0, 0, 1, 1], [], []>} : vector<64x32xbf16>, vector<32x32xbf16>, vector<64x32xf32> -> vector<64x32xf32>
    %c0_54 = arith.constant 0 : index
    %c0_55 = arith.constant 0 : index
    %123 = vector.load %arg5[%c0_54, %c0_55] : memref<1x32xf32, #tpu.memory_space<vmem>>, vector<1x32xf32>
    %124 = vector.broadcast %123 : vector<1x32xf32> to vector<64x32xf32>
    %125 = arith.addf %122, %124 : vector<64x32xf32>
    %126 = vector.shape_cast %125 : vector<64x32xf32> to vector<4x16x32xf32>
    %c0_56 = arith.constant 0 : index
    %c0_57 = arith.constant 0 : index
    %c0_58 = arith.constant 0 : index
    %127 = vector.load %arg7[%c0_56, %c0_57, %c0_58] : memref<4x16x32xf32, #tpu.memory_space<vmem>>, vector<4x16x32xf32>
    tpu.vector_store %arg7[%c0_56, %c0_57, %c0_58], %126 {strides = array<i32>} : memref<4x16x32xf32, #tpu.memory_space<vmem>>, vector<4x16x32xf32>,
    return
  }
  func.func @transform_0(%arg0: i32) -> (i32, i32, i32) {
    %c0_i32 = arith.constant 0 : i32
    %c0_i32_0 = arith.constant 0 : i32
    %c0_i32_1 = arith.constant 0 : i32
    return %arg0, %c0_i32, %c0_i32_0 : i32, i32, i32
  }
  func.func @transform_1(%arg0: i32) -> (i32, i32) {
    %c0_i32 = arith.constant 0 : i32
    %c0_i32_0 = arith.constant 0 : i32
    %c0_i32_1 = arith.constant 0 : i32
    return %c0_i32, %c0_i32_0 : i32, i32
  }
  func.func @transform_2(%arg0: i32) -> (i32, i32) {
    %c0_i32 = arith.constant 0 : i32
    %c0_i32_0 = arith.constant 0 : i32
    %c0_i32_1 = arith.constant 0 : i32
    return %c0_i32, %c0_i32_0 : i32, i32
  }
  func.func @transform_3(%arg0: i32) -> (i32, i32) {
    %c0_i32 = arith.constant 0 : i32
    %c0_i32_0 = arith.constant 0 : i32
    %c0_i32_1 = arith.constant 0 : i32
    return %c0_i32, %c0_i32_0 : i32, i32
  }
  func.func @transform_4(%arg0: i32) -> (i32, i32) {
    %c0_i32 = arith.constant 0 : i32
    %c0_i32_0 = arith.constant 0 : i32
    %c0_i32_1 = arith.constant 0 : i32
    return %c0_i32, %c0_i32_0 : i32, i32
  }
  func.func @transform_5(%arg0: i32) -> (i32, i32, i32, i32) {
    %c0_i32 = arith.constant 0 : i32
    %c0_i32_0 = arith.constant 0 : i32
    %c0_i32_1 = arith.constant 0 : i32
    %c0_i32_2 = arith.constant 0 : i32
    %c0_i32_3 = arith.constant 0 : i32
    return %c0_i32, %c0_i32_0, %c0_i32_1, %c0_i32_2 : i32, i32, i32, i32
  }
  func.func @transform_6(%arg0: i32) -> (i32, i32, i32) {
    %c0_i32 = arith.constant 0 : i32
    %c0_i32_0 = arith.constant 0 : i32
    %c0_i32_1 = arith.constant 0 : i32
    return %arg0, %c0_i32, %c0_i32_0 : i32, i32, i32
  }
}

module attributes {stable_mosaic.version = 11 : i64} {
  func.func @_window_attn_kernel(%arg0: i32, %arg1: memref<4x16x32xf32, #tpu.memory_space<vmem>>, %arg2: memref<32x96xbf16, #tpu.memory_space<vmem>>, %arg3: memref<1x96xf32, #tpu.memory_space<vmem>>, %arg4: memref<32x32xbf16, #tpu.memory_space<vmem>>, %arg5: memref<1x32xf32, #tpu.memory_space<vmem>>, %arg6: memref<1x4x16x16xf32, #tpu.memory_space<vmem>>, %arg7: memref<4x16x32xf32, #tpu.memory_space<vmem>>, %arg8: memref<64x96xbf16, #tpu.memory_space<vmem>>, %arg9: memref<64x32xbf16, #tpu.memory_space<vmem>>) attributes {dimension_semantics = [#tpu.dimension_semantics<parallel>], iteration_bounds = array<i64: 2>, scalar_prefetch = 0 : i64, scratch_operands = 2 : i64, tpu.core_type = #tpu.core_type<tc>, window_params = [{transform_indices = @transform_0, window_bounds = array<i64: 4, 16, 32>}, {pipeline_mode = #tpu.pipeline_mode<synchronous>, transform_indices = @transform_1, window_bounds = array<i64: 32, 96>}, {pipeline_mode = #tpu.pipeline_mode<synchronous>, transform_indices = @transform_2, window_bounds = array<i64: 1, 96>}, {pipeline_mode = #tpu.pipeline_mode<synchronous>, transform_indices = @transform_3, window_bounds = array<i64: 32, 32>}, {pipeline_mode = #tpu.pipeline_mode<synchronous>, transform_indices = @transform_4, window_bounds = array<i64: 1, 32>}, {pipeline_mode = #tpu.pipeline_mode<synchronous>, transform_indices = @transform_5, window_bounds = array<i64: 1, 4, 16, 16>}, {transform_indices = @transform_6, window_bounds = array<i64: 4, 16, 32>}]} {
    %c0 = arith.constant 0 : index
    %c0_0 = arith.constant 0 : index
    %c0_1 = arith.constant 0 : index
    %0 = vector.load %arg1[%c0, %c0_0, %c0_1] : memref<4x16x32xf32, #tpu.memory_space<vmem>>, vector<4x16x32xf32>
    %1 = vector.shape_cast %0 : vector<4x16x32xf32> to vector<64x32xf32>
    %2 = arith.truncf %1 : vector<64x32xf32> to vector<64x32xbf16>
    %c0_2 = arith.constant 0 : index
    %c0_3 = arith.constant 0 : index
    %3 = vector.load %arg2[%c0_2, %c0_3] : memref<32x96xbf16, #tpu.memory_space<vmem>>, vector<32x96xbf16>
    %cst = arith.constant dense<0.000000e+00> : vector<64x96xf32>
    %4 = tpu.matmul %2, %3, %cst {dimension_numbers = #tpu.dot_dimension_numbers<[1], [0], [0], [1], [0, 0, 1, 1], [], []>} : vector<64x32xbf16>, vector<32x96xbf16>, vector<64x96xf32> -> vector<64x96xf32>
    %c0_4 = arith.constant 0 : index
    %c0_5 = arith.constant 0 : index
    %5 = vector.load %arg3[%c0_4, %c0_5] : memref<1x96xf32, #tpu.memory_space<vmem>>, vector<1x96xf32>
    %6 = vector.broadcast %5 : vector<1x96xf32> to vector<64x96xf32>
    %7 = arith.addf %4, %6 : vector<64x96xf32>
    %8 = arith.truncf %7 : vector<64x96xf32> to vector<64x96xbf16>
    %c0_6 = arith.constant 0 : index
    %c0_7 = arith.constant 0 : index
    %9 = vector.load %arg8[%c0_6, %c0_7] : memref<64x96xbf16, #tpu.memory_space<vmem>>, vector<64x96xbf16>
    tpu.vector_store %arg8[%c0_6, %c0_7], %8 {strides = array<i32>} : memref<64x96xbf16, #tpu.memory_space<vmem>>, vector<64x96xbf16>,
    %c0_8 = arith.constant 0 : index
    %c0_9 = arith.constant 0 : index
    %c0_10 = arith.constant 0 : index
    %c0_11 = arith.constant 0 : index
    %10 = vector.load %arg6[%c0_8, %c0_9, %c0_10, %c0_11] : memref<1x4x16x16xf32, #tpu.memory_space<vmem>>, vector<1x4x16x16xf32>
    %11 = vector.shape_cast %10 : vector<1x4x16x16xf32> to vector<4x16x16xf32>
    %c0_12 = arith.constant 0 : index
    %c0_13 = arith.constant 0 : index
    %12 = vector.load %arg8[%c0_12, %c0_13] : memref<64x96xbf16, #tpu.memory_space<vmem>>, vector<64x8xbf16>
    %13 = vector.shape_cast %12 : vector<64x8xbf16> to vector<4x16x8xbf16>
    %c0_14 = arith.constant 0 : index
    %c32 = arith.constant 32 : index
    %14 = vector.load %arg8[%c0_14, %c32] : memref<64x96xbf16, #tpu.memory_space<vmem>>, vector<64x8xbf16>
    %15 = vector.shape_cast %14 : vector<64x8xbf16> to vector<4x16x8xbf16>
    %c0_15 = arith.constant 0 : index
    %c64 = arith.constant 64 : index
    %16 = vector.load %arg8[%c0_15, %c64] : memref<64x96xbf16, #tpu.memory_space<vmem>>, vector<64x8xbf16>
    %17 = vector.shape_cast %16 : vector<64x8xbf16> to vector<4x16x8xbf16>
    "tpu.trace_start"() <{level = 10 : i32, message = "bnd,bmd->bnm"}> : () -> ()
    %cst_16 = arith.constant dense<0.000000e+00> : vector<4x16x16xf32>
    %18 = tpu.matmul %13, %15, %cst_16 {dimension_numbers = #tpu.dot_dimension_numbers<[2], [2], [1], [1], [0, 0, 0, 1, 1, 1], [0], [0]>} : vector<4x16x8xbf16>, vector<4x16x8xbf16>, vector<4x16x16xf32> -> vector<4x16x16xf32>
    "tpu.trace_stop"() : () -> ()
    %19 = vector.extract_strided_slice %11 {offsets = [0, 0, 0], sizes = [1, 16, 16], strides = [1, 1, 1]} : vector<4x16x16xf32> to vector<1x16x16xf32>
    %20 = vector.shape_cast %19 : vector<1x16x16xf32> to vector<16x16xf32>
    %21 = vector.shape_cast %20 : vector<16x16xf32> to vector<1x16x16xf32>
    %22 = vector.broadcast %21 : vector<1x16x16xf32> to vector<4x16x16xf32>
    %23 = arith.addf %18, %22 : vector<4x16x16xf32>
    %cst_17 = arith.constant dense<0xFF800000> : vector<4x16xf32>
    %24 = vector.multi_reduction <maximumf>, %23, %cst_17 [2] : vector<4x16x16xf32> to vector<4x16xf32>
    %25 = vector.shape_cast %24 : vector<4x16xf32> to vector<4x16x1xf32>
    %26 = vector.broadcast %25 : vector<4x16x1xf32> to vector<4x16x16xf32>
    %27 = arith.subf %23, %26 : vector<4x16x16xf32>
    %28 = math.exp %27 : vector<4x16x16xf32>
    %cst_18 = arith.constant dense<0.000000e+00> : vector<4x16xf32>
    %29 = vector.multi_reduction <add>, %28, %cst_18 [2] : vector<4x16x16xf32> to vector<4x16xf32>
    %30 = vector.shape_cast %29 : vector<4x16xf32> to vector<4x16x1xf32>
    %31 = tpu.reciprocal %30 {approx = true} : vector<4x16x1xf32> -> vector<4x16x1xf32>
    %32 = vector.broadcast %31 : vector<4x16x1xf32> to vector<4x16x16xf32>
    %33 = arith.mulf %28, %32 : vector<4x16x16xf32>
    %34 = arith.truncf %33 : vector<4x16x16xf32> to vector<4x16x16xbf16>
    "tpu.trace_start"() <{level = 10 : i32, message = "bnm,bmd->bnd"}> : () -> ()
    %cst_19 = arith.constant dense<0.000000e+00> : vector<4x16x8xf32>
    %35 = tpu.matmul %34, %17, %cst_19 {dimension_numbers = #tpu.dot_dimension_numbers<[2], [1], [1], [2], [0, 0, 0, 1, 1, 2], [0], [0]>} : vector<4x16x16xbf16>, vector<4x16x8xbf16>, vector<4x16x8xf32> -> vector<4x16x8xf32>
    "tpu.trace_stop"() : () -> ()
    %36 = vector.shape_cast %35 : vector<4x16x8xf32> to vector<64x8xf32>
    %37 = arith.truncf %36 : vector<64x8xf32> to vector<64x8xbf16>
    %c0_20 = arith.constant 0 : index
    %c0_21 = arith.constant 0 : index
    %38 = vector.load %arg9[%c0_20, %c0_21] : memref<64x32xbf16, #tpu.memory_space<vmem>>, vector<64x8xbf16>
    tpu.vector_store %arg9[%c0_20, %c0_21], %37 {strides = array<i32>} : memref<64x32xbf16, #tpu.memory_space<vmem>>, vector<64x8xbf16>,
    %c0_22 = arith.constant 0 : index
    %c8 = arith.constant 8 : index
    %39 = vector.load %arg8[%c0_22, %c8] : memref<64x96xbf16, #tpu.memory_space<vmem>>, vector<64x8xbf16>
    %40 = vector.shape_cast %39 : vector<64x8xbf16> to vector<4x16x8xbf16>
    %c0_23 = arith.constant 0 : index
    %c40 = arith.constant 40 : index
    %41 = vector.load %arg8[%c0_23, %c40] : memref<64x96xbf16, #tpu.memory_space<vmem>>, vector<64x8xbf16>
    %42 = vector.shape_cast %41 : vector<64x8xbf16> to vector<4x16x8xbf16>
    %c0_24 = arith.constant 0 : index
    %c72 = arith.constant 72 : index
    %43 = vector.load %arg8[%c0_24, %c72] : memref<64x96xbf16, #tpu.memory_space<vmem>>, vector<64x8xbf16>
    %44 = vector.shape_cast %43 : vector<64x8xbf16> to vector<4x16x8xbf16>
    "tpu.trace_start"() <{level = 10 : i32, message = "bnd,bmd->bnm"}> : () -> ()
    %cst_25 = arith.constant dense<0.000000e+00> : vector<4x16x16xf32>
    %45 = tpu.matmul %40, %42, %cst_25 {dimension_numbers = #tpu.dot_dimension_numbers<[2], [2], [1], [1], [0, 0, 0, 1, 1, 1], [0], [0]>} : vector<4x16x8xbf16>, vector<4x16x8xbf16>, vector<4x16x16xf32> -> vector<4x16x16xf32>
    "tpu.trace_stop"() : () -> ()
    %46 = vector.extract_strided_slice %11 {offsets = [1, 0, 0], sizes = [1, 16, 16], strides = [1, 1, 1]} : vector<4x16x16xf32> to vector<1x16x16xf32>
    %47 = vector.shape_cast %46 : vector<1x16x16xf32> to vector<16x16xf32>
    %48 = vector.shape_cast %47 : vector<16x16xf32> to vector<1x16x16xf32>
    %49 = vector.broadcast %48 : vector<1x16x16xf32> to vector<4x16x16xf32>
    %50 = arith.addf %45, %49 : vector<4x16x16xf32>
    %cst_26 = arith.constant dense<0xFF800000> : vector<4x16xf32>
    %51 = vector.multi_reduction <maximumf>, %50, %cst_26 [2] : vector<4x16x16xf32> to vector<4x16xf32>
    %52 = vector.shape_cast %51 : vector<4x16xf32> to vector<4x16x1xf32>
    %53 = vector.broadcast %52 : vector<4x16x1xf32> to vector<4x16x16xf32>
    %54 = arith.subf %50, %53 : vector<4x16x16xf32>
    %55 = math.exp %54 : vector<4x16x16xf32>
    %cst_27 = arith.constant dense<0.000000e+00> : vector<4x16xf32>
    %56 = vector.multi_reduction <add>, %55, %cst_27 [2] : vector<4x16x16xf32> to vector<4x16xf32>
    %57 = vector.shape_cast %56 : vector<4x16xf32> to vector<4x16x1xf32>
    %58 = tpu.reciprocal %57 {approx = true} : vector<4x16x1xf32> -> vector<4x16x1xf32>
    %59 = vector.broadcast %58 : vector<4x16x1xf32> to vector<4x16x16xf32>
    %60 = arith.mulf %55, %59 : vector<4x16x16xf32>
    %61 = arith.truncf %60 : vector<4x16x16xf32> to vector<4x16x16xbf16>
    "tpu.trace_start"() <{level = 10 : i32, message = "bnm,bmd->bnd"}> : () -> ()
    %cst_28 = arith.constant dense<0.000000e+00> : vector<4x16x8xf32>
    %62 = tpu.matmul %61, %44, %cst_28 {dimension_numbers = #tpu.dot_dimension_numbers<[2], [1], [1], [2], [0, 0, 0, 1, 1, 2], [0], [0]>} : vector<4x16x16xbf16>, vector<4x16x8xbf16>, vector<4x16x8xf32> -> vector<4x16x8xf32>
    "tpu.trace_stop"() : () -> ()
    %63 = vector.shape_cast %62 : vector<4x16x8xf32> to vector<64x8xf32>
    %64 = arith.truncf %63 : vector<64x8xf32> to vector<64x8xbf16>
    %c0_29 = arith.constant 0 : index
    %c8_30 = arith.constant 8 : index
    %65 = vector.load %arg9[%c0_29, %c8_30] : memref<64x32xbf16, #tpu.memory_space<vmem>>, vector<64x8xbf16>
    tpu.vector_store %arg9[%c0_29, %c8_30], %64 {strides = array<i32>} : memref<64x32xbf16, #tpu.memory_space<vmem>>, vector<64x8xbf16>,
    %c0_31 = arith.constant 0 : index
    %c16 = arith.constant 16 : index
    %66 = vector.load %arg8[%c0_31, %c16] : memref<64x96xbf16, #tpu.memory_space<vmem>>, vector<64x8xbf16>
    %67 = vector.shape_cast %66 : vector<64x8xbf16> to vector<4x16x8xbf16>
    %c0_32 = arith.constant 0 : index
    %c48 = arith.constant 48 : index
    %68 = vector.load %arg8[%c0_32, %c48] : memref<64x96xbf16, #tpu.memory_space<vmem>>, vector<64x8xbf16>
    %69 = vector.shape_cast %68 : vector<64x8xbf16> to vector<4x16x8xbf16>
    %c0_33 = arith.constant 0 : index
    %c80 = arith.constant 80 : index
    %70 = vector.load %arg8[%c0_33, %c80] : memref<64x96xbf16, #tpu.memory_space<vmem>>, vector<64x8xbf16>
    %71 = vector.shape_cast %70 : vector<64x8xbf16> to vector<4x16x8xbf16>
    "tpu.trace_start"() <{level = 10 : i32, message = "bnd,bmd->bnm"}> : () -> ()
    %cst_34 = arith.constant dense<0.000000e+00> : vector<4x16x16xf32>
    %72 = tpu.matmul %67, %69, %cst_34 {dimension_numbers = #tpu.dot_dimension_numbers<[2], [2], [1], [1], [0, 0, 0, 1, 1, 1], [0], [0]>} : vector<4x16x8xbf16>, vector<4x16x8xbf16>, vector<4x16x16xf32> -> vector<4x16x16xf32>
    "tpu.trace_stop"() : () -> ()
    %73 = vector.extract_strided_slice %11 {offsets = [2, 0, 0], sizes = [1, 16, 16], strides = [1, 1, 1]} : vector<4x16x16xf32> to vector<1x16x16xf32>
    %74 = vector.shape_cast %73 : vector<1x16x16xf32> to vector<16x16xf32>
    %75 = vector.shape_cast %74 : vector<16x16xf32> to vector<1x16x16xf32>
    %76 = vector.broadcast %75 : vector<1x16x16xf32> to vector<4x16x16xf32>
    %77 = arith.addf %72, %76 : vector<4x16x16xf32>
    %cst_35 = arith.constant dense<0xFF800000> : vector<4x16xf32>
    %78 = vector.multi_reduction <maximumf>, %77, %cst_35 [2] : vector<4x16x16xf32> to vector<4x16xf32>
    %79 = vector.shape_cast %78 : vector<4x16xf32> to vector<4x16x1xf32>
    %80 = vector.broadcast %79 : vector<4x16x1xf32> to vector<4x16x16xf32>
    %81 = arith.subf %77, %80 : vector<4x16x16xf32>
    %82 = math.exp %81 : vector<4x16x16xf32>
    %cst_36 = arith.constant dense<0.000000e+00> : vector<4x16xf32>
    %83 = vector.multi_reduction <add>, %82, %cst_36 [2] : vector<4x16x16xf32> to vector<4x16xf32>
    %84 = vector.shape_cast %83 : vector<4x16xf32> to vector<4x16x1xf32>
    %85 = tpu.reciprocal %84 {approx = true} : vector<4x16x1xf32> -> vector<4x16x1xf32>
    %86 = vector.broadcast %85 : vector<4x16x1xf32> to vector<4x16x16xf32>
    %87 = arith.mulf %82, %86 : vector<4x16x16xf32>
    %88 = arith.truncf %87 : vector<4x16x16xf32> to vector<4x16x16xbf16>
    "tpu.trace_start"() <{level = 10 : i32, message = "bnm,bmd->bnd"}> : () -> ()
    %cst_37 = arith.constant dense<0.000000e+00> : vector<4x16x8xf32>
    %89 = tpu.matmul %88, %71, %cst_37 {dimension_numbers = #tpu.dot_dimension_numbers<[2], [1], [1], [2], [0, 0, 0, 1, 1, 2], [0], [0]>} : vector<4x16x16xbf16>, vector<4x16x8xbf16>, vector<4x16x8xf32> -> vector<4x16x8xf32>
    "tpu.trace_stop"() : () -> ()
    %90 = vector.shape_cast %89 : vector<4x16x8xf32> to vector<64x8xf32>
    %91 = arith.truncf %90 : vector<64x8xf32> to vector<64x8xbf16>
    %c0_38 = arith.constant 0 : index
    %c16_39 = arith.constant 16 : index
    %92 = vector.load %arg9[%c0_38, %c16_39] : memref<64x32xbf16, #tpu.memory_space<vmem>>, vector<64x8xbf16>
    tpu.vector_store %arg9[%c0_38, %c16_39], %91 {strides = array<i32>} : memref<64x32xbf16, #tpu.memory_space<vmem>>, vector<64x8xbf16>,
    %c0_40 = arith.constant 0 : index
    %c24 = arith.constant 24 : index
    %93 = vector.load %arg8[%c0_40, %c24] : memref<64x96xbf16, #tpu.memory_space<vmem>>, vector<64x8xbf16>
    %94 = vector.shape_cast %93 : vector<64x8xbf16> to vector<4x16x8xbf16>
    %c0_41 = arith.constant 0 : index
    %c56 = arith.constant 56 : index
    %95 = vector.load %arg8[%c0_41, %c56] : memref<64x96xbf16, #tpu.memory_space<vmem>>, vector<64x8xbf16>
    %96 = vector.shape_cast %95 : vector<64x8xbf16> to vector<4x16x8xbf16>
    %c0_42 = arith.constant 0 : index
    %c88 = arith.constant 88 : index
    %97 = vector.load %arg8[%c0_42, %c88] : memref<64x96xbf16, #tpu.memory_space<vmem>>, vector<64x8xbf16>
    %98 = vector.shape_cast %97 : vector<64x8xbf16> to vector<4x16x8xbf16>
    "tpu.trace_start"() <{level = 10 : i32, message = "bnd,bmd->bnm"}> : () -> ()
    %cst_43 = arith.constant dense<0.000000e+00> : vector<4x16x16xf32>
    %99 = tpu.matmul %94, %96, %cst_43 {dimension_numbers = #tpu.dot_dimension_numbers<[2], [2], [1], [1], [0, 0, 0, 1, 1, 1], [0], [0]>} : vector<4x16x8xbf16>, vector<4x16x8xbf16>, vector<4x16x16xf32> -> vector<4x16x16xf32>
    "tpu.trace_stop"() : () -> ()
    %100 = vector.extract_strided_slice %11 {offsets = [3, 0, 0], sizes = [1, 16, 16], strides = [1, 1, 1]} : vector<4x16x16xf32> to vector<1x16x16xf32>
    %101 = vector.shape_cast %100 : vector<1x16x16xf32> to vector<16x16xf32>
    %102 = vector.shape_cast %101 : vector<16x16xf32> to vector<1x16x16xf32>
    %103 = vector.broadcast %102 : vector<1x16x16xf32> to vector<4x16x16xf32>
    %104 = arith.addf %99, %103 : vector<4x16x16xf32>
    %cst_44 = arith.constant dense<0xFF800000> : vector<4x16xf32>
    %105 = vector.multi_reduction <maximumf>, %104, %cst_44 [2] : vector<4x16x16xf32> to vector<4x16xf32>
    %106 = vector.shape_cast %105 : vector<4x16xf32> to vector<4x16x1xf32>
    %107 = vector.broadcast %106 : vector<4x16x1xf32> to vector<4x16x16xf32>
    %108 = arith.subf %104, %107 : vector<4x16x16xf32>
    %109 = math.exp %108 : vector<4x16x16xf32>
    %cst_45 = arith.constant dense<0.000000e+00> : vector<4x16xf32>
    %110 = vector.multi_reduction <add>, %109, %cst_45 [2] : vector<4x16x16xf32> to vector<4x16xf32>
    %111 = vector.shape_cast %110 : vector<4x16xf32> to vector<4x16x1xf32>
    %112 = tpu.reciprocal %111 {approx = true} : vector<4x16x1xf32> -> vector<4x16x1xf32>
    %113 = vector.broadcast %112 : vector<4x16x1xf32> to vector<4x16x16xf32>
    %114 = arith.mulf %109, %113 : vector<4x16x16xf32>
    %115 = arith.truncf %114 : vector<4x16x16xf32> to vector<4x16x16xbf16>
    "tpu.trace_start"() <{level = 10 : i32, message = "bnm,bmd->bnd"}> : () -> ()
    %cst_46 = arith.constant dense<0.000000e+00> : vector<4x16x8xf32>
    %116 = tpu.matmul %115, %98, %cst_46 {dimension_numbers = #tpu.dot_dimension_numbers<[2], [1], [1], [2], [0, 0, 0, 1, 1, 2], [0], [0]>} : vector<4x16x16xbf16>, vector<4x16x8xbf16>, vector<4x16x8xf32> -> vector<4x16x8xf32>
    "tpu.trace_stop"() : () -> ()
    %117 = vector.shape_cast %116 : vector<4x16x8xf32> to vector<64x8xf32>
    %118 = arith.truncf %117 : vector<64x8xf32> to vector<64x8xbf16>
    %c0_47 = arith.constant 0 : index
    %c24_48 = arith.constant 24 : index
    %119 = vector.load %arg9[%c0_47, %c24_48] : memref<64x32xbf16, #tpu.memory_space<vmem>>, vector<64x8xbf16>
    tpu.vector_store %arg9[%c0_47, %c24_48], %118 {strides = array<i32>} : memref<64x32xbf16, #tpu.memory_space<vmem>>, vector<64x8xbf16>,
    %c0_49 = arith.constant 0 : index
    %c0_50 = arith.constant 0 : index
    %120 = vector.load %arg9[%c0_49, %c0_50] : memref<64x32xbf16, #tpu.memory_space<vmem>>, vector<64x32xbf16>
    %c0_51 = arith.constant 0 : index
    %c0_52 = arith.constant 0 : index
    %121 = vector.load %arg4[%c0_51, %c0_52] : memref<32x32xbf16, #tpu.memory_space<vmem>>, vector<32x32xbf16>
    %cst_53 = arith.constant dense<0.000000e+00> : vector<64x32xf32>
    %122 = tpu.matmul %120, %121, %cst_53 {dimension_numbers = #tpu.dot_dimension_numbers<[1], [0], [0], [1], [0, 0, 1, 1], [], []>} : vector<64x32xbf16>, vector<32x32xbf16>, vector<64x32xf32> -> vector<64x32xf32>
    %c0_54 = arith.constant 0 : index
    %c0_55 = arith.constant 0 : index
    %123 = vector.load %arg5[%c0_54, %c0_55] : memref<1x32xf32, #tpu.memory_space<vmem>>, vector<1x32xf32>
    %124 = vector.broadcast %123 : vector<1x32xf32> to vector<64x32xf32>
    %125 = arith.addf %122, %124 : vector<64x32xf32>
    %126 = vector.shape_cast %125 : vector<64x32xf32> to vector<4x16x32xf32>
    %c0_56 = arith.constant 0 : index
    %c0_57 = arith.constant 0 : index
    %c0_58 = arith.constant 0 : index
    %127 = vector.load %arg7[%c0_56, %c0_57, %c0_58] : memref<4x16x32xf32, #tpu.memory_space<vmem>>, vector<4x16x32xf32>
    tpu.vector_store %arg7[%c0_56, %c0_57, %c0_58], %126 {strides = array<i32>} : memref<4x16x32xf32, #tpu.memory_space<vmem>>, vector<4x16x32xf32>,
    return
  }
  func.func @transform_0(%arg0: i32) -> (i32, i32, i32) {
    %c0_i32 = arith.constant 0 : i32
    %c0_i32_0 = arith.constant 0 : i32
    %c0_i32_1 = arith.constant 0 : i32
    return %arg0, %c0_i32, %c0_i32_0 : i32, i32, i32
  }
  func.func @transform_1(%arg0: i32) -> (i32, i32) {
    %c0_i32 = arith.constant 0 : i32
    %c0_i32_0 = arith.constant 0 : i32
    %c0_i32_1 = arith.constant 0 : i32
    return %c0_i32, %c0_i32_0 : i32, i32
  }
  func.func @transform_2(%arg0: i32) -> (i32, i32) {
    %c0_i32 = arith.constant 0 : i32
    %c0_i32_0 = arith.constant 0 : i32
    %c0_i32_1 = arith.constant 0 : i32
    return %c0_i32, %c0_i32_0 : i32, i32
  }
  func.func @transform_3(%arg0: i32) -> (i32, i32) {
    %c0_i32 = arith.constant 0 : i32
    %c0_i32_0 = arith.constant 0 : i32
    %c0_i32_1 = arith.constant 0 : i32
    return %c0_i32, %c0_i32_0 : i32, i32
  }
  func.func @transform_4(%arg0: i32) -> (i32, i32) {
    %c0_i32 = arith.constant 0 : i32
    %c0_i32_0 = arith.constant 0 : i32
    %c0_i32_1 = arith.constant 0 : i32
    return %c0_i32, %c0_i32_0 : i32, i32
  }
  func.func @transform_5(%arg0: i32) -> (i32, i32, i32, i32) {
    %c0_i32 = arith.constant 0 : i32
    %c0_i32_0 = arith.constant 0 : i32
    %c0_i32_1 = arith.constant 0 : i32
    %c0_i32_2 = arith.constant 0 : i32
    %c0_i32_3 = arith.constant 0 : i32
    return %c0_i32, %c0_i32_0, %c0_i32_1, %c0_i32_2 : i32, i32, i32, i32
  }
  func.func @transform_6(%arg0: i32) -> (i32, i32, i32) {
    %c0_i32 = arith.constant 0 : i32
    %c0_i32_0 = arith.constant 0 : i32
    %c0_i32_1 = arith.constant 0 : i32
    return %arg0, %c0_i32, %c0_i32_0 : i32, i32, i32
  }
}

</mosaic_0001>

<llo_original>
// kernel: tpu_custom_call.1
$region0: #{tpu_custom_call.1}
  #allocation0 [shape = 'u32[]', space=smem, size = 0x4, offset = 0x4, fixed_abs, tag = 'smem constant byte address 0x4 - core index']
  #allocation1 [shape = 'u32[144,128]{1,0:T(1,128)}', space=vmem, size = 0x12000, scoped, tag = 'internal scratch']
  #allocation2 [shape = 'bf16[64,96]{1,0:T(16,128)(2,1)}', space=vmem, size = 0x4000, scoped, tag = 'scratch operand']
  #allocation3 [shape = 'bf16[64,32]{1,0:T(16,128)(2,1)}', space=vmem, size = 0x4000, scoped, tag = 'scratch operand']
  %s0 = inlined_call_operand.hbm [shape: f32[8,16,32], index: 0, kind: input, shape index: {}]
  %s1 = inlined_call_operand.hbm [shape: bf16[32,96], index: 1, kind: input, shape index: {}]
  %s2 = inlined_call_operand.vmem [shape: f32[1,96], index: 2, kind: input, shape index: {}]
  %s3 = inlined_call_operand.hbm [shape: bf16[32,32], index: 3, kind: input, shape index: {}]
  %s4 = inlined_call_operand.vmem [shape: f32[1,32], index: 4, kind: input, shape index: {}]
  %s5 = inlined_call_operand.hbm [shape: f32[1,4,16,16], index: 5, kind: input, shape index: {}]
  %s6 = inlined_call_operand.hbm [shape: f32[8,16,32], index: 6, kind: output, shape index: {}]
  %s7 = sld [smem:[#allocation0]]
  $region73: #{tpu_custom_call.1} parent=0
    _
  %s9 = ssub.s32 1, %s7
  %s10 = scalar_select 0, %s9, %s7
  $region1: #{tpu_custom_call.1} parent=0
    #allocation4 [shape = 'u8[65536]{0}', space=vmem, size = 0x10000, scoped, tag = 'input window, operand 0']
    #allocation5 [shape = 's32[2]{0}', space=sflag, size = 0x8, scoped, tag = 'scoped memory for tpu_custom_call.1']
    #allocation6 [shape = 's32[2]{0}', space=sflag, size = 0x8, scoped, tag = 'scoped memory for tpu_custom_call.1']
    #allocation7 [shape = 'u8[8192]{0}', space=vmem, size = 0x2000, scoped, tag = 'input window, operand 1, single buffered']
    #allocation8 [shape = 's32[1]{0}', space=sflag, size = 0x4, scoped, tag = 'scoped memory for tpu_custom_call.1']
    #allocation9 [shape = 'u8[8192]{0}', space=vmem, size = 0x2000, scoped, tag = 'input window, operand 3, single buffered']
    #allocation10 [shape = 'u8[32768]{0}', space=vmem, size = 0x8000, scoped, tag = 'input window, operand 5, single buffered']
    #allocation11 [shape = 's32[1]{0}', space=sflag, size = 0x4, scoped, tag = 'scoped memory for tpu_custom_call.1']
    #allocation12 [shape = 'u8[65536]{0}', space=vmem, size = 0x10000, scoped, tag = 'output window, operand 0']
    %11 = vsyncpa [#allocation5], 0
    %s12 = scalar_lea.sflag [#allocation5], 1
    %13 = vsyncpa %s12, 0
    %14 = vsyncpa [#allocation8], 0
    %15 = vsyncpa [#allocation11], 0
    %16 = vsyncpa [#allocation6], 0
    %s17 = scalar_lea.sflag [#allocation6], 1
    %18 = vsyncpa %s17, 0
    loop: start=0, step=1, limit=4
    $region2: #{tpu_custom_call.1} parent=1 // loop_pre_header
      _
    $region3: #{tpu_custom_call.1} parent=1 // loop_header
      %s20 = sphi 0, %s24
      %p21 = scmp.ge.s32.totalorder %s20, 4
      %s30 = sphi 0, %s32
      %s33 = sphi 0, %s30
      %s34 = sphi 0, %s33
      %s50 = sphi 0, %s34
      %s54 = sphi 0, %s54
      %s56 = sphi 0, %s54
      %s57 = sphi 0, %s56
      %s71 = sphi 0, %s57
      %s75 = sphi 0, %s75
      %s77 = sphi 0, %s75
      %s78 = sphi 0, %s77
      %s92 = sphi 0, %s78
      %s96 = sphi 0, %s96
      %s98 = sphi 0, %s96
      %s99 = sphi 0, %s98
      %s113 = sphi 0, %s99
      %s117 = sphi 0, %s117
      %s119 = sphi 0, %s117
      %s120 = sphi 0, %s119
      %s134 = sphi 0, %s120
      %s138 = sphi 0, %s138
      %s140 = sphi 0, %s138
      %s141 = sphi 0, %s140
      %s155 = sphi 0, %s141
      %s161 = sphi 0, %s163
      %s164 = sphi 0, %s161
      %s165 = sphi 0, %s164
      %s181 = sphi 0, %s165
    $region4: #{tpu_custom_call.1} parent=1 // loop_header_branch
      %23 = sbr.rel (%p21) target = $region8
    $region5: #{tpu_custom_call.1} parent=1 // loop_body
      %s25 = ssub.s32 %s20, 1
      %s26 = ssub.s32 %s20, 2
      %s27 = sadd.s32 %s20, 1
      %s28 = ssub.s32 %s20, %s27
      %p29 = scmp.eq.s32.totalorder %s28, 0
      %s31 = sadd.s32 %s30, 1
      %s32 = scalar_select %p29, %s30, %s31
      %p35 = pneg %p29
      %p36 = scmp.eq.s32.totalorder %s20, 1
      %p37 = por %p35, %p36
      %p38 = scmp.ne.s32.totalorder %s30, %s33
      %p39 = scmp.eq.s32.totalorder %s20, 0
      %p40 = por %p38, %p39
      %p41 = scmp.ne.s32.totalorder %s30, %s33
      %p42 = scmp.eq.s32.totalorder %s25, 1
      %p43 = por %p41, %p42
      %p44 = scmp.ne.s32.totalorder %s33, %s34
      %p45 = scmp.eq.s32.totalorder %s25, 0
      %p46 = por %p44, %p45
      %p47 = scmp.ne.s32.totalorder %s33, %s34
      %p48 = scmp.eq.s32.totalorder %s26, 1
      %p49 = por %p47, %p48
      %p51 = scmp.ne.s32.totalorder %s34, %s50
      %p52 = scmp.eq.s32.totalorder %s26, 0
      %p53 = por %p51, %p52
      %s55 = sadd.s32 %s54, 1
      %p58 = scmp.eq.s32.totalorder %s20, 1
      %p59 = scmp.ne.s32.totalorder %s54, %s56
      %p60 = scmp.eq.s32.totalorder %s20, 0
      %p61 = por %p59, %p60
      %p62 = scmp.ne.s32.totalorder %s54, %s56
      %p63 = scmp.eq.s32.totalorder %s25, 1
      %p64 = por %p62, %p63
      %p65 = scmp.ne.s32.totalorder %s56, %s57
      %p66 = scmp.eq.s32.totalorder %s25, 0
      %p67 = por %p65, %p66
      %p68 = scmp.ne.s32.totalorder %s56, %s57
      %p69 = scmp.eq.s32.totalorder %s26, 1
      %p70 = por %p68, %p69
      %p72 = scmp.ne.s32.totalorder %s57, %s71
      %p73 = scmp.eq.s32.totalorder %s26, 0
      %p74 = por %p72, %p73
      %s76 = sadd.s32 %s75, 1
      %p79 = scmp.eq.s32.totalorder %s20, 1
      %p80 = scmp.ne.s32.totalorder %s75, %s77
      %p81 = scmp.eq.s32.totalorder %s20, 0
      %p82 = por %p80, %p81
      %p83 = scmp.ne.s32.totalorder %s75, %s77
      %p84 = scmp.eq.s32.totalorder %s25, 1
      %p85 = por %p83, %p84
      %p86 = scmp.ne.s32.totalorder %s77, %s78
      %p87 = scmp.eq.s32.totalorder %s25, 0
      %p88 = por %p86, %p87
      %p89 = scmp.ne.s32.totalorder %s77, %s78
      %p90 = scmp.eq.s32.totalorder %s26, 1
      %p91 = por %p89, %p90
      %p93 = scmp.ne.s32.totalorder %s78, %s92
      %p94 = scmp.eq.s32.totalorder %s26, 0
      %p95 = por %p93, %p94
      %s97 = sadd.s32 %s96, 1
      %p100 = scmp.eq.s32.totalorder %s20, 1
      %p101 = scmp.ne.s32.totalorder %s96, %s98
      %p102 = scmp.eq.s32.totalorder %s20, 0
      %p103 = por %p101, %p102
      %p104 = scmp.ne.s32.totalorder %s96, %s98
      %p105 = scmp.eq.s32.totalorder %s25, 1
      %p106 = por %p104, %p105
      %p107 = scmp.ne.s32.totalorder %s98, %s99
      %p108 = scmp.eq.s32.totalorder %s25, 0
      %p109 = por %p107, %p108
      %p110 = scmp.ne.s32.totalorder %s98, %s99
      %p111 = scmp.eq.s32.totalorder %s26, 1
      %p112 = por %p110, %p111
      %p114 = scmp.ne.s32.totalorder %s99, %s113
      %p115 = scmp.eq.s32.totalorder %s26, 0
      %p116 = por %p114, %p115
      %s118 = sadd.s32 %s117, 1
      %p121 = scmp.eq.s32.totalorder %s20, 1
      %p122 = scmp.ne.s32.totalorder %s117, %s119
      %p123 = scmp.eq.s32.totalorder %s20, 0
      %p124 = por %p122, %p123
      %p125 = scmp.ne.s32.totalorder %s117, %s119
      %p126 = scmp.eq.s32.totalorder %s25, 1
      %p127 = por %p125, %p126
      %p128 = scmp.ne.s32.totalorder %s119, %s120
      %p129 = scmp.eq.s32.totalorder %s25, 0
      %p130 = por %p128, %p129
      %p131 = scmp.ne.s32.totalorder %s119, %s120
      %p132 = scmp.eq.s32.totalorder %s26, 1
      %p133 = por %p131, %p132
      %p135 = scmp.ne.s32.totalorder %s120, %s134
      %p136 = scmp.eq.s32.totalorder %s26, 0
      %p137 = por %p135, %p136
      %s139 = sadd.s32 %s138, 1
      %p142 = scmp.eq.s32.totalorder %s20, 1
      %p143 = scmp.ne.s32.totalorder %s138, %s140
      %p144 = scmp.eq.s32.totalorder %s20, 0
      %p145 = por %p143, %p144
      %p146 = scmp.ne.s32.totalorder %s138, %s140
      %p147 = scmp.eq.s32.totalorder %s25, 1
      %p148 = por %p146, %p147
      %p149 = scmp.ne.s32.totalorder %s140, %s141
      %p150 = scmp.eq.s32.totalorder %s25, 0
      %p151 = por %p149, %p150
      %p152 = scmp.ne.s32.totalorder %s140, %s141
      %p153 = scmp.eq.s32.totalorder %s26, 1
      %p154 = por %p152, %p153
      %p156 = scmp.ne.s32.totalorder %s141, %s155
      %p157 = scmp.eq.s32.totalorder %s26, 0
      %p158 = por %p156, %p157
      %s159 = ssub.s32 %s20, %s27
      %p160 = scmp.eq.s32.totalorder %s159, 0
      %s162 = sadd.s32 %s161, 1
      %s163 = scalar_select %p160, %s161, %s162
      %p166 = pneg %p160
      %p167 = scmp.eq.s32.totalorder %s20, 1
      %p168 = por %p166, %p167
      %p169 = scmp.ne.s32.totalorder %s161, %s164
      %p170 = scmp.eq.s32.totalorder %s20, 0
      %p171 = por %p169, %p170
      %p172 = scmp.ne.s32.totalorder %s161, %s164
      %p173 = scmp.eq.s32.totalorder %s25, 1
      %p174 = por %p172, %p173
      %p175 = scmp.ne.s32.totalorder %s164, %s165
      %p176 = scmp.eq.s32.totalorder %s25, 0
      %p177 = por %p175, %p176
      %p178 = scmp.ne.s32.totalorder %s164, %s165
      %p179 = scmp.eq.s32.totalorder %s26, 1
      %p180 = por %p178, %p179
      %p182 = scmp.ne.s32.totalorder %s165, %s181
      %p183 = scmp.eq.s32.totalorder %s26, 0
      %p184 = por %p182, %p183
      %p185 = scmp.le.s32.totalorder 1, %s20
      %p186 = scmp.lt.s32.totalorder %s20, 3
      %p187 = pnand %p185, %p186
      %p188 = pneg %p187
      // Predicated region
      $region9: #{tpu_custom_call.1} parent=5 // pred_check
        _
      $region10: #{tpu_custom_call.1} parent=5 // pred_check_branch
        %190 = sbr.rel (%p187) target = $region12
      $region11: #{tpu_custom_call.1} parent=5 // pred_region
        %s191 = ssub.s32 %s20, 1
        // Predicated region
        $region13: #{tpu_custom_call.1} parent=11 // pred_check
          %p192 = pneg %p67
        $region14: #{tpu_custom_call.1} parent=11 // pred_check_branch
          %194 = sbr.rel (%p192) target = $region16
        $region15: #{tpu_custom_call.1} parent=11 // pred_region
          %s196 = ssub.s32 256, 256
          %197 = vsyncadd [#allocation8], %s196
          %s198 = sshll.u32 [#allocation7], 4
          %s199 = int_to_ptr.vmem [resolvable:$true] %s198
          %204 = dma.hbm_to_vmem [thread:$0]  %s1, 256, %s199, [#allocation8], 64, 64, 4
        $region16: #{tpu_custom_call.1} parent=11 // pred_fallthru
          _
        // Predicated region
        $region17: #{tpu_custom_call.1} parent=11 // pred_check
          %p205 = pneg %p88
        $region18: #{tpu_custom_call.1} parent=11 // pred_check_branch
          %207 = sbr.rel (%p205) target = $region20
        $region19: #{tpu_custom_call.1} parent=11 // pred_region
          _
        $region20: #{tpu_custom_call.1} parent=11 // pred_fallthru
          _
        // Predicated region
        $region21: #{tpu_custom_call.1} parent=11 // pred_check
          %p208 = pneg %p109
        $region22: #{tpu_custom_call.1} parent=11 // pred_check_branch
          %210 = sbr.rel (%p208) target = $region24
        $region23: #{tpu_custom_call.1} parent=11 // pred_region
          %s212 = ssub.s32 256, 256
          %213 = vsyncadd [#allocation8], %s212
          %s214 = sshll.u32 [#allocation9], 4
          %s215 = int_to_ptr.vmem [resolvable:$true] %s214
          %220 = dma.hbm_to_vmem [thread:$0]  %s3, 256, %s215, [#allocation8], 64, 64, 4
        $region24: #{tpu_custom_call.1} parent=11 // pred_fallthru
          _
        // Predicated region
        $region25: #{tpu_custom_call.1} parent=11 // pred_check
          %p221 = pneg %p130
        $region26: #{tpu_custom_call.1} parent=11 // pred_check_branch
          %223 = sbr.rel (%p221) target = $region28
        $region27: #{tpu_custom_call.1} parent=11 // pred_region
          _
        $region28: #{tpu_custom_call.1} parent=11 // pred_fallthru
          _
        // Predicated region
        $region29: #{tpu_custom_call.1} parent=11 // pred_check
          %p224 = pneg %p151
        $region30: #{tpu_custom_call.1} parent=11 // pred_check_branch
          %226 = sbr.rel (%p224) target = $region32
        $region31: #{tpu_custom_call.1} parent=11 // pred_region
          %s228 = ssub.s32 1024, 1024
          %229 = vsyncadd [#allocation11], %s228
          %s230 = sshll.u32 [#allocation10], 4
          %s231 = int_to_ptr.vmem [resolvable:$true] %s230
          %236 = dma.hbm_to_vmem [thread:$0]  %s5, 1024, %s231, [#allocation11], 128, 128, 8
        $region32: #{tpu_custom_call.1} parent=11 // pred_fallthru
          _
      $region12: #{tpu_custom_call.1} parent=5 // pred_fallthru
        _
      %p237 = scmp.lt.s32.totalorder %s20, 2
      // Predicated region
      $region33: #{tpu_custom_call.1} parent=5 // pred_check
        %p238 = pneg %p237
      $region34: #{tpu_custom_call.1} parent=5 // pred_check_branch
        %240 = sbr.rel (%p238) target = $region36
      $region35: #{tpu_custom_call.1} parent=5 // pred_region
        // Predicated region
        $region37: #{tpu_custom_call.1} parent=35 // pred_check
          %p241 = pneg %p40
        $region38: #{tpu_custom_call.1} parent=35 // pred_check_branch
          %243 = sbr.rel (%p241) target = $region40
        $region39: #{tpu_custom_call.1} parent=35 // pred_region
          %s244 = sand.u32 %s30, 1
          %s245 = scalar_lea.sflag [#allocation5], %s244
          %s246 = sand.u32 %s30, 1
          %s247 = smul.addr %s246, 64
          %s248 = scalar_lea.vmem [#allocation4], %s247
          %s249 = smul.u32 4, %s20
          %s251 = ssub.s32 1024, 1024
          %252 = vsyncadd %s245, %s251
          %s253 = smul.addr %s249, 2
          %s254 = smul.addr %s253, 128
          %s255 = scalar_lea.hbm %s0, %s254
          %s256 = sshll.u32 %s248, 4
          %s257 = int_to_ptr.vmem [resolvable:$true] %s256
          %262 = dma.hbm_to_vmem [thread:$0]  %s255, 1024, %s257, %s245, 128, 128, 8
        $region40: #{tpu_custom_call.1} parent=35 // pred_fallthru
          _
      $region36: #{tpu_custom_call.1} parent=5 // pred_fallthru
        _
      %p263 = scmp.le.s32.totalorder 1, %s20
      %p264 = scmp.lt.s32.totalorder %s20, 3
      %p265 = pnand %p263, %p264
      %p266 = pneg %p265
      // Predicated region
      $region41: #{tpu_custom_call.1} parent=5 // pred_check
        _
      $region42: #{tpu_custom_call.1} parent=5 // pred_check_branch
        %268 = sbr.rel (%p265) target = $region44
      $region43: #{tpu_custom_call.1} parent=5 // pred_region
        %s269 = ssub.s32 %s20, 1
        %s270 = sand.u32 %s33, 1
        %s271 = scalar_lea.sflag [#allocation5], %s270
        %s272 = sand.u32 %s33, 1
        %s273 = smul.addr %s272, 64
        %s274 = scalar_lea.vmem [#allocation4], %s273
        // Predicated region
        $region45: #{tpu_custom_call.1} parent=43 // pred_check
          %p275 = pneg %p46
        $region46: #{tpu_custom_call.1} parent=43 // pred_check_branch
          %277 = sbr.rel (%p275) target = $region48
        $region47: #{tpu_custom_call.1} parent=43 // pred_region
          %278 = dma.done %s271, 1024
        $region48: #{tpu_custom_call.1} parent=43 // pred_fallthru
          _
        // Predicated region
        $region49: #{tpu_custom_call.1} parent=43 // pred_check
          %p279 = pneg %p67
        $region50: #{tpu_custom_call.1} parent=43 // pred_check_branch
          %281 = sbr.rel (%p279) target = $region52
        $region51: #{tpu_custom_call.1} parent=43 // pred_region
          %282 = dma.done [#allocation8], 256
        $region52: #{tpu_custom_call.1} parent=43 // pred_fallthru
          _
        // Predicated region
        $region53: #{tpu_custom_call.1} parent=43 // pred_check
          %p283 = pneg %p109
        $region54: #{tpu_custom_call.1} parent=43 // pred_check_branch
          %285 = sbr.rel (%p283) target = $region56
        $region55: #{tpu_custom_call.1} parent=43 // pred_region
          %286 = dma.done [#allocation8], 256
        $region56: #{tpu_custom_call.1} parent=43 // pred_fallthru
          _
        // Predicated region
        $region57: #{tpu_custom_call.1} parent=43 // pred_check
          %p287 = pneg %p151
        $region58: #{tpu_custom_call.1} parent=43 // pred_check_branch
          %289 = sbr.rel (%p287) target = $region60
        $region59: #{tpu_custom_call.1} parent=43 // pred_region
          %290 = dma.done [#allocation11], 1024
        $region60: #{tpu_custom_call.1} parent=43 // pred_fallthru
          _
        %s291 = sand.u32 %s33, 1
        %s292 = scalar_lea.sflag [#allocation5], %s291
        %s293 = sand.u32 %s33, 1
        %s294 = smul.addr %s293, 64
        %s295 = scalar_lea.vmem [#allocation4], %s294
        %p296 = pneg %p46
        %p297 = pneg %p43
        %p298 = pneg %p67
        %p299 = pneg %p64
        %p300 = pneg %p88
        %p301 = pneg %p85
        %p302 = pneg %p109
        %p303 = pneg %p106
        %p304 = pneg %p130
        %p305 = pneg %p127
        %p306 = pneg %p151
        %p307 = pneg %p148
        %p308 = pneg %p177
        %p309 = pneg %p174
        %s310 = sand.u32 %s164, 1
        %s311 = scalar_lea.sflag [#allocation6], %s310
        %s312 = sand.u32 %s164, 1
        %s313 = smul.addr %s312, 64
        %s314 = scalar_lea.vmem [#allocation12], %s313
        %s315 = smul.u32 4, %s25
        %s316 = smul.u32 4, %s25
        %v318 = vld [vmem:[%s274] sm:$0xff]
        %v319 = vld [vmem:[%s274 + $0x8] sm:$0xff]
        %v320 = vld [vmem:[%s274 + $0x10] sm:$0xff]
        %v321 = vld [vmem:[%s274 + $0x18] sm:$0xff]
        %v322 = vld [vmem:[%s274 + $0x20] sm:$0xff]
        %v323 = vld [vmem:[%s274 + $0x28] sm:$0xff]
        %v324 = vld [vmem:[%s274 + $0x30] sm:$0xff]
        %v325 = vld [vmem:[%s274 + $0x38] sm:$0xff]
        %v326 = vpack.c.bf16 %v319, %v318
        %v327 = vpack.c.bf16 %v321, %v320
        %v328 = vpack.c.bf16 %v323, %v322
        %v329 = vpack.c.bf16 %v325, %v324
        %v330 = vld [vmem:[#allocation7] sm:$0xf]
        %v331 = vld [vmem:[#allocation7 + $0x4] sm:$0xf]
        %v332 = vld [vmem:[#allocation7 + $0x8] sm:$0xf]
        %v333 = vld [vmem:[#allocation7 + $0xc] sm:$0xf]
        %v334 = vld [vmem:[%s2] sm:$0x1]
        %v336 = vlaneseq
        %v337 = vshrl.u32 %v336, 7
        %v338 = vsub.s32 0, %v337
        %v339 = vrot.slane %v334, %v338
        %v345 = vunpack.c.l.b16 %v330
        %v346 = vunpack.c.l.b16 %v331
        %v347 = vunpack.c.l.b16 %v332
        %v348 = vunpack.c.l.b16 %v333
        %v349 = vpack.c.b16 %v346, %v345
        %v350 = vpack.c.b16 %v348, %v347
        %vm353 = vcmask 261120
        %v355 = vsel %vm353, %v326, 0
        %v358 = vsel %vm353, %v327, 0
        %v361 = vsel %vm353, %v328, 0
        %v364 = vsel %vm353, %v329, 0
        %366 = vmatprep.subr.bf16.mxu0 0
        %367 = vmatpush1.bf16.msra.mxu0 %v349
        %368 = vmatprep.subr.bf16.mxu0 0
        %369 = vmatpush1.bf16.msra.mxu0 %v350
        %370 = vmatprep.subr.bf16.mxu0 0
        %371 = vmatpush1.bf16.msra.mxu0 0
        %372 = vmatprep.subr.bf16.mxu0 0
        %373 = vmatpush1.bf16.msra.mxu0 0
        %374 = vmatprep.subr.bf16.mxu0 0
        %375 = vmatpush1.bf16.msra.mxu0 0
        %376 = vmatprep.subr.bf16.mxu0 0
        %377 = vmatpush1.bf16.msra.mxu0 0
        %378 = vmatprep.subr.bf16.mxu0 0
        %379 = vmatpush1.bf16.msra.mxu0 0
        %380 = vmatprep.subr.bf16.mxu0 0
        %381 = vmatpush1.bf16.msra.mxu0 0
        %382 = vmatprep.subr.bf16.mxu0 0
        %383 = vmatpush1.bf16.msra.mxu0 0
        %384 = vmatprep.subr.bf16.mxu0 0
        %385 = vmatpush1.bf16.msra.mxu0 0
        %386 = vmatprep.subr.bf16.mxu0 0
        %387 = vmatpush1.bf16.msra.mxu0 0
        %388 = vmatprep.subr.bf16.mxu0 0
        %389 = vmatpush1.bf16.msra.mxu0 0
        %390 = vmatprep.subr.bf16.mxu0 0
        %391 = vmatpush1.bf16.msra.mxu0 0
        %392 = vmatprep.subr.bf16.mxu0 0
        %393 = vmatpush1.bf16.msra.mxu0 0
        %394 = vmatprep.subr.bf16.mxu0 0
        %395 = vmatpush1.bf16.msra.mxu0 0
        %396 = vmatprep.subr.bf16.mxu0 0
        %397 = vmatpush1.bf16.msra.mxu0 0
        %398 = vmatprep.mubr.bf16.mxu0 0
        %399 = vmatmul.mubr.bf16.gmra.mrb[0].mxu0 %v355
        %v400 = vpop.f32.mrb[0].mxu0
        %v401 = vadd.f32 %v339, %v400
        %v402 = vpop.f32.mrb[0].mxu0
        %v403 = vpop.f32.mrb[0].mxu0
        %v404 = vadd.f32 %v339, %v403
        %v405 = vpop.f32.mrb[0].mxu0
        %406 = vmatprep.mubr.bf16.mxu0 0
        %407 = vmatmul.mubr.bf16.gmra.mrb[0].mxu0 %v358
        %v408 = vpop.f32.mrb[0].mxu0
        %v409 = vadd.f32 %v339, %v408
        %v410 = vpop.f32.mrb[0].mxu0
        %v411 = vpop.f32.mrb[0].mxu0
        %v412 = vadd.f32 %v339, %v411
        %v413 = vpop.f32.mrb[0].mxu0
        %414 = vmatprep.mubr.bf16.mxu0 0
        %415 = vmatmul.mubr.bf16.gmra.mrb[0].mxu0 %v361
        %v416 = vpop.f32.mrb[0].mxu0
        %v417 = vadd.f32 %v339, %v416
        %v418 = vpop.f32.mrb[0].mxu0
        %v419 = vpop.f32.mrb[0].mxu0
        %v420 = vadd.f32 %v339, %v419
        %v421 = vpop.f32.mrb[0].mxu0
        %422 = vmatprep.mubr.bf16.mxu0 0
        %423 = vmatmul.mubr.bf16.gmra.mrb[0].mxu0 %v364
        %v424 = vpop.f32.mrb[0].mxu0
        %v425 = vadd.f32 %v339, %v424
        %v426 = vpop.f32.mrb[0].mxu0
        %v427 = vpop.f32.mrb[0].mxu0
        %v428 = vadd.f32 %v339, %v427
        %v429 = vpop.f32.mrb[0].mxu0
        %430 = vdwg.mxu0
        %v431 = vpack.c.bf16 %v404, %v401
        %v432 = vpack.c.bf16 %v412, %v409
        %v433 = vpack.c.bf16 %v420, %v417
        %v434 = vpack.c.bf16 %v428, %v425
        %vm435 = vcmask 785408
        %436 = vst.msk [vmem:[#allocation2] sm:$0xff] %vm435, %v431
        %437 = vst.msk [vmem:[#allocation2 + $0x8] sm:$0xff] %vm435, %v432
        %438 = vst.msk [vmem:[#allocation2 + $0x10] sm:$0xff] %vm435, %v433
        %439 = vst.msk [vmem:[#allocation2 + $0x18] sm:$0xff] %vm435, %v434
        %v440 = vld [vmem:[#allocation10] sm:$0xff]
        %v441 = vld [vmem:[#allocation10 + $0x8] sm:$0xff]
        %v442 = vld [vmem:[#allocation10 + $0x10] sm:$0xff]
        %v443 = vld [vmem:[#allocation10 + $0x18] sm:$0xff]
        %v444 = vld [vmem:[#allocation10 + $0x20] sm:$0xff]
        %v445 = vld [vmem:[#allocation10 + $0x28] sm:$0xff]
        %v446 = vld [vmem:[#allocation10 + $0x30] sm:$0xff]
        %v447 = vld [vmem:[#allocation10 + $0x38] sm:$0xff]
        %v448 = vld [vmem:[#allocation2] sm:$0xff]
        %v449 = vld [vmem:[#allocation2 + $0x8] sm:$0xff]
        %v450 = vld [vmem:[#allocation2 + $0x10] sm:$0xff]
        %v451 = vld [vmem:[#allocation2 + $0x18] sm:$0xff]
        %453 = vrot.lane.b32.xlu0 %v448, 96
        %v454 = vpop.permute.xlu0 %453
        %vm455 = vcmask 64512
        %v457 = vsel %vm455, %v448, 0
        %v460 = vsel %vm455, %v454, 0
        %462 = vmatprep.subr.bf16.mxu0 0
        %463 = vmatpush1.bf16.xpose.msra.mxu0 %v460
        %464 = vmatprep.subr.bf16.mxu0 0
        %465 = vmatpush1.bf16.xpose.msra.mxu0 0
        %466 = vmatprep.subr.bf16.mxu0 0
        %467 = vmatpush1.bf16.xpose.msra.mxu0 0
        %468 = vmatprep.subr.bf16.mxu0 0
        %469 = vmatpush1.bf16.xpose.msra.mxu0 0
        %470 = vmatprep.subr.bf16.mxu0 0
        %471 = vmatpush1.bf16.xpose.msra.mxu0 0
        %472 = vmatprep.subr.bf16.mxu0 0
        %473 = vmatpush1.bf16.xpose.msra.mxu0 0
        %474 = vmatprep.subr.bf16.mxu0 0
        %475 = vmatpush1.bf16.xpose.msra.mxu0 0
        %476 = vmatprep.subr.bf16.mxu0 0
        %477 = vmatpush1.bf16.xpose.msra.mxu0 0
        %478 = vmatprep.subr.bf16.mxu0 0
        %479 = vmatpush1.bf16.xpose.msra.mxu0 0
        %480 = vmatprep.subr.bf16.mxu0 0
        %481 = vmatpush1.bf16.xpose.msra.mxu0 0
        %482 = vmatprep.subr.bf16.mxu0 0
        %483 = vmatpush1.bf16.xpose.msra.mxu0 0
        %484 = vmatprep.subr.bf16.mxu0 0
        %485 = vmatpush1.bf16.xpose.msra.mxu0 0
        %486 = vmatprep.subr.bf16.mxu0 0
        %487 = vmatpush1.bf16.xpose.msra.mxu0 0
        %488 = vmatprep.subr.bf16.mxu0 0
        %489 = vmatpush1.bf16.xpose.msra.mxu0 0
        %490 = vmatprep.subr.bf16.mxu0 0
        %491 = vmatpush1.bf16.xpose.msra.mxu0 0
        %492 = vmatprep.subr.bf16.mxu0 0
        %493 = vmatpush1.bf16.xpose.msra.mxu0 0
        %494 = vmatprep.mubr.bf16.mxu0 0
        %495 = vmatmul.mubr.bf16.gmra.mrb[0].mxu0 %v457
        %v496 = vpop.f32.mrb[0].mxu0
        %v497 = vadd.f32 %v440, %v496
        %v498 = vpop.f32.mrb[0].mxu0
        %v499 = vpop.f32.mrb[0].mxu0
        %v500 = vadd.f32 %v441, %v499
        %v501 = vpop.f32.mrb[0].mxu0
        %502 = vdwg.mxu0
        %504 = vrot.lane.b32.xlu0 %v449, 96
        %v505 = vpop.permute.xlu0 %504
        %v507 = vsel %vm455, %v449, 0
        %v510 = vsel %vm455, %v505, 0
        %512 = vmatprep.subr.bf16.mxu0 0
        %513 = vmatpush1.bf16.xpose.msra.mxu0 %v510
        %514 = vmatprep.subr.bf16.mxu0 0
        %515 = vmatpush1.bf16.xpose.msra.mxu0 0
        %516 = vmatprep.subr.bf16.mxu0 0
        %517 = vmatpush1.bf16.xpose.msra.mxu0 0
        %518 = vmatprep.subr.bf16.mxu0 0
        %519 = vmatpush1.bf16.xpose.msra.mxu0 0
        %520 = vmatprep.subr.bf16.mxu0 0
        %521 = vmatpush1.bf16.xpose.msra.mxu0 0
        %522 = vmatprep.subr.bf16.mxu0 0
        %523 = vmatpush1.bf16.xpose.msra.mxu0 0
        %524 = vmatprep.subr.bf16.mxu0 0
        %525 = vmatpush1.bf16.xpose.msra.mxu0 0
        %526 = vmatprep.subr.bf16.mxu0 0
        %527 = vmatpush1.bf16.xpose.msra.mxu0 0
        %528 = vmatprep.subr.bf16.mxu0 0
        %529 = vmatpush1.bf16.xpose.msra.mxu0 0
        %530 = vmatprep.subr.bf16.mxu0 0
        %531 = vmatpush1.bf16.xpose.msra.mxu0 0
        %532 = vmatprep.subr.bf16.mxu0 0
        %533 = vmatpush1.bf16.xpose.msra.mxu0 0
        %534 = vmatprep.subr.bf16.mxu0 0
        %535 = vmatpush1.bf16.xpose.msra.mxu0 0
        %536 = vmatprep.subr.bf16.mxu0 0
        %537 = vmatpush1.bf16.xpose.msra.mxu0 0
        %538 = vmatprep.subr.bf16.mxu0 0
        %539 = vmatpush1.bf16.xpose.msra.mxu0 0
        %540 = vmatprep.subr.bf16.mxu0 0
        %541 = vmatpush1.bf16.xpose.msra.mxu0 0
        %542 = vmatprep.subr.bf16.mxu0 0
        %543 = vmatpush1.bf16.xpose.msra.mxu0 0
        %544 = vmatprep.mubr.bf16.mxu0 0
        %545 = vmatmul.mubr.bf16.gmra.mrb[0].mxu0 %v507
        %v546 = vpop.f32.mrb[0].mxu0
        %v547 = vadd.f32 %v440, %v546
        %v548 = vpop.f32.mrb[0].mxu0
        %v549 = vpop.f32.mrb[0].mxu0
        %v550 = vadd.f32 %v441, %v549
        %v551 = vpop.f32.mrb[0].mxu0
        %552 = vdwg.mxu0
        %554 = vrot.lane.b32.xlu0 %v450, 96
        %v555 = vpop.permute.xlu0 %554
        %v557 = vsel %vm455, %v450, 0
        %v560 = vsel %vm455, %v555, 0
        %562 = vmatprep.subr.bf16.mxu0 0
        %563 = vmatpush1.bf16.xpose.msra.mxu0 %v560
        %564 = vmatprep.subr.bf16.mxu0 0
        %565 = vmatpush1.bf16.xpose.msra.mxu0 0
        %566 = vmatprep.subr.bf16.mxu0 0
        %567 = vmatpush1.bf16.xpose.msra.mxu0 0
        %568 = vmatprep.subr.bf16.mxu0 0
        %569 = vmatpush1.bf16.xpose.msra.mxu0 0
        %570 = vmatprep.subr.bf16.mxu0 0
        %571 = vmatpush1.bf16.xpose.msra.mxu0 0
        %572 = vmatprep.subr.bf16.mxu0 0
        %573 = vmatpush1.bf16.xpose.msra.mxu0 0
        %574 = vmatprep.subr.bf16.mxu0 0
        %575 = vmatpush1.bf16.xpose.msra.mxu0 0
        %576 = vmatprep.subr.bf16.mxu0 0
        %577 = vmatpush1.bf16.xpose.msra.mxu0 0
        %578 = vmatprep.subr.bf16.mxu0 0
        %579 = vmatpush1.bf16.xpose.msra.mxu0 0
        %580 = vmatprep.subr.bf16.mxu0 0
        %581 = vmatpush1.bf16.xpose.msra.mxu0 0
        %582 = vmatprep.subr.bf16.mxu0 0
        %583 = vmatpush1.bf16.xpose.msra.mxu0 0
        %584 = vmatprep.subr.bf16.mxu0 0
        %585 = vmatpush1.bf16.xpose.msra.mxu0 0
        %586 = vmatprep.subr.bf16.mxu0 0
        %587 = vmatpush1.bf16.xpose.msra.mxu0 0
        %588 = vmatprep.subr.bf16.mxu0 0
        %589 = vmatpush1.bf16.xpose.msra.mxu0 0
        %590 = vmatprep.subr.bf16.mxu0 0
        %591 = vmatpush1.bf16.xpose.msra.mxu0 0
        %592 = vmatprep.subr.bf16.mxu0 0
        %593 = vmatpush1.bf16.xpose.msra.mxu0 0
        %594 = vmatprep.mubr.bf16.mxu0 0
        %595 = vmatmul.mubr.bf16.gmra.mrb[0].mxu0 %v557
        %v596 = vpop.f32.mrb[0].mxu0
        %v597 = vadd.f32 %v440, %v596
        %v598 = vpop.f32.mrb[0].mxu0
        %v599 = vpop.f32.mrb[0].mxu0
        %v600 = vadd.f32 %v441, %v599
        %v601 = vpop.f32.mrb[0].mxu0
        %602 = vdwg.mxu0
        %604 = vrot.lane.b32.xlu0 %v451, 96
        %v605 = vpop.permute.xlu0 %604
        %v607 = vsel %vm455, %v451, 0
        %v610 = vsel %vm455, %v605, 0
        %612 = vmatprep.subr.bf16.mxu0 0
        %613 = vmatpush1.bf16.xpose.msra.mxu0 %v610
        %614 = vmatprep.subr.bf16.mxu0 0
        %615 = vmatpush1.bf16.xpose.msra.mxu0 0
        %616 = vmatprep.subr.bf16.mxu0 0
        %617 = vmatpush1.bf16.xpose.msra.mxu0 0
        %618 = vmatprep.subr.bf16.mxu0 0
        %619 = vmatpush1.bf16.xpose.msra.mxu0 0
        %620 = vmatprep.subr.bf16.mxu0 0
        %621 = vmatpush1.bf16.xpose.msra.mxu0 0
        %622 = vmatprep.subr.bf16.mxu0 0
        %623 = vmatpush1.bf16.xpose.msra.mxu0 0
        %624 = vmatprep.subr.bf16.mxu0 0
        %625 = vmatpush1.bf16.xpose.msra.mxu0 0
        %626 = vmatprep.subr.bf16.mxu0 0
        %627 = vmatpush1.bf16.xpose.msra.mxu0 0
        %628 = vmatprep.subr.bf16.mxu0 0
        %629 = vmatpush1.bf16.xpose.msra.mxu0 0
        %630 = vmatprep.subr.bf16.mxu0 0
        %631 = vmatpush1.bf16.xpose.msra.mxu0 0
        %632 = vmatprep.subr.bf16.mxu0 0
        %633 = vmatpush1.bf16.xpose.msra.mxu0 0
        %634 = vmatprep.subr.bf16.mxu0 0
        %635 = vmatpush1.bf16.xpose.msra.mxu0 0
        %636 = vmatprep.subr.bf16.mxu0 0
        %637 = vmatpush1.bf16.xpose.msra.mxu0 0
        %638 = vmatprep.subr.bf16.mxu0 0
        %639 = vmatpush1.bf16.xpose.msra.mxu0 0
        %640 = vmatprep.subr.bf16.mxu0 0
        %641 = vmatpush1.bf16.xpose.msra.mxu0 0
        %642 = vmatprep.subr.bf16.mxu0 0
        %643 = vmatpush1.bf16.xpose.msra.mxu0 0
        %644 = vmatprep.mubr.bf16.mxu0 0
        %645 = vmatmul.mubr.bf16.gmra.mrb[0].mxu0 %v607
        %v646 = vpop.f32.mrb[0].mxu0
        %v647 = vadd.f32 %v440, %v646
        %v648 = vpop.f32.mrb[0].mxu0
        %v649 = vpop.f32.mrb[0].mxu0
        %v650 = vadd.f32 %v441, %v649
        %v651 = vpop.f32.mrb[0].mxu0
        %652 = vdwg.mxu0
        %vm653 = vcmask 130048
        %v654 = vsel %vm653, %v497, -inf
        %655 = vmax.xlane.f32.xlu0 %v654
        %v656 = vpop.xlane.xlu0 %655
        %v657 = vsel %vm653, %v500, -inf
        %658 = vmax.xlane.f32.xlu0 %v657
        %v659 = vpop.xlane.xlu0 %658
        %v660 = vsel %vm653, %v547, -inf
        %661 = vmax.xlane.f32.xlu0 %v660
        %v662 = vpop.xlane.xlu0 %661
        %v663 = vsel %vm653, %v550, -inf
        %664 = vmax.xlane.f32.xlu0 %v663
        %v665 = vpop.xlane.xlu0 %664
        %v666 = vsel %vm653, %v597, -inf
        %667 = vmax.xlane.f32.xlu0 %v666
        %v668 = vpop.xlane.xlu0 %667
        %v669 = vsel %vm653, %v600, -inf
        %670 = vmax.xlane.f32.xlu0 %v669
        %v671 = vpop.xlane.xlu0 %670
        %v672 = vsel %vm653, %v647, -inf
        %673 = vmax.xlane.f32.xlu0 %v672
        %v674 = vpop.xlane.xlu0 %673
        %v675 = vsel %vm653, %v650, -inf
        %676 = vmax.xlane.f32.xlu0 %v675
        %v677 = vpop.xlane.xlu0 %676
        %v678 = vsub.f32 %v497, %v656
        %v679 = vsub.f32 %v500, %v659
        %v680 = vsub.f32 %v547, %v662
        %v681 = vsub.f32 %v550, %v665
        %v682 = vsub.f32 %v597, %v668
        %v683 = vsub.f32 %v600, %v671
        %v684 = vsub.f32 %v647, %v674
        %v685 = vsub.f32 %v650, %v677
        %v686 = vmul.f32 %v678, 1.442695
        %v687 = vpow.pop %v686
        %v688 = vmul.f32 %v679, 1.442695
        %v689 = vpow.pop %v688
        %v690 = vmul.f32 %v680, 1.442695
        %v691 = vpow.pop %v690
        %v692 = vmul.f32 %v681, 1.442695
        %v693 = vpow.pop %v692
        %v694 = vmul.f32 %v682, 1.442695
        %v695 = vpow.pop %v694
        %v696 = vmul.f32 %v683, 1.442695
        %v697 = vpow.pop %v696
        %v698 = vmul.f32 %v684, 1.442695
        %v699 = vpow.pop %v698
        %v700 = vmul.f32 %v685, 1.442695
        %v701 = vpow.pop %v700
        %v702 = vsel %vm653, %v687, 0.0
        %703 = vadd.xlane.f32.xlu0 %v702
        %v704 = vpop.xlane.xlu0 %703
        %v705 = vsel %vm653, %v689, 0.0
        %706 = vadd.xlane.f32.xlu0 %v705
        %v707 = vpop.xlane.xlu0 %706
        %v708 = vsel %vm653, %v691, 0.0
        %709 = vadd.xlane.f32.xlu0 %v708
        %v710 = vpop.xlane.xlu0 %709
        %v711 = vsel %vm653, %v693, 0.0
        %712 = vadd.xlane.f32.xlu0 %v711
        %v713 = vpop.xlane.xlu0 %712
        %v714 = vsel %vm653, %v695, 0.0
        %715 = vadd.xlane.f32.xlu0 %v714
        %v716 = vpop.xlane.xlu0 %715
        %v717 = vsel %vm653, %v697, 0.0
        %718 = vadd.xlane.f32.xlu0 %v717
        %v719 = vpop.xlane.xlu0 %718
        %v720 = vsel %vm653, %v699, 0.0
        %721 = vadd.xlane.f32.xlu0 %v720
        %v722 = vpop.xlane.xlu0 %721
        %v723 = vsel %vm653, %v701, 0.0
        %724 = vadd.xlane.f32.xlu0 %v723
        %v725 = vpop.xlane.xlu0 %724
        %v726 = vrcp.pop %v704
        %v727 = vrcp.pop %v707
        %v728 = vrcp.pop %v710
        %v729 = vrcp.pop %v713
        %v730 = vrcp.pop %v716
        %v731 = vrcp.pop %v719
        %v732 = vrcp.pop %v722
        %v733 = vrcp.pop %v725
        %v734 = vmul.f32 %v687, %v726
        %v735 = vmul.f32 %v689, %v727
        %v736 = vmul.f32 %v691, %v728
        %v737 = vmul.f32 %v693, %v729
        %v738 = vmul.f32 %v695, %v730
        %v739 = vmul.f32 %v697, %v731
        %v740 = vmul.f32 %v699, %v732
        %v741 = vmul.f32 %v701, %v733
        %v742 = vpack.c.bf16 %v735, %v734
        %v743 = vpack.c.bf16 %v737, %v736
        %v744 = vpack.c.bf16 %v739, %v738
        %v745 = vpack.c.bf16 %v741, %v740
        %746 = vrot.lane.b32.xlu0 %v448, 64
        %v747 = vpop.permute.xlu0 %746
        %v750 = vsel %vm653, %v742, 0
        %752 = vmatprep.subr.bf16.mxu0 0
        %753 = vmatpush1.bf16.msra.mxu0 %v747
        %754 = vmatprep.subr.bf16.mxu0 0
        %755 = vmatpush1.bf16.msra.mxu0 0
        %756 = vmatprep.subr.bf16.mxu0 0
        %757 = vmatpush1.bf16.msra.mxu0 0
        %758 = vmatprep.subr.bf16.mxu0 0
        %759 = vmatpush1.bf16.msra.mxu0 0
        %760 = vmatprep.subr.bf16.mxu0 0
        %761 = vmatpush1.bf16.msra.mxu0 0
        %762 = vmatprep.subr.bf16.mxu0 0
        %763 = vmatpush1.bf16.msra.mxu0 0
        %764 = vmatprep.subr.bf16.mxu0 0
        %765 = vmatpush1.bf16.msra.mxu0 0
        %766 = vmatprep.subr.bf16.mxu0 0
        %767 = vmatpush1.bf16.msra.mxu0 0
        %768 = vmatprep.subr.bf16.mxu0 0
        %769 = vmatpush1.bf16.msra.mxu0 0
        %770 = vmatprep.subr.bf16.mxu0 0
        %771 = vmatpush1.bf16.msra.mxu0 0
        %772 = vmatprep.subr.bf16.mxu0 0
        %773 = vmatpush1.bf16.msra.mxu0 0
        %774 = vmatprep.subr.bf16.mxu0 0
        %775 = vmatpush1.bf16.msra.mxu0 0
        %776 = vmatprep.subr.bf16.mxu0 0
        %777 = vmatpush1.bf16.msra.mxu0 0
        %778 = vmatprep.subr.bf16.mxu0 0
        %779 = vmatpush1.bf16.msra.mxu0 0
        %780 = vmatprep.subr.bf16.mxu0 0
        %781 = vmatpush1.bf16.msra.mxu0 0
        %782 = vmatprep.subr.bf16.mxu0 0
        %783 = vmatpush1.bf16.msra.mxu0 0
        %784 = vmatprep.mubr.bf16.mxu0 0
        %785 = vmatmul.mubr.bf16.gmra.mrb[0].mxu0 %v750
        %v786 = vpop.f32.mrb[0].mxu0
        %v787 = vadd.f32 0.0, %v786
        %v788 = vpop.f32.mrb[0].mxu0
        %v789 = vpop.f32.mrb[0].mxu0
        %v790 = vadd.f32 0.0, %v789
        %v791 = vpop.f32.mrb[0].mxu0
        %792 = vdwg.mxu0
        %793 = vrot.lane.b32.xlu0 %v449, 64
        %v794 = vpop.permute.xlu0 %793
        %v797 = vsel %vm653, %v743, 0
        %799 = vmatprep.subr.bf16.mxu0 0
        %800 = vmatpush1.bf16.msra.mxu0 %v794
        %801 = vmatprep.subr.bf16.mxu0 0
        %802 = vmatpush1.bf16.msra.mxu0 0
        %803 = vmatprep.subr.bf16.mxu0 0
        %804 = vmatpush1.bf16.msra.mxu0 0
        %805 = vmatprep.subr.bf16.mxu0 0
        %806 = vmatpush1.bf16.msra.mxu0 0
        %807 = vmatprep.subr.bf16.mxu0 0
        %808 = vmatpush1.bf16.msra.mxu0 0
        %809 = vmatprep.subr.bf16.mxu0 0
        %810 = vmatpush1.bf16.msra.mxu0 0
        %811 = vmatprep.subr.bf16.mxu0 0
        %812 = vmatpush1.bf16.msra.mxu0 0
        %813 = vmatprep.subr.bf16.mxu0 0
        %814 = vmatpush1.bf16.msra.mxu0 0
        %815 = vmatprep.subr.bf16.mxu0 0
        %816 = vmatpush1.bf16.msra.mxu0 0
        %817 = vmatprep.subr.bf16.mxu0 0
        %818 = vmatpush1.bf16.msra.mxu0 0
        %819 = vmatprep.subr.bf16.mxu0 0
        %820 = vmatpush1.bf16.msra.mxu0 0
        %821 = vmatprep.subr.bf16.mxu0 0
        %822 = vmatpush1.bf16.msra.mxu0 0
        %823 = vmatprep.subr.bf16.mxu0 0
        %824 = vmatpush1.bf16.msra.mxu0 0
        %825 = vmatprep.subr.bf16.mxu0 0
        %826 = vmatpush1.bf16.msra.mxu0 0
        %827 = vmatprep.subr.bf16.mxu0 0
        %828 = vmatpush1.bf16.msra.mxu0 0
        %829 = vmatprep.subr.bf16.mxu0 0
        %830 = vmatpush1.bf16.msra.mxu0 0
        %831 = vmatprep.mubr.bf16.mxu0 0
        %832 = vmatmul.mubr.bf16.gmra.mrb[0].mxu0 %v797
        %v833 = vpop.f32.mrb[0].mxu0
        %v834 = vadd.f32 0.0, %v833
        %v835 = vpop.f32.mrb[0].mxu0
        %v836 = vpop.f32.mrb[0].mxu0
        %v837 = vadd.f32 0.0, %v836
        %v838 = vpop.f32.mrb[0].mxu0
        %839 = vdwg.mxu0
        %840 = vrot.lane.b32.xlu0 %v450, 64
        %v841 = vpop.permute.xlu0 %840
        %v844 = vsel %vm653, %v744, 0
        %846 = vmatprep.subr.bf16.mxu0 0
        %847 = vmatpush1.bf16.msra.mxu0 %v841
        %848 = vmatprep.subr.bf16.mxu0 0
        %849 = vmatpush1.bf16.msra.mxu0 0
        %850 = vmatprep.subr.bf16.mxu0 0
        %851 = vmatpush1.bf16.msra.mxu0 0
        %852 = vmatprep.subr.bf16.mxu0 0
        %853 = vmatpush1.bf16.msra.mxu0 0
        %854 = vmatprep.subr.bf16.mxu0 0
        %855 = vmatpush1.bf16.msra.mxu0 0
        %856 = vmatprep.subr.bf16.mxu0 0
        %857 = vmatpush1.bf16.msra.mxu0 0
        %858 = vmatprep.subr.bf16.mxu0 0
        %859 = vmatpush1.bf16.msra.mxu0 0
        %860 = vmatprep.subr.bf16.mxu0 0
        %861 = vmatpush1.bf16.msra.mxu0 0
        %862 = vmatprep.subr.bf16.mxu0 0
        %863 = vmatpush1.bf16.msra.mxu0 0
        %864 = vmatprep.subr.bf16.mxu0 0
        %865 = vmatpush1.bf16.msra.mxu0 0
        %866 = vmatprep.subr.bf16.mxu0 0
        %867 = vmatpush1.bf16.msra.mxu0 0
        %868 = vmatprep.subr.bf16.mxu0 0
        %869 = vmatpush1.bf16.msra.mxu0 0
        %870 = vmatprep.subr.bf16.mxu0 0
        %871 = vmatpush1.bf16.msra.mxu0 0
        %872 = vmatprep.subr.bf16.mxu0 0
        %873 = vmatpush1.bf16.msra.mxu0 0
        %874 = vmatprep.subr.bf16.mxu0 0
        %875 = vmatpush1.bf16.msra.mxu0 0
        %876 = vmatprep.subr.bf16.mxu0 0
        %877 = vmatpush1.bf16.msra.mxu0 0
        %878 = vmatprep.mubr.bf16.mxu0 0
        %879 = vmatmul.mubr.bf16.gmra.mrb[0].mxu0 %v844
        %v880 = vpop.f32.mrb[0].mxu0
        %v881 = vadd.f32 0.0, %v880
        %v882 = vpop.f32.mrb[0].mxu0
        %v883 = vpop.f32.mrb[0].mxu0
        %v884 = vadd.f32 0.0, %v883
        %v885 = vpop.f32.mrb[0].mxu0
        %886 = vdwg.mxu0
        %887 = vrot.lane.b32.xlu0 %v451, 64
        %v888 = vpop.permute.xlu0 %887
        %v891 = vsel %vm653, %v745, 0
        %893 = vmatprep.subr.bf16.mxu0 0
        %894 = vmatpush1.bf16.msra.mxu0 %v888
        %895 = vmatprep.subr.bf16.mxu0 0
        %896 = vmatpush1.bf16.msra.mxu0 0
        %897 = vmatprep.subr.bf16.mxu0 0
        %898 = vmatpush1.bf16.msra.mxu0 0
        %899 = vmatprep.subr.bf16.mxu0 0
        %900 = vmatpush1.bf16.msra.mxu0 0
        %901 = vmatprep.subr.bf16.mxu0 0
        %902 = vmatpush1.bf16.msra.mxu0 0
        %903 = vmatprep.subr.bf16.mxu0 0
        %904 = vmatpush1.bf16.msra.mxu0 0
        %905 = vmatprep.subr.bf16.mxu0 0
        %906 = vmatpush1.bf16.msra.mxu0 0
        %907 = vmatprep.subr.bf16.mxu0 0
        %908 = vmatpush1.bf16.msra.mxu0 0
        %909 = vmatprep.subr.bf16.mxu0 0
        %910 = vmatpush1.bf16.msra.mxu0 0
        %911 = vmatprep.subr.bf16.mxu0 0
        %912 = vmatpush1.bf16.msra.mxu0 0
        %913 = vmatprep.subr.bf16.mxu0 0
        %914 = vmatpush1.bf16.msra.mxu0 0
        %915 = vmatprep.subr.bf16.mxu0 0
        %916 = vmatpush1.bf16.msra.mxu0 0
        %917 = vmatprep.subr.bf16.mxu0 0
        %918 = vmatpush1.bf16.msra.mxu0 0
        %919 = vmatprep.subr.bf16.mxu0 0
        %920 = vmatpush1.bf16.msra.mxu0 0
        %921 = vmatprep.subr.bf16.mxu0 0
        %922 = vmatpush1.bf16.msra.mxu0 0
        %923 = vmatprep.subr.bf16.mxu0 0
        %924 = vmatpush1.bf16.msra.mxu0 0
        %925 = vmatprep.mubr.bf16.mxu0 0
        %926 = vmatmul.mubr.bf16.gmra.mrb[0].mxu0 %v891
        %v927 = vpop.f32.mrb[0].mxu0
        %v928 = vadd.f32 0.0, %v927
        %v929 = vpop.f32.mrb[0].mxu0
        %v930 = vpop.f32.mrb[0].mxu0
        %v931 = vadd.f32 0.0, %v930
        %v932 = vpop.f32.mrb[0].mxu0
        %933 = vdwg.mxu0
        %v934 = vpack.c.bf16 %v790, %v787
        %v935 = vpack.c.bf16 %v837, %v834
        %v936 = vpack.c.bf16 %v884, %v881
        %v937 = vpack.c.bf16 %v931, %v928
        %938 = vst.msk [vmem:[#allocation3] sm:$0xff] %vm455, %v934
        %939 = vst.msk [vmem:[#allocation3 + $0x8] sm:$0xff] %vm455, %v935
        %940 = vst.msk [vmem:[#allocation3 + $0x10] sm:$0xff] %vm455, %v936
        %941 = vst.msk [vmem:[#allocation3 + $0x18] sm:$0xff] %vm455, %v937
        %v942 = vld [vmem:[#allocation2] sm:$0xff]
        %v943 = vld [vmem:[#allocation2 + $0x8] sm:$0xff]
        %v944 = vld [vmem:[#allocation2 + $0x10] sm:$0xff]
        %v945 = vld [vmem:[#allocation2 + $0x18] sm:$0xff]
        %947 = vrot.lane.b32.xlu0 %v942, 120
        %v948 = vpop.permute.xlu0 %947
        %949 = vrot.lane.b32.xlu0 %v942, 88
        %v950 = vpop.permute.xlu0 %949
        %v952 = vsel %vm455, %v948, 0
        %v955 = vsel %vm455, %v950, 0
        %957 = vmatprep.subr.bf16.mxu0 0
        %958 = vmatpush1.bf16.xpose.msra.mxu0 %v955
        %959 = vmatprep.subr.bf16.mxu0 0
        %960 = vmatpush1.bf16.xpose.msra.mxu0 0
        %961 = vmatprep.subr.bf16.mxu0 0
        %962 = vmatpush1.bf16.xpose.msra.mxu0 0
        %963 = vmatprep.subr.bf16.mxu0 0
        %964 = vmatpush1.bf16.xpose.msra.mxu0 0
        %965 = vmatprep.subr.bf16.mxu0 0
        %966 = vmatpush1.bf16.xpose.msra.mxu0 0
        %967 = vmatprep.subr.bf16.mxu0 0
        %968 = vmatpush1.bf16.xpose.msra.mxu0 0
        %969 = vmatprep.subr.bf16.mxu0 0
        %970 = vmatpush1.bf16.xpose.msra.mxu0 0
        %971 = vmatprep.subr.bf16.mxu0 0
        %972 = vmatpush1.bf16.xpose.msra.mxu0 0
        %973 = vmatprep.subr.bf16.mxu0 0
        %974 = vmatpush1.bf16.xpose.msra.mxu0 0
        %975 = vmatprep.subr.bf16.mxu0 0
        %976 = vmatpush1.bf16.xpose.msra.mxu0 0
        %977 = vmatprep.subr.bf16.mxu0 0
        %978 = vmatpush1.bf16.xpose.msra.mxu0 0
        %979 = vmatprep.subr.bf16.mxu0 0
        %980 = vmatpush1.bf16.xpose.msra.mxu0 0
        %981 = vmatprep.subr.bf16.mxu0 0
        %982 = vmatpush1.bf16.xpose.msra.mxu0 0
        %983 = vmatprep.subr.bf16.mxu0 0
        %984 = vmatpush1.bf16.xpose.msra.mxu0 0
        %985 = vmatprep.subr.bf16.mxu0 0
        %986 = vmatpush1.bf16.xpose.msra.mxu0 0
        %987 = vmatprep.subr.bf16.mxu0 0
        %988 = vmatpush1.bf16.xpose.msra.mxu0 0
        %989 = vmatprep.mubr.bf16.mxu0 0
        %990 = vmatmul.mubr.bf16.gmra.mrb[0].mxu0 %v952
        %v991 = vpop.f32.mrb[0].mxu0
        %v992 = vadd.f32 %v442, %v991
        %v993 = vpop.f32.mrb[0].mxu0
        %v994 = vpop.f32.mrb[0].mxu0
        %v995 = vadd.f32 %v443, %v994
        %v996 = vpop.f32.mrb[0].mxu0
        %997 = vdwg.mxu0
        %999 = vrot.lane.b32.xlu0 %v943, 120
        %v1000 = vpop.permute.xlu0 %999
        %1001 = vrot.lane.b32.xlu0 %v943, 88
        %v1002 = vpop.permute.xlu0 %1001
        %v1004 = vsel %vm455, %v1000, 0
        %v1007 = vsel %vm455, %v1002, 0
        %1009 = vmatprep.subr.bf16.mxu0 0
        %1010 = vmatpush1.bf16.xpose.msra.mxu0 %v1007
        %1011 = vmatprep.subr.bf16.mxu0 0
        %1012 = vmatpush1.bf16.xpose.msra.mxu0 0
        %1013 = vmatprep.subr.bf16.mxu0 0
        %1014 = vmatpush1.bf16.xpose.msra.mxu0 0
        %1015 = vmatprep.subr.bf16.mxu0 0
        %1016 = vmatpush1.bf16.xpose.msra.mxu0 0
        %1017 = vmatprep.subr.bf16.mxu0 0
        %1018 = vmatpush1.bf16.xpose.msra.mxu0 0
        %1019 = vmatprep.subr.bf16.mxu0 0
        %1020 = vmatpush1.bf16.xpose.msra.mxu0 0
        %1021 = vmatprep.subr.bf16.mxu0 0
        %1022 = vmatpush1.bf16.xpose.msra.mxu0 0
        %1023 = vmatprep.subr.bf16.mxu0 0
        %1024 = vmatpush1.bf16.xpose.msra.mxu0 0
        %1025 = vmatprep.subr.bf16.mxu0 0
        %1026 = vmatpush1.bf16.xpose.msra.mxu0 0
        %1027 = vmatprep.subr.bf16.mxu0 0
        %1028 = vmatpush1.bf16.xpose.msra.mxu0 0
        %1029 = vmatprep.subr.bf16.mxu0 0
        %1030 = vmatpush1.bf16.xpose.msra.mxu0 0
        %1031 = vmatprep.subr.bf16.mxu0 0
        %1032 = vmatpush1.bf16.xpose.msra.mxu0 0
        %1033 = vmatprep.subr.bf16.mxu0 0
        %1034 = vmatpush1.bf16.xpose.msra.mxu0 0
        %1035 = vmatprep.subr.bf16.mxu0 0
        %1036 = vmatpush1.bf16.xpose.msra.mxu0 0
        %1037 = vmatprep.subr.bf16.mxu0 0
        %1038 = vmatpush1.bf16.xpose.msra.mxu0 0
        %1039 = vmatprep.subr.bf16.mxu0 0
        %1040 = vmatpush1.bf16.xpose.msra.mxu0 0
        %1041 = vmatprep.mubr.bf16.mxu0 0
        %1042 = vmatmul.mubr.bf16.gmra.mrb[0].mxu0 %v1004
        %v1043 = vpop.f32.mrb[0].mxu0
        %v1044 = vadd.f32 %v442, %v1043
        %v1045 = vpop.f32.mrb[0].mxu0
        %v1046 = vpop.f32.mrb[0].mxu0
        %v1047 = vadd.f32 %v443, %v1046
        %v1048 = vpop.f32.mrb[0].mxu0
        %1049 = vdwg.mxu0
        %1051 = vrot.lane.b32.xlu0 %v944, 120
        %v1052 = vpop.permute.xlu0 %1051
        %1053 = vrot.lane.b32.xlu0 %v944, 88
        %v1054 = vpop.permute.xlu0 %1053
        %v1056 = vsel %vm455, %v1052, 0
        %v1059 = vsel %vm455, %v1054, 0
        %1061 = vmatprep.subr.bf16.mxu0 0
        %1062 = vmatpush1.bf16.xpose.msra.mxu0 %v1059
        %1063 = vmatprep.subr.bf16.mxu0 0
        %1064 = vmatpush1.bf16.xpose.msra.mxu0 0
        %1065 = vmatprep.subr.bf16.mxu0 0
        %1066 = vmatpush1.bf16.xpose.msra.mxu0 0
        %1067 = vmatprep.subr.bf16.mxu0 0
        %1068 = vmatpush1.bf16.xpose.msra.mxu0 0
        %1069 = vmatprep.subr.bf16.mxu0 0
        %1070 = vmatpush1.bf16.xpose.msra.mxu0 0
        %1071 = vmatprep.subr.bf16.mxu0 0
        %1072 = vmatpush1.bf16.xpose.msra.mxu0 0
        %1073 = vmatprep.subr.bf16.mxu0 0
        %1074 = vmatpush1.bf16.xpose.msra.mxu0 0
        %1075 = vmatprep.subr.bf16.mxu0 0
        %1076 = vmatpush1.bf16.xpose.msra.mxu0 0
        %1077 = vmatprep.subr.bf16.mxu0 0
        %1078 = vmatpush1.bf16.xpose.msra.mxu0 0
        %1079 = vmatprep.subr.bf16.mxu0 0
        %1080 = vmatpush1.bf16.xpose.msra.mxu0 0
        %1081 = vmatprep.subr.bf16.mxu0 0
        %1082 = vmatpush1.bf16.xpose.msra.mxu0 0
        %1083 = vmatprep.subr.bf16.mxu0 0
        %1084 = vmatpush1.bf16.xpose.msra.mxu0 0
        %1085 = vmatprep.subr.bf16.mxu0 0
        %1086 = vmatpush1.bf16.xpose.msra.mxu0 0
        %1087 = vmatprep.subr.bf16.mxu0 0
        %1088 = vmatpush1.bf16.xpose.msra.mxu0 0
        %1089 = vmatprep.subr.bf16.mxu0 0
        %1090 = vmatpush1.bf16.xpose.msra.mxu0 0
        %1091 = vmatprep.subr.bf16.mxu0 0
        %1092 = vmatpush1.bf16.xpose.msra.mxu0 0
        %1093 = vmatprep.mubr.bf16.mxu0 0
        %1094 = vmatmul.mubr.bf16.gmra.mrb[0].mxu0 %v1056
        %v1095 = vpop.f32.mrb[0].mxu0
        %v1096 = vadd.f32 %v442, %v1095
        %v1097 = vpop.f32.mrb[0].mxu0
        %v1098 = vpop.f32.mrb[0].mxu0
        %v1099 = vadd.f32 %v443, %v1098
        %v1100 = vpop.f32.mrb[0].mxu0
        %1101 = vdwg.mxu0
        %1103 = vrot.lane.b32.xlu0 %v945, 120
        %v1104 = vpop.permute.xlu0 %1103
        %1105 = vrot.lane.b32.xlu0 %v945, 88
        %v1106 = vpop.permute.xlu0 %1105
        %v1108 = vsel %vm455, %v1104, 0
        %v1111 = vsel %vm455, %v1106, 0
        %1113 = vmatprep.subr.bf16.mxu0 0
        %1114 = vmatpush1.bf16.xpose.msra.mxu0 %v1111
        %1115 = vmatprep.subr.bf16.mxu0 0
        %1116 = vmatpush1.bf16.xpose.msra.mxu0 0
        %1117 = vmatprep.subr.bf16.mxu0 0
        %1118 = vmatpush1.bf16.xpose.msra.mxu0 0
        %1119 = vmatprep.subr.bf16.mxu0 0
        %1120 = vmatpush1.bf16.xpose.msra.mxu0 0
        %1121 = vmatprep.subr.bf16.mxu0 0
        %1122 = vmatpush1.bf16.xpose.msra.mxu0 0
        %1123 = vmatprep.subr.bf16.mxu0 0
        %1124 = vmatpush1.bf16.xpose.msra.mxu0 0
        %1125 = vmatprep.subr.bf16.mxu0 0
        %1126 = vmatpush1.bf16.xpose.msra.mxu0 0
        %1127 = vmatprep.subr.bf16.mxu0 0
        %1128 = vmatpush1.bf16.xpose.msra.mxu0 0
        %1129 = vmatprep.subr.bf16.mxu0 0
        %1130 = vmatpush1.bf16.xpose.msra.mxu0 0
        %1131 = vmatprep.subr.bf16.mxu0 0
        %1132 = vmatpush1.bf16.xpose.msra.mxu0 0
        %1133 = vmatprep.subr.bf16.mxu0 0
        %1134 = vmatpush1.bf16.xpose.msra.mxu0 0
        %1135 = vmatprep.subr.bf16.mxu0 0
        %1136 = vmatpush1.bf16.xpose.msra.mxu0 0
        %1137 = vmatprep.subr.bf16.mxu0 0
        %1138 = vmatpush1.bf16.xpose.msra.mxu0 0
        %1139 = vmatprep.subr.bf16.mxu0 0
        %1140 = vmatpush1.bf16.xpose.msra.mxu0 0
        %1141 = vmatprep.subr.bf16.mxu0 0
        %1142 = vmatpush1.bf16.xpose.msra.mxu0 0
        %1143 = vmatprep.subr.bf16.mxu0 0
        %1144 = vmatpush1.bf16.xpose.msra.mxu0 0
        %1145 = vmatprep.mubr.bf16.mxu0 0
        %1146 = vmatmul.mubr.bf16.gmra.mrb[0].mxu0 %v1108
        %v1147 = vpop.f32.mrb[0].mxu0
        %v1148 = vadd.f32 %v442, %v1147
        %v1149 = vpop.f32.mrb[0].mxu0
        %v1150 = vpop.f32.mrb[0].mxu0
        %v1151 = vadd.f32 %v443, %v1150
        %v1152 = vpop.f32.mrb[0].mxu0
        %1153 = vdwg.mxu0
        %v1154 = vsel %vm653, %v992, -inf
        %1155 = vmax.xlane.f32.xlu0 %v1154
        %v1156 = vpop.xlane.xlu0 %1155
        %v1157 = vsel %vm653, %v995, -inf
        %1158 = vmax.xlane.f32.xlu0 %v1157
        %v1159 = vpop.xlane.xlu0 %1158
        %v1160 = vsel %vm653, %v1044, -inf
        %1161 = vmax.xlane.f32.xlu0 %v1160
        %v1162 = vpop.xlane.xlu0 %1161
        %v1163 = vsel %vm653, %v1047, -inf
        %1164 = vmax.xlane.f32.xlu0 %v1163
        %v1165 = vpop.xlane.xlu0 %1164
        %v1166 = vsel %vm653, %v1096, -inf
        %1167 = vmax.xlane.f32.xlu0 %v1166
        %v1168 = vpop.xlane.xlu0 %1167
        %v1169 = vsel %vm653, %v1099, -inf
        %1170 = vmax.xlane.f32.xlu0 %v1169
        %v1171 = vpop.xlane.xlu0 %1170
        %v1172 = vsel %vm653, %v1148, -inf
        %1173 = vmax.xlane.f32.xlu0 %v1172
        %v1174 = vpop.xlane.xlu0 %1173
        %v1175 = vsel %vm653, %v1151, -inf
        %1176 = vmax.xlane.f32.xlu0 %v1175
        %v1177 = vpop.xlane.xlu0 %1176
        %v1178 = vsub.f32 %v992, %v1156
        %v1179 = vsub.f32 %v995, %v1159
        %v1180 = vsub.f32 %v1044, %v1162
        %v1181 = vsub.f32 %v1047, %v1165
        %v1182 = vsub.f32 %v1096, %v1168
        %v1183 = vsub.f32 %v1099, %v1171
        %v1184 = vsub.f32 %v1148, %v1174
        %v1185 = vsub.f32 %v1151, %v1177
        %v1186 = vmul.f32 %v1178, 1.442695
        %v1187 = vpow.pop %v1186
        %v1188 = vmul.f32 %v1179, 1.442695
        %v1189 = vpow.pop %v1188
        %v1190 = vmul.f32 %v1180, 1.442695
        %v1191 = vpow.pop %v1190
        %v1192 = vmul.f32 %v1181, 1.442695
        %v1193 = vpow.pop %v1192
        %v1194 = vmul.f32 %v1182, 1.442695
        %v1195 = vpow.pop %v1194
        %v1196 = vmul.f32 %v1183, 1.442695
        %v1197 = vpow.pop %v1196
        %v1198 = vmul.f32 %v1184, 1.442695
        %v1199 = vpow.pop %v1198
        %v1200 = vmul.f32 %v1185, 1.442695
        %v1201 = vpow.pop %v1200
        %v1202 = vsel %vm653, %v1187, 0.0
        %1203 = vadd.xlane.f32.xlu0 %v1202
        %v1204 = vpop.xlane.xlu0 %1203
        %v1205 = vsel %vm653, %v1189, 0.0
        %1206 = vadd.xlane.f32.xlu0 %v1205
        %v1207 = vpop.xlane.xlu0 %1206
        %v1208 = vsel %vm653, %v1191, 0.0
        %1209 = vadd.xlane.f32.xlu0 %v1208
        %v1210 = vpop.xlane.xlu0 %1209
        %v1211 = vsel %vm653, %v1193, 0.0
        %1212 = vadd.xlane.f32.xlu0 %v1211
        %v1213 = vpop.xlane.xlu0 %1212
        %v1214 = vsel %vm653, %v1195, 0.0
        %1215 = vadd.xlane.f32.xlu0 %v1214
        %v1216 = vpop.xlane.xlu0 %1215
        %v1217 = vsel %vm653, %v1197, 0.0
        %1218 = vadd.xlane.f32.xlu0 %v1217
        %v1219 = vpop.xlane.xlu0 %1218
        %v1220 = vsel %vm653, %v1199, 0.0
        %1221 = vadd.xlane.f32.xlu0 %v1220
        %v1222 = vpop.xlane.xlu0 %1221
        %v1223 = vsel %vm653, %v1201, 0.0
        %1224 = vadd.xlane.f32.xlu0 %v1223
        %v1225 = vpop.xlane.xlu0 %1224
        %v1226 = vrcp.pop %v1204
        %v1227 = vrcp.pop %v1207
        %v1228 = vrcp.pop %v1210
        %v1229 = vrcp.pop %v1213
        %v1230 = vrcp.pop %v1216
        %v1231 = vrcp.pop %v1219
        %v1232 = vrcp.pop %v1222
        %v1233 = vrcp.pop %v1225
        %v1234 = vmul.f32 %v1187, %v1226
        %v1235 = vmul.f32 %v1189, %v1227
        %v1236 = vmul.f32 %v1191, %v1228
        %v1237 = vmul.f32 %v1193, %v1229
        %v1238 = vmul.f32 %v1195, %v1230
        %v1239 = vmul.f32 %v1197, %v1231
        %v1240 = vmul.f32 %v1199, %v1232
        %v1241 = vmul.f32 %v1201, %v1233
        %v1242 = vpack.c.bf16 %v1235, %v1234
        %v1243 = vpack.c.bf16 %v1237, %v1236
        %v1244 = vpack.c.bf16 %v1239, %v1238
        %v1245 = vpack.c.bf16 %v1241, %v1240
        %1246 = vrot.lane.b32.xlu0 %v942, 56
        %v1247 = vpop.permute.xlu0 %1246
        %v1250 = vsel %vm653, %v1242, 0
        %1252 = vmatprep.subr.bf16.mxu0 0
        %1253 = vmatpush1.bf16.msra.mxu0 %v1247
        %1254 = vmatprep.subr.bf16.mxu0 0
        %1255 = vmatpush1.bf16.msra.mxu0 0
        %1256 = vmatprep.subr.bf16.mxu0 0
        %1257 = vmatpush1.bf16.msra.mxu0 0
        %1258 = vmatprep.subr.bf16.mxu0 0
        %1259 = vmatpush1.bf16.msra.mxu0 0
        %1260 = vmatprep.subr.bf16.mxu0 0
        %1261 = vmatpush1.bf16.msra.mxu0 0
        %1262 = vmatprep.subr.bf16.mxu0 0
        %1263 = vmatpush1.bf16.msra.mxu0 0
        %1264 = vmatprep.subr.bf16.mxu0 0
        %1265 = vmatpush1.bf16.msra.mxu0 0
        %1266 = vmatprep.subr.bf16.mxu0 0
        %1267 = vmatpush1.bf16.msra.mxu0 0
        %1268 = vmatprep.subr.bf16.mxu0 0
        %1269 = vmatpush1.bf16.msra.mxu0 0
        %1270 = vmatprep.subr.bf16.mxu0 0
        %1271 = vmatpush1.bf16.msra.mxu0 0
        %1272 = vmatprep.subr.bf16.mxu0 0
        %1273 = vmatpush1.bf16.msra.mxu0 0
        %1274 = vmatprep.subr.bf16.mxu0 0
        %1275 = vmatpush1.bf16.msra.mxu0 0
        %1276 = vmatprep.subr.bf16.mxu0 0
        %1277 = vmatpush1.bf16.msra.mxu0 0
        %1278 = vmatprep.subr.bf16.mxu0 0
        %1279 = vmatpush1.bf16.msra.mxu0 0
        %1280 = vmatprep.subr.bf16.mxu0 0
        %1281 = vmatpush1.bf16.msra.mxu0 0
        %1282 = vmatprep.subr.bf16.mxu0 0
        %1283 = vmatpush1.bf16.msra.mxu0 0
        %1284 = vmatprep.mubr.bf16.mxu0 0
        %1285 = vmatmul.mubr.bf16.gmra.mrb[0].mxu0 %v1250
        %v1286 = vpop.f32.mrb[0].mxu0
        %v1287 = vadd.f32 0.0, %v1286
        %v1288 = vpop.f32.mrb[0].mxu0
        %v1289 = vpop.f32.mrb[0].mxu0
        %v1290 = vadd.f32 0.0, %v1289
        %v1291 = vpop.f32.mrb[0].mxu0
        %1292 = vdwg.mxu0
        %1293 = vrot.lane.b32.xlu0 %v943, 56
        %v1294 = vpop.permute.xlu0 %1293
        %v1297 = vsel %vm653, %v1243, 0
        %1299 = vmatprep.subr.bf16.mxu0 0
        %1300 = vmatpush1.bf16.msra.mxu0 %v1294
        %1301 = vmatprep.subr.bf16.mxu0 0
        %1302 = vmatpush1.bf16.msra.mxu0 0
        %1303 = vmatprep.subr.bf16.mxu0 0
        %1304 = vmatpush1.bf16.msra.mxu0 0
        %1305 = vmatprep.subr.bf16.mxu0 0
        %1306 = vmatpush1.bf16.msra.mxu0 0
        %1307 = vmatprep.subr.bf16.mxu0 0
        %1308 = vmatpush1.bf16.msra.mxu0 0
        %1309 = vmatprep.subr.bf16.mxu0 0
        %1310 = vmatpush1.bf16.msra.mxu0 0
        %1311 = vmatprep.subr.bf16.mxu0 0
        %1312 = vmatpush1.bf16.msra.mxu0 0
        %1313 = vmatprep.subr.bf16.mxu0 0
        %1314 = vmatpush1.bf16.msra.mxu0 0
        %1315 = vmatprep.subr.bf16.mxu0 0
        %1316 = vmatpush1.bf16.msra.mxu0 0
        %1317 = vmatprep.subr.bf16.mxu0 0
        %1318 = vmatpush1.bf16.msra.mxu0 0
        %1319 = vmatprep.subr.bf16.mxu0 0
        %1320 = vmatpush1.bf16.msra.mxu0 0
        %1321 = vmatprep.subr.bf16.mxu0 0
        %1322 = vmatpush1.bf16.msra.mxu0 0
        %1323 = vmatprep.subr.bf16.mxu0 0
        %1324 = vmatpush1.bf16.msra.mxu0 0
        %1325 = vmatprep.subr.bf16.mxu0 0
        %1326 = vmatpush1.bf16.msra.mxu0 0
        %1327 = vmatprep.subr.bf16.mxu0 0
        %1328 = vmatpush1.bf16.msra.mxu0 0
        %1329 = vmatprep.subr.bf16.mxu0 0
        %1330 = vmatpush1.bf16.msra.mxu0 0
        %1331 = vmatprep.mubr.bf16.mxu0 0
        %1332 = vmatmul.mubr.bf16.gmra.mrb[0].mxu0 %v1297
        %v1333 = vpop.f32.mrb[0].mxu0
        %v1334 = vadd.f32 0.0, %v1333
        %v1335 = vpop.f32.mrb[0].mxu0
        %v1336 = vpop.f32.mrb[0].mxu0
        %v1337 = vadd.f32 0.0, %v1336
        %v1338 = vpop.f32.mrb[0].mxu0
        %1339 = vdwg.mxu0
        %1340 = vrot.lane.b32.xlu0 %v944, 56
        %v1341 = vpop.permute.xlu0 %1340
        %v1344 = vsel %vm653, %v1244, 0
        %1346 = vmatprep.subr.bf16.mxu0 0
        %1347 = vmatpush1.bf16.msra.mxu0 %v1341
        %1348 = vmatprep.subr.bf16.mxu0 0
        %1349 = vmatpush1.bf16.msra.mxu0 0
        %1350 = vmatprep.subr.bf16.mxu0 0
        %1351 = vmatpush1.bf16.msra.mxu0 0
        %1352 = vmatprep.subr.bf16.mxu0 0
        %1353 = vmatpush1.bf16.msra.mxu0 0
        %1354 = vmatprep.subr.bf16.mxu0 0
        %1355 = vmatpush1.bf16.msra.mxu0 0
        %1356 = vmatprep.subr.bf16.mxu0 0
        %1357 = vmatpush1.bf16.msra.mxu0 0
        %1358 = vmatprep.subr.bf16.mxu0 0
        %1359 = vmatpush1.bf16.msra.mxu0 0
        %1360 = vmatprep.subr.bf16.mxu0 0
        %1361 = vmatpush1.bf16.msra.mxu0 0
        %1362 = vmatprep.subr.bf16.mxu0 0
        %1363 = vmatpush1.bf16.msra.mxu0 0
        %1364 = vmatprep.subr.bf16.mxu0 0
        %1365 = vmatpush1.bf16.msra.mxu0 0
        %1366 = vmatprep.subr.bf16.mxu0 0
        %1367 = vmatpush1.bf16.msra.mxu0 0
        %1368 = vmatprep.subr.bf16.mxu0 0
        %1369 = vmatpush1.bf16.msra.mxu0 0
        %1370 = vmatprep.subr.bf16.mxu0 0
        %1371 = vmatpush1.bf16.msra.mxu0 0
        %1372 = vmatprep.subr.bf16.mxu0 0
        %1373 = vmatpush1.bf16.msra.mxu0 0
        %1374 = vmatprep.subr.bf16.mxu0 0
        %1375 = vmatpush1.bf16.msra.mxu0 0
        %1376 = vmatprep.subr.bf16.mxu0 0
        %1377 = vmatpush1.bf16.msra.mxu0 0
        %1378 = vmatprep.mubr.bf16.mxu0 0
        %1379 = vmatmul.mubr.bf16.gmra.mrb[0].mxu0 %v1344
        %v1380 = vpop.f32.mrb[0].mxu0
        %v1381 = vadd.f32 0.0, %v1380
        %v1382 = vpop.f32.mrb[0].mxu0
        %v1383 = vpop.f32.mrb[0].mxu0
        %v1384 = vadd.f32 0.0, %v1383
        %v1385 = vpop.f32.mrb[0].mxu0
        %1386 = vdwg.mxu0
        %1387 = vrot.lane.b32.xlu0 %v945, 56
        %v1388 = vpop.permute.xlu0 %1387
        %v1391 = vsel %vm653, %v1245, 0
        %1393 = vmatprep.subr.bf16.mxu0 0
        %1394 = vmatpush1.bf16.msra.mxu0 %v1388
        %1395 = vmatprep.subr.bf16.mxu0 0
        %1396 = vmatpush1.bf16.msra.mxu0 0
        %1397 = vmatprep.subr.bf16.mxu0 0
        %1398 = vmatpush1.bf16.msra.mxu0 0
        %1399 = vmatprep.subr.bf16.mxu0 0
        %1400 = vmatpush1.bf16.msra.mxu0 0
        %1401 = vmatprep.subr.bf16.mxu0 0
        %1402 = vmatpush1.bf16.msra.mxu0 0
        %1403 = vmatprep.subr.bf16.mxu0 0
        %1404 = vmatpush1.bf16.msra.mxu0 0
        %1405 = vmatprep.subr.bf16.mxu0 0
        %1406 = vmatpush1.bf16.msra.mxu0 0
        %1407 = vmatprep.subr.bf16.mxu0 0
        %1408 = vmatpush1.bf16.msra.mxu0 0
        %1409 = vmatprep.subr.bf16.mxu0 0
        %1410 = vmatpush1.bf16.msra.mxu0 0
        %1411 = vmatprep.subr.bf16.mxu0 0
        %1412 = vmatpush1.bf16.msra.mxu0 0
        %1413 = vmatprep.subr.bf16.mxu0 0
        %1414 = vmatpush1.bf16.msra.mxu0 0
        %1415 = vmatprep.subr.bf16.mxu0 0
        %1416 = vmatpush1.bf16.msra.mxu0 0
        %1417 = vmatprep.subr.bf16.mxu0 0
        %1418 = vmatpush1.bf16.msra.mxu0 0
        %1419 = vmatprep.subr.bf16.mxu0 0
        %1420 = vmatpush1.bf16.msra.mxu0 0
        %1421 = vmatprep.subr.bf16.mxu0 0
        %1422 = vmatpush1.bf16.msra.mxu0 0
        %1423 = vmatprep.subr.bf16.mxu0 0
        %1424 = vmatpush1.bf16.msra.mxu0 0
        %1425 = vmatprep.mubr.bf16.mxu0 0
        %1426 = vmatmul.mubr.bf16.gmra.mrb[0].mxu0 %v1391
        %v1427 = vpop.f32.mrb[0].mxu0
        %v1428 = vadd.f32 0.0, %v1427
        %v1429 = vpop.f32.mrb[0].mxu0
        %v1430 = vpop.f32.mrb[0].mxu0
        %v1431 = vadd.f32 0.0, %v1430
        %v1432 = vpop.f32.mrb[0].mxu0
        %1433 = vdwg.mxu0
        %v1434 = vpack.c.bf16 %v1290, %v1287
        %v1435 = vpack.c.bf16 %v1337, %v1334
        %v1436 = vpack.c.bf16 %v1384, %v1381
        %v1437 = vpack.c.bf16 %v1431, %v1428
        %1442 = vrot.lane.b32.xlu0 %v1434, 8
        %v1443 = vpop.permute.xlu0 %1442
        %1444 = vrot.lane.b32.xlu0 %v1435, 8
        %v1445 = vpop.permute.xlu0 %1444
        %1446 = vrot.lane.b32.xlu0 %v1436, 8
        %v1447 = vpop.permute.xlu0 %1446
        %1448 = vrot.lane.b32.xlu0 %v1437, 8
        %v1449 = vpop.permute.xlu0 %1448
        %vm1454 = vcmask 130112
        %1455 = vst.msk [vmem:[#allocation3] sm:$0xff] %vm1454, %v1443
        %1456 = vst.msk [vmem:[#allocation3 + $0x8] sm:$0xff] %vm1454, %v1445
        %1457 = vst.msk [vmem:[#allocation3 + $0x10] sm:$0xff] %vm1454, %v1447
        %1458 = vst.msk [vmem:[#allocation3 + $0x18] sm:$0xff] %vm1454, %v1449
        %v1459 = vld [vmem:[#allocation2] sm:$0xff]
        %v1460 = vld [vmem:[#allocation2 + $0x8] sm:$0xff]
        %v1461 = vld [vmem:[#allocation2 + $0x10] sm:$0xff]
        %v1462 = vld [vmem:[#allocation2 + $0x18] sm:$0xff]
        %1464 = vrot.lane.b32.xlu0 %v1459, 112
        %v1465 = vpop.permute.xlu0 %1464
        %1466 = vrot.lane.b32.xlu0 %v1459, 80
        %v1467 = vpop.permute.xlu0 %1466
        %v1469 = vsel %vm455, %v1465, 0
        %v1472 = vsel %vm455, %v1467, 0
        %1474 = vmatprep.subr.bf16.mxu0 0
        %1475 = vmatpush1.bf16.xpose.msra.mxu0 %v1472
        %1476 = vmatprep.subr.bf16.mxu0 0
        %1477 = vmatpush1.bf16.xpose.msra.mxu0 0
        %1478 = vmatprep.subr.bf16.mxu0 0
        %1479 = vmatpush1.bf16.xpose.msra.mxu0 0
        %1480 = vmatprep.subr.bf16.mxu0 0
        %1481 = vmatpush1.bf16.xpose.msra.mxu0 0
        %1482 = vmatprep.subr.bf16.mxu0 0
        %1483 = vmatpush1.bf16.xpose.msra.mxu0 0
        %1484 = vmatprep.subr.bf16.mxu0 0
        %1485 = vmatpush1.bf16.xpose.msra.mxu0 0
        %1486 = vmatprep.subr.bf16.mxu0 0
        %1487 = vmatpush1.bf16.xpose.msra.mxu0 0
        %1488 = vmatprep.subr.bf16.mxu0 0
        %1489 = vmatpush1.bf16.xpose.msra.mxu0 0
        %1490 = vmatprep.subr.bf16.mxu0 0
        %1491 = vmatpush1.bf16.xpose.msra.mxu0 0
        %1492 = vmatprep.subr.bf16.mxu0 0
        %1493 = vmatpush1.bf16.xpose.msra.mxu0 0
        %1494 = vmatprep.subr.bf16.mxu0 0
        %1495 = vmatpush1.bf16.xpose.msra.mxu0 0
        %1496 = vmatprep.subr.bf16.mxu0 0
        %1497 = vmatpush1.bf16.xpose.msra.mxu0 0
        %1498 = vmatprep.subr.bf16.mxu0 0
        %1499 = vmatpush1.bf16.xpose.msra.mxu0 0
        %1500 = vmatprep.subr.bf16.mxu0 0
        %1501 = vmatpush1.bf16.xpose.msra.mxu0 0
        %1502 = vmatprep.subr.bf16.mxu0 0
        %1503 = vmatpush1.bf16.xpose.msra.mxu0 0
        %1504 = vmatprep.subr.bf16.mxu0 0
        %1505 = vmatpush1.bf16.xpose.msra.mxu0 0
        %1506 = vmatprep.mubr.bf16.mxu0 0
        %1507 = vmatmul.mubr.bf16.gmra.mrb[0].mxu0 %v1469
        %v1508 = vpop.f32.mrb[0].mxu0
        %v1509 = vadd.f32 %v444, %v1508
        %v1510 = vpop.f32.mrb[0].mxu0
        %v1511 = vpop.f32.mrb[0].mxu0
        %v1512 = vadd.f32 %v445, %v1511
        %v1513 = vpop.f32.mrb[0].mxu0
        %1514 = vdwg.mxu0
        %1516 = vrot.lane.b32.xlu0 %v1460, 112
        %v1517 = vpop.permute.xlu0 %1516
        %1518 = vrot.lane.b32.xlu0 %v1460, 80
        %v1519 = vpop.permute.xlu0 %1518
        %v1521 = vsel %vm455, %v1517, 0
        %v1524 = vsel %vm455, %v1519, 0
        %1526 = vmatprep.subr.bf16.mxu0 0
        %1527 = vmatpush1.bf16.xpose.msra.mxu0 %v1524
        %1528 = vmatprep.subr.bf16.mxu0 0
        %1529 = vmatpush1.bf16.xpose.msra.mxu0 0
        %1530 = vmatprep.subr.bf16.mxu0 0
        %1531 = vmatpush1.bf16.xpose.msra.mxu0 0
        %1532 = vmatprep.subr.bf16.mxu0 0
        %1533 = vmatpush1.bf16.xpose.msra.mxu0 0
        %1534 = vmatprep.subr.bf16.mxu0 0
        %1535 = vmatpush1.bf16.xpose.msra.mxu0 0
        %1536 = vmatprep.subr.bf16.mxu0 0
        %1537 = vmatpush1.bf16.xpose.msra.mxu0 0
        %1538 = vmatprep.subr.bf16.mxu0 0
        %1539 = vmatpush1.bf16.xpose.msra.mxu0 0
        %1540 = vmatprep.subr.bf16.mxu0 0
        %1541 = vmatpush1.bf16.xpose.msra.mxu0 0
        %1542 = vmatprep.subr.bf16.mxu0 0
        %1543 = vmatpush1.bf16.xpose.msra.mxu0 0
        %1544 = vmatprep.subr.bf16.mxu0 0
        %1545 = vmatpush1.bf16.xpose.msra.mxu0 0
        %1546 = vmatprep.subr.bf16.mxu0 0
        %1547 = vmatpush1.bf16.xpose.msra.mxu0 0
        %1548 = vmatprep.subr.bf16.mxu0 0
        %1549 = vmatpush1.bf16.xpose.msra.mxu0 0
        %1550 = vmatprep.subr.bf16.mxu0 0
        %1551 = vmatpush1.bf16.xpose.msra.mxu0 0
        %1552 = vmatprep.subr.bf16.mxu0 0
        %1553 = vmatpush1.bf16.xpose.msra.mxu0 0
        %1554 = vmatprep.subr.bf16.mxu0 0
        %1555 = vmatpush1.bf16.xpose.msra.mxu0 0
        %1556 = vmatprep.subr.bf16.mxu0 0
        %1557 = vmatpush1.bf16.xpose.msra.mxu0 0
        %1558 = vmatprep.mubr.bf16.mxu0 0
        %1559 = vmatmul.mubr.bf16.gmra.mrb[0].mxu0 %v1521
        %v1560 = vpop.f32.mrb[0].mxu0
        %v1561 = vadd.f32 %v444, %v1560
        %v1562 = vpop.f32.mrb[0].mxu0
        %v1563 = vpop.f32.mrb[0].mxu0
        %v1564 = vadd.f32 %v445, %v1563
        %v1565 = vpop.f32.mrb[0].mxu0
        %1566 = vdwg.mxu0
        %1568 = vrot.lane.b32.xlu0 %v1461, 112
        %v1569 = vpop.permute.xlu0 %1568
        %1570 = vrot.lane.b32.xlu0 %v1461, 80
        %v1571 = vpop.permute.xlu0 %1570
        %v1573 = vsel %vm455, %v1569, 0
        %v1576 = vsel %vm455, %v1571, 0
        %1578 = vmatprep.subr.bf16.mxu0 0
        %1579 = vmatpush1.bf16.xpose.msra.mxu0 %v1576
        %1580 = vmatprep.subr.bf16.mxu0 0
        %1581 = vmatpush1.bf16.xpose.msra.mxu0 0
        %1582 = vmatprep.subr.bf16.mxu0 0
        %1583 = vmatpush1.bf16.xpose.msra.mxu0 0
        %1584 = vmatprep.subr.bf16.mxu0 0
        %1585 = vmatpush1.bf16.xpose.msra.mxu0 0
        %1586 = vmatprep.subr.bf16.mxu0 0
        %1587 = vmatpush1.bf16.xpose.msra.mxu0 0
        %1588 = vmatprep.subr.bf16.mxu0 0
        %1589 = vmatpush1.bf16.xpose.msra.mxu0 0
        %1590 = vmatprep.subr.bf16.mxu0 0
        %1591 = vmatpush1.bf16.xpose.msra.mxu0 0
        %1592 = vmatprep.subr.bf16.mxu0 0
        %1593 = vmatpush1.bf16.xpose.msra.mxu0 0
        %1594 = vmatprep.subr.bf16.mxu0 0
        %1595 = vmatpush1.bf16.xpose.msra.mxu0 0
        %1596 = vmatprep.subr.bf16.mxu0 0
        %1597 = vmatpush1.bf16.xpose.msra.mxu0 0
        %1598 = vmatprep.subr.bf16.mxu0 0
        %1599 = vmatpush1.bf16.xpose.msra.mxu0 0
        %1600 = vmatprep.subr.bf16.mxu0 0
        %1601 = vmatpush1.bf16.xpose.msra.mxu0 0
        %1602 = vmatprep.subr.bf16.mxu0 0
        %1603 = vmatpush1.bf16.xpose.msra.mxu0 0
        %1604 = vmatprep.subr.bf16.mxu0 0
        %1605 = vmatpush1.bf16.xpose.msra.mxu0 0
        %1606 = vmatprep.subr.bf16.mxu0 0
        %1607 = vmatpush1.bf16.xpose.msra.mxu0 0
        %1608 = vmatprep.subr.bf16.mxu0 0
        %1609 = vmatpush1.bf16.xpose.msra.mxu0 0
        %1610 = vmatprep.mubr.bf16.mxu0 0
        %1611 = vmatmul.mubr.bf16.gmra.mrb[0].mxu0 %v1573
        %v1612 = vpop.f32.mrb[0].mxu0
        %v1613 = vadd.f32 %v444, %v1612
        %v1614 = vpop.f32.mrb[0].mxu0
        %v1615 = vpop.f32.mrb[0].mxu0
        %v1616 = vadd.f32 %v445, %v1615
        %v1617 = vpop.f32.mrb[0].mxu0
        %1618 = vdwg.mxu0
        %1620 = vrot.lane.b32.xlu0 %v1462, 112
        %v1621 = vpop.permute.xlu0 %1620
        %1622 = vrot.lane.b32.xlu0 %v1462, 80
        %v1623 = vpop.permute.xlu0 %1622
        %v1625 = vsel %vm455, %v1621, 0
        %v1628 = vsel %vm455, %v1623, 0
        %1630 = vmatprep.subr.bf16.mxu0 0
        %1631 = vmatpush1.bf16.xpose.msra.mxu0 %v1628
        %1632 = vmatprep.subr.bf16.mxu0 0
        %1633 = vmatpush1.bf16.xpose.msra.mxu0 0
        %1634 = vmatprep.subr.bf16.mxu0 0
        %1635 = vmatpush1.bf16.xpose.msra.mxu0 0
        %1636 = vmatprep.subr.bf16.mxu0 0
        %1637 = vmatpush1.bf16.xpose.msra.mxu0 0
        %1638 = vmatprep.subr.bf16.mxu0 0
        %1639 = vmatpush1.bf16.xpose.msra.mxu0 0
        %1640 = vmatprep.subr.bf16.mxu0 0
        %1641 = vmatpush1.bf16.xpose.msra.mxu0 0
        %1642 = vmatprep.subr.bf16.mxu0 0
        %1643 = vmatpush1.bf16.xpose.msra.mxu0 0
        %1644 = vmatprep.subr.bf16.mxu0 0
        %1645 = vmatpush1.bf16.xpose.msra.mxu0 0
        %1646 = vmatprep.subr.bf16.mxu0 0
        %1647 = vmatpush1.bf16.xpose.msra.mxu0 0
        %1648 = vmatprep.subr.bf16.mxu0 0
        %1649 = vmatpush1.bf16.xpose.msra.mxu0 0
        %1650 = vmatprep.subr.bf16.mxu0 0
        %1651 = vmatpush1.bf16.xpose.msra.mxu0 0
        %1652 = vmatprep.subr.bf16.mxu0 0
        %1653 = vmatpush1.bf16.xpose.msra.mxu0 0
        %1654 = vmatprep.subr.bf16.mxu0 0
        %1655 = vmatpush1.bf16.xpose.msra.mxu0 0
        %1656 = vmatprep.subr.bf16.mxu0 0
        %1657 = vmatpush1.bf16.xpose.msra.mxu0 0
        %1658 = vmatprep.subr.bf16.mxu0 0
        %1659 = vmatpush1.bf16.xpose.msra.mxu0 0
        %1660 = vmatprep.subr.bf16.mxu0 0
        %1661 = vmatpush1.bf16.xpose.msra.mxu0 0
        %1662 = vmatprep.mubr.bf16.mxu0 0
        %1663 = vmatmul.mubr.bf16.gmra.mrb[0].mxu0 %v1625
        %v1664 = vpop.f32.mrb[0].mxu0
        %v1665 = vadd.f32 %v444, %v1664
        %v1666 = vpop.f32.mrb[0].mxu0
        %v1667 = vpop.f32.mrb[0].mxu0
        %v1668 = vadd.f32 %v445, %v1667
        %v1669 = vpop.f32.mrb[0].mxu0
        %1670 = vdwg.mxu0
        %v1671 = vsel %vm653, %v1509, -inf
        %1672 = vmax.xlane.f32.xlu0 %v1671
        %v1673 = vpop.xlane.xlu0 %1672
        %v1674 = vsel %vm653, %v1512, -inf
        %1675 = vmax.xlane.f32.xlu0 %v1674
        %v1676 = vpop.xlane.xlu0 %1675
        %v1677 = vsel %vm653, %v1561, -inf
        %1678 = vmax.xlane.f32.xlu0 %v1677
        %v1679 = vpop.xlane.xlu0 %1678
        %v1680 = vsel %vm653, %v1564, -inf
        %1681 = vmax.xlane.f32.xlu0 %v1680
        %v1682 = vpop.xlane.xlu0 %1681
        %v1683 = vsel %vm653, %v1613, -inf
        %1684 = vmax.xlane.f32.xlu0 %v1683
        %v1685 = vpop.xlane.xlu0 %1684
        %v1686 = vsel %vm653, %v1616, -inf
        %1687 = vmax.xlane.f32.xlu0 %v1686
        %v1688 = vpop.xlane.xlu0 %1687
        %v1689 = vsel %vm653, %v1665, -inf
        %1690 = vmax.xlane.f32.xlu0 %v1689
        %v1691 = vpop.xlane.xlu0 %1690
        %v1692 = vsel %vm653, %v1668, -inf
        %1693 = vmax.xlane.f32.xlu0 %v1692
        %v1694 = vpop.xlane.xlu0 %1693
        %v1695 = vsub.f32 %v1509, %v1673
        %v1696 = vsub.f32 %v1512, %v1676
        %v1697 = vsub.f32 %v1561, %v1679
        %v1698 = vsub.f32 %v1564, %v1682
        %v1699 = vsub.f32 %v1613, %v1685
        %v1700 = vsub.f32 %v1616, %v1688
        %v1701 = vsub.f32 %v1665, %v1691
        %v1702 = vsub.f32 %v1668, %v1694
        %v1703 = vmul.f32 %v1695, 1.442695
        %v1704 = vpow.pop %v1703
        %v1705 = vmul.f32 %v1696, 1.442695
        %v1706 = vpow.pop %v1705
        %v1707 = vmul.f32 %v1697, 1.442695
        %v1708 = vpow.pop %v1707
        %v1709 = vmul.f32 %v1698, 1.442695
        %v1710 = vpow.pop %v1709
        %v1711 = vmul.f32 %v1699, 1.442695
        %v1712 = vpow.pop %v1711
        %v1713 = vmul.f32 %v1700, 1.442695
        %v1714 = vpow.pop %v1713
        %v1715 = vmul.f32 %v1701, 1.442695
        %v1716 = vpow.pop %v1715
        %v1717 = vmul.f32 %v1702, 1.442695
        %v1718 = vpow.pop %v1717
        %v1719 = vsel %vm653, %v1704, 0.0
        %1720 = vadd.xlane.f32.xlu0 %v1719
        %v1721 = vpop.xlane.xlu0 %1720
        %v1722 = vsel %vm653, %v1706, 0.0
        %1723 = vadd.xlane.f32.xlu0 %v1722
        %v1724 = vpop.xlane.xlu0 %1723
        %v1725 = vsel %vm653, %v1708, 0.0
        %1726 = vadd.xlane.f32.xlu0 %v1725
        %v1727 = vpop.xlane.xlu0 %1726
        %v1728 = vsel %vm653, %v1710, 0.0
        %1729 = vadd.xlane.f32.xlu0 %v1728
        %v1730 = vpop.xlane.xlu0 %1729
        %v1731 = vsel %vm653, %v1712, 0.0
        %1732 = vadd.xlane.f32.xlu0 %v1731
        %v1733 = vpop.xlane.xlu0 %1732
        %v1734 = vsel %vm653, %v1714, 0.0
        %1735 = vadd.xlane.f32.xlu0 %v1734
        %v1736 = vpop.xlane.xlu0 %1735
        %v1737 = vsel %vm653, %v1716, 0.0
        %1738 = vadd.xlane.f32.xlu0 %v1737
        %v1739 = vpop.xlane.xlu0 %1738
        %v1740 = vsel %vm653, %v1718, 0.0
        %1741 = vadd.xlane.f32.xlu0 %v1740
        %v1742 = vpop.xlane.xlu0 %1741
        %v1743 = vrcp.pop %v1721
        %v1744 = vrcp.pop %v1724
        %v1745 = vrcp.pop %v1727
        %v1746 = vrcp.pop %v1730
        %v1747 = vrcp.pop %v1733
        %v1748 = vrcp.pop %v1736
        %v1749 = vrcp.pop %v1739
        %v1750 = vrcp.pop %v1742
        %v1751 = vmul.f32 %v1704, %v1743
        %v1752 = vmul.f32 %v1706, %v1744
        %v1753 = vmul.f32 %v1708, %v1745
        %v1754 = vmul.f32 %v1710, %v1746
        %v1755 = vmul.f32 %v1712, %v1747
        %v1756 = vmul.f32 %v1714, %v1748
        %v1757 = vmul.f32 %v1716, %v1749
        %v1758 = vmul.f32 %v1718, %v1750
        %v1759 = vpack.c.bf16 %v1752, %v1751
        %v1760 = vpack.c.bf16 %v1754, %v1753
        %v1761 = vpack.c.bf16 %v1756, %v1755
        %v1762 = vpack.c.bf16 %v1758, %v1757
        %1763 = vrot.lane.b32.xlu0 %v1459, 48
        %v1764 = vpop.permute.xlu0 %1763
        %v1767 = vsel %vm653, %v1759, 0
        %1769 = vmatprep.subr.bf16.mxu0 0
        %1770 = vmatpush1.bf16.msra.mxu0 %v1764
        %1771 = vmatprep.subr.bf16.mxu0 0
        %1772 = vmatpush1.bf16.msra.mxu0 0
        %1773 = vmatprep.subr.bf16.mxu0 0
        %1774 = vmatpush1.bf16.msra.mxu0 0
        %1775 = vmatprep.subr.bf16.mxu0 0
        %1776 = vmatpush1.bf16.msra.mxu0 0
        %1777 = vmatprep.subr.bf16.mxu0 0
        %1778 = vmatpush1.bf16.msra.mxu0 0
        %1779 = vmatprep.subr.bf16.mxu0 0
        %1780 = vmatpush1.bf16.msra.mxu0 0
        %1781 = vmatprep.subr.bf16.mxu0 0
        %1782 = vmatpush1.bf16.msra.mxu0 0
        %1783 = vmatprep.subr.bf16.mxu0 0
        %1784 = vmatpush1.bf16.msra.mxu0 0
        %1785 = vmatprep.subr.bf16.mxu0 0
        %1786 = vmatpush1.bf16.msra.mxu0 0
        %1787 = vmatprep.subr.bf16.mxu0 0
        %1788 = vmatpush1.bf16.msra.mxu0 0
        %1789 = vmatprep.subr.bf16.mxu0 0
        %1790 = vmatpush1.bf16.msra.mxu0 0
        %1791 = vmatprep.subr.bf16.mxu0 0
        %1792 = vmatpush1.bf16.msra.mxu0 0
        %1793 = vmatprep.subr.bf16.mxu0 0
        %1794 = vmatpush1.bf16.msra.mxu0 0
        %1795 = vmatprep.subr.bf16.mxu0 0
        %1796 = vmatpush1.bf16.msra.mxu0 0
        %1797 = vmatprep.subr.bf16.mxu0 0
        %1798 = vmatpush1.bf16.msra.mxu0 0
        %1799 = vmatprep.subr.bf16.mxu0 0
        %1800 = vmatpush1.bf16.msra.mxu0 0
        %1801 = vmatprep.mubr.bf16.mxu0 0
        %1802 = vmatmul.mubr.bf16.gmra.mrb[0].mxu0 %v1767
        %v1803 = vpop.f32.mrb[0].mxu0
        %v1804 = vadd.f32 0.0, %v1803
        %v1805 = vpop.f32.mrb[0].mxu0
        %v1806 = vpop.f32.mrb[0].mxu0
        %v1807 = vadd.f32 0.0, %v1806
        %v1808 = vpop.f32.mrb[0].mxu0
        %1809 = vdwg.mxu0
        %1810 = vrot.lane.b32.xlu0 %v1460, 48
        %v1811 = vpop.permute.xlu0 %1810
        %v1814 = vsel %vm653, %v1760, 0
        %1816 = vmatprep.subr.bf16.mxu0 0
        %1817 = vmatpush1.bf16.msra.mxu0 %v1811
        %1818 = vmatprep.subr.bf16.mxu0 0
        %1819 = vmatpush1.bf16.msra.mxu0 0
        %1820 = vmatprep.subr.bf16.mxu0 0
        %1821 = vmatpush1.bf16.msra.mxu0 0
        %1822 = vmatprep.subr.bf16.mxu0 0
        %1823 = vmatpush1.bf16.msra.mxu0 0
        %1824 = vmatprep.subr.bf16.mxu0 0
        %1825 = vmatpush1.bf16.msra.mxu0 0
        %1826 = vmatprep.subr.bf16.mxu0 0
        %1827 = vmatpush1.bf16.msra.mxu0 0
        %1828 = vmatprep.subr.bf16.mxu0 0
        %1829 = vmatpush1.bf16.msra.mxu0 0
        %1830 = vmatprep.subr.bf16.mxu0 0
        %1831 = vmatpush1.bf16.msra.mxu0 0
        %1832 = vmatprep.subr.bf16.mxu0 0
        %1833 = vmatpush1.bf16.msra.mxu0 0
        %1834 = vmatprep.subr.bf16.mxu0 0
        %1835 = vmatpush1.bf16.msra.mxu0 0
        %1836 = vmatprep.subr.bf16.mxu0 0
        %1837 = vmatpush1.bf16.msra.mxu0 0
        %1838 = vmatprep.subr.bf16.mxu0 0
        %1839 = vmatpush1.bf16.msra.mxu0 0
        %1840 = vmatprep.subr.bf16.mxu0 0
        %1841 = vmatpush1.bf16.msra.mxu0 0
        %1842 = vmatprep.subr.bf16.mxu0 0
        %1843 = vmatpush1.bf16.msra.mxu0 0
        %1844 = vmatprep.subr.bf16.mxu0 0
        %1845 = vmatpush1.bf16.msra.mxu0 0
        %1846 = vmatprep.subr.bf16.mxu0 0
        %1847 = vmatpush1.bf16.msra.mxu0 0
        %1848 = vmatprep.mubr.bf16.mxu0 0
        %1849 = vmatmul.mubr.bf16.gmra.mrb[0].mxu0 %v1814
        %v1850 = vpop.f32.mrb[0].mxu0
        %v1851 = vadd.f32 0.0, %v1850
        %v1852 = vpop.f32.mrb[0].mxu0
        %v1853 = vpop.f32.mrb[0].mxu0
        %v1854 = vadd.f32 0.0, %v1853
        %v1855 = vpop.f32.mrb[0].mxu0
        %1856 = vdwg.mxu0
        %1857 = vrot.lane.b32.xlu0 %v1461, 48
        %v1858 = vpop.permute.xlu0 %1857
        %v1861 = vsel %vm653, %v1761, 0
        %1863 = vmatprep.subr.bf16.mxu0 0
        %1864 = vmatpush1.bf16.msra.mxu0 %v1858
        %1865 = vmatprep.subr.bf16.mxu0 0
        %1866 = vmatpush1.bf16.msra.mxu0 0
        %1867 = vmatprep.subr.bf16.mxu0 0
        %1868 = vmatpush1.bf16.msra.mxu0 0
        %1869 = vmatprep.subr.bf16.mxu0 0
        %1870 = vmatpush1.bf16.msra.mxu0 0
        %1871 = vmatprep.subr.bf16.mxu0 0
        %1872 = vmatpush1.bf16.msra.mxu0 0
        %1873 = vmatprep.subr.bf16.mxu0 0
        %1874 = vmatpush1.bf16.msra.mxu0 0
        %1875 = vmatprep.subr.bf16.mxu0 0
        %1876 = vmatpush1.bf16.msra.mxu0 0
        %1877 = vmatprep.subr.bf16.mxu0 0
        %1878 = vmatpush1.bf16.msra.mxu0 0
        %1879 = vmatprep.subr.bf16.mxu0 0
        %1880 = vmatpush1.bf16.msra.mxu0 0
        %1881 = vmatprep.subr.bf16.mxu0 0
        %1882 = vmatpush1.bf16.msra.mxu0 0
        %1883 = vmatprep.subr.bf16.mxu0 0
        %1884 = vmatpush1.bf16.msra.mxu0 0
        %1885 = vmatprep.subr.bf16.mxu0 0
        %1886 = vmatpush1.bf16.msra.mxu0 0
        %1887 = vmatprep.subr.bf16.mxu0 0
        %1888 = vmatpush1.bf16.msra.mxu0 0
        %1889 = vmatprep.subr.bf16.mxu0 0
        %1890 = vmatpush1.bf16.msra.mxu0 0
        %1891 = vmatprep.subr.bf16.mxu0 0
        %1892 = vmatpush1.bf16.msra.mxu0 0
        %1893 = vmatprep.subr.bf16.mxu0 0
        %1894 = vmatpush1.bf16.msra.mxu0 0
        %1895 = vmatprep.mubr.bf16.mxu0 0
        %1896 = vmatmul.mubr.bf16.gmra.mrb[0].mxu0 %v1861
        %v1897 = vpop.f32.mrb[0].mxu0
        %v1898 = vadd.f32 0.0, %v1897
        %v1899 = vpop.f32.mrb[0].mxu0
        %v1900 = vpop.f32.mrb[0].mxu0
        %v1901 = vadd.f32 0.0, %v1900
        %v1902 = vpop.f32.mrb[0].mxu0
        %1903 = vdwg.mxu0
        %1904 = vrot.lane.b32.xlu0 %v1462, 48
        %v1905 = vpop.permute.xlu0 %1904
        %v1908 = vsel %vm653, %v1762, 0
        %1910 = vmatprep.subr.bf16.mxu0 0
        %1911 = vmatpush1.bf16.msra.mxu0 %v1905
        %1912 = vmatprep.subr.bf16.mxu0 0
        %1913 = vmatpush1.bf16.msra.mxu0 0
        %1914 = vmatprep.subr.bf16.mxu0 0
        %1915 = vmatpush1.bf16.msra.mxu0 0
        %1916 = vmatprep.subr.bf16.mxu0 0
        %1917 = vmatpush1.bf16.msra.mxu0 0
        %1918 = vmatprep.subr.bf16.mxu0 0
        %1919 = vmatpush1.bf16.msra.mxu0 0
        %1920 = vmatprep.subr.bf16.mxu0 0
        %1921 = vmatpush1.bf16.msra.mxu0 0
        %1922 = vmatprep.subr.bf16.mxu0 0
        %1923 = vmatpush1.bf16.msra.mxu0 0
        %1924 = vmatprep.subr.bf16.mxu0 0
        %1925 = vmatpush1.bf16.msra.mxu0 0
        %1926 = vmatprep.subr.bf16.mxu0 0
        %1927 = vmatpush1.bf16.msra.mxu0 0
        %1928 = vmatprep.subr.bf16.mxu0 0
        %1929 = vmatpush1.bf16.msra.mxu0 0
        %1930 = vmatprep.subr.bf16.mxu0 0
        %1931 = vmatpush1.bf16.msra.mxu0 0
        %1932 = vmatprep.subr.bf16.mxu0 0
        %1933 = vmatpush1.bf16.msra.mxu0 0
        %1934 = vmatprep.subr.bf16.mxu0 0
        %1935 = vmatpush1.bf16.msra.mxu0 0
        %1936 = vmatprep.subr.bf16.mxu0 0
        %1937 = vmatpush1.bf16.msra.mxu0 0
        %1938 = vmatprep.subr.bf16.mxu0 0
        %1939 = vmatpush1.bf16.msra.mxu0 0
        %1940 = vmatprep.subr.bf16.mxu0 0
        %1941 = vmatpush1.bf16.msra.mxu0 0
        %1942 = vmatprep.mubr.bf16.mxu0 0
        %1943 = vmatmul.mubr.bf16.gmra.mrb[0].mxu0 %v1908
        %v1944 = vpop.f32.mrb[0].mxu0
        %v1945 = vadd.f32 0.0, %v1944
        %v1946 = vpop.f32.mrb[0].mxu0
        %v1947 = vpop.f32.mrb[0].mxu0
        %v1948 = vadd.f32 0.0, %v1947
        %v1949 = vpop.f32.mrb[0].mxu0
        %1950 = vdwg.mxu0
        %v1951 = vpack.c.bf16 %v1807, %v1804
        %v1952 = vpack.c.bf16 %v1854, %v1851
        %v1953 = vpack.c.bf16 %v1901, %v1898
        %v1954 = vpack.c.bf16 %v1948, %v1945
        %1959 = vrot.lane.b32.xlu0 %v1951, 16
        %v1960 = vpop.permute.xlu0 %1959
        %1961 = vrot.lane.b32.xlu0 %v1952, 16
        %v1962 = vpop.permute.xlu0 %1961
        %1963 = vrot.lane.b32.xlu0 %v1953, 16
        %v1964 = vpop.permute.xlu0 %1963
        %1965 = vrot.lane.b32.xlu0 %v1954, 16
        %v1966 = vpop.permute.xlu0 %1965
        %vm1971 = vcmask 195712
        %1972 = vst.msk [vmem:[#allocation3] sm:$0xff] %vm1971, %v1960
        %1973 = vst.msk [vmem:[#allocation3 + $0x8] sm:$0xff] %vm1971, %v1962
        %1974 = vst.msk [vmem:[#allocation3 + $0x10] sm:$0xff] %vm1971, %v1964
        %1975 = vst.msk [vmem:[#allocation3 + $0x18] sm:$0xff] %vm1971, %v1966
        %v1976 = vld [vmem:[#allocation2] sm:$0xff]
        %v1977 = vld [vmem:[#allocation2 + $0x8] sm:$0xff]
        %v1978 = vld [vmem:[#allocation2 + $0x10] sm:$0xff]
        %v1979 = vld [vmem:[#allocation2 + $0x18] sm:$0xff]
        %1981 = vrot.lane.b32.xlu0 %v1976, 104
        %v1982 = vpop.permute.xlu0 %1981
        %1983 = vrot.lane.b32.xlu0 %v1976, 72
        %v1984 = vpop.permute.xlu0 %1983
        %v1986 = vsel %vm455, %v1982, 0
        %v1989 = vsel %vm455, %v1984, 0
        %1991 = vmatprep.subr.bf16.mxu0 0
        %1992 = vmatpush1.bf16.xpose.msra.mxu0 %v1989
        %1993 = vmatprep.subr.bf16.mxu0 0
        %1994 = vmatpush1.bf16.xpose.msra.mxu0 0
        %1995 = vmatprep.subr.bf16.mxu0 0
        %1996 = vmatpush1.bf16.xpose.msra.mxu0 0
        %1997 = vmatprep.subr.bf16.mxu0 0
        %1998 = vmatpush1.bf16.xpose.msra.mxu0 0
        %1999 = vmatprep.subr.bf16.mxu0 0
        %2000 = vmatpush1.bf16.xpose.msra.mxu0 0
        %2001 = vmatprep.subr.bf16.mxu0 0
        %2002 = vmatpush1.bf16.xpose.msra.mxu0 0
        %2003 = vmatprep.subr.bf16.mxu0 0
        %2004 = vmatpush1.bf16.xpose.msra.mxu0 0
        %2005 = vmatprep.subr.bf16.mxu0 0
        %2006 = vmatpush1.bf16.xpose.msra.mxu0 0
        %2007 = vmatprep.subr.bf16.mxu0 0
        %2008 = vmatpush1.bf16.xpose.msra.mxu0 0
        %2009 = vmatprep.subr.bf16.mxu0 0
        %2010 = vmatpush1.bf16.xpose.msra.mxu0 0
        %2011 = vmatprep.subr.bf16.mxu0 0
        %2012 = vmatpush1.bf16.xpose.msra.mxu0 0
        %2013 = vmatprep.subr.bf16.mxu0 0
        %2014 = vmatpush1.bf16.xpose.msra.mxu0 0
        %2015 = vmatprep.subr.bf16.mxu0 0
        %2016 = vmatpush1.bf16.xpose.msra.mxu0 0
        %2017 = vmatprep.subr.bf16.mxu0 0
        %2018 = vmatpush1.bf16.xpose.msra.mxu0 0
        %2019 = vmatprep.subr.bf16.mxu0 0
        %2020 = vmatpush1.bf16.xpose.msra.mxu0 0
        %2021 = vmatprep.subr.bf16.mxu0 0
        %2022 = vmatpush1.bf16.xpose.msra.mxu0 0
        %2023 = vmatprep.mubr.bf16.mxu0 0
        %2024 = vmatmul.mubr.bf16.gmra.mrb[0].mxu0 %v1986
        %v2025 = vpop.f32.mrb[0].mxu0
        %v2026 = vadd.f32 %v446, %v2025
        %v2027 = vpop.f32.mrb[0].mxu0
        %v2028 = vpop.f32.mrb[0].mxu0
        %v2029 = vadd.f32 %v447, %v2028
        %v2030 = vpop.f32.mrb[0].mxu0
        %2031 = vdwg.mxu0
        %2033 = vrot.lane.b32.xlu0 %v1977, 104
        %v2034 = vpop.permute.xlu0 %2033
        %2035 = vrot.lane.b32.xlu0 %v1977, 72
        %v2036 = vpop.permute.xlu0 %2035
        %v2038 = vsel %vm455, %v2034, 0
        %v2041 = vsel %vm455, %v2036, 0
        %2043 = vmatprep.subr.bf16.mxu0 0
        %2044 = vmatpush1.bf16.xpose.msra.mxu0 %v2041
        %2045 = vmatprep.subr.bf16.mxu0 0
        %2046 = vmatpush1.bf16.xpose.msra.mxu0 0
        %2047 = vmatprep.subr.bf16.mxu0 0
        %2048 = vmatpush1.bf16.xpose.msra.mxu0 0
        %2049 = vmatprep.subr.bf16.mxu0 0
        %2050 = vmatpush1.bf16.xpose.msra.mxu0 0
        %2051 = vmatprep.subr.bf16.mxu0 0
        %2052 = vmatpush1.bf16.xpose.msra.mxu0 0
        %2053 = vmatprep.subr.bf16.mxu0 0
        %2054 = vmatpush1.bf16.xpose.msra.mxu0 0
        %2055 = vmatprep.subr.bf16.mxu0 0
        %2056 = vmatpush1.bf16.xpose.msra.mxu0 0
        %2057 = vmatprep.subr.bf16.mxu0 0
        %2058 = vmatpush1.bf16.xpose.msra.mxu0 0
        %2059 = vmatprep.subr.bf16.mxu0 0
        %2060 = vmatpush1.bf16.xpose.msra.mxu0 0
        %2061 = vmatprep.subr.bf16.mxu0 0
        %2062 = vmatpush1.bf16.xpose.msra.mxu0 0
        %2063 = vmatprep.subr.bf16.mxu0 0
        %2064 = vmatpush1.bf16.xpose.msra.mxu0 0
        %2065 = vmatprep.subr.bf16.mxu0 0
        %2066 = vmatpush1.bf16.xpose.msra.mxu0 0
        %2067 = vmatprep.subr.bf16.mxu0 0
        %2068 = vmatpush1.bf16.xpose.msra.mxu0 0
        %2069 = vmatprep.subr.bf16.mxu0 0
        %2070 = vmatpush1.bf16.xpose.msra.mxu0 0
        %2071 = vmatprep.subr.bf16.mxu0 0
        %2072 = vmatpush1.bf16.xpose.msra.mxu0 0
        %2073 = vmatprep.subr.bf16.mxu0 0
        %2074 = vmatpush1.bf16.xpose.msra.mxu0 0
        %2075 = vmatprep.mubr.bf16.mxu0 0
        %2076 = vmatmul.mubr.bf16.gmra.mrb[0].mxu0 %v2038
        %v2077 = vpop.f32.mrb[0].mxu0
        %v2078 = vadd.f32 %v446, %v2077
        %v2079 = vpop.f32.mrb[0].mxu0
        %v2080 = vpop.f32.mrb[0].mxu0
        %v2081 = vadd.f32 %v447, %v2080
        %v2082 = vpop.f32.mrb[0].mxu0
        %2083 = vdwg.mxu0
        %2085 = vrot.lane.b32.xlu0 %v1978, 104
        %v2086 = vpop.permute.xlu0 %2085
        %2087 = vrot.lane.b32.xlu0 %v1978, 72
        %v2088 = vpop.permute.xlu0 %2087
        %v2090 = vsel %vm455, %v2086, 0
        %v2093 = vsel %vm455, %v2088, 0
        %2095 = vmatprep.subr.bf16.mxu0 0
        %2096 = vmatpush1.bf16.xpose.msra.mxu0 %v2093
        %2097 = vmatprep.subr.bf16.mxu0 0
        %2098 = vmatpush1.bf16.xpose.msra.mxu0 0
        %2099 = vmatprep.subr.bf16.mxu0 0
        %2100 = vmatpush1.bf16.xpose.msra.mxu0 0
        %2101 = vmatprep.subr.bf16.mxu0 0
        %2102 = vmatpush1.bf16.xpose.msra.mxu0 0
        %2103 = vmatprep.subr.bf16.mxu0 0
        %2104 = vmatpush1.bf16.xpose.msra.mxu0 0
        %2105 = vmatprep.subr.bf16.mxu0 0
        %2106 = vmatpush1.bf16.xpose.msra.mxu0 0
        %2107 = vmatprep.subr.bf16.mxu0 0
        %2108 = vmatpush1.bf16.xpose.msra.mxu0 0
        %2109 = vmatprep.subr.bf16.mxu0 0
        %2110 = vmatpush1.bf16.xpose.msra.mxu0 0
        %2111 = vmatprep.subr.bf16.mxu0 0
        %2112 = vmatpush1.bf16.xpose.msra.mxu0 0
        %2113 = vmatprep.subr.bf16.mxu0 0
        %2114 = vmatpush1.bf16.xpose.msra.mxu0 0
        %2115 = vmatprep.subr.bf16.mxu0 0
        %2116 = vmatpush1.bf16.xpose.msra.mxu0 0
        %2117 = vmatprep.subr.bf16.mxu0 0
        %2118 = vmatpush1.bf16.xpose.msra.mxu0 0
        %2119 = vmatprep.subr.bf16.mxu0 0
        %2120 = vmatpush1.bf16.xpose.msra.mxu0 0
        %2121 = vmatprep.subr.bf16.mxu0 0
        %2122 = vmatpush1.bf16.xpose.msra.mxu0 0
        %2123 = vmatprep.subr.bf16.mxu0 0
        %2124 = vmatpush1.bf16.xpose.msra.mxu0 0
        %2125 = vmatprep.subr.bf16.mxu0 0
        %2126 = vmatpush1.bf16.xpose.msra.mxu0 0
        %2127 = vmatprep.mubr.bf16.mxu0 0
        %2128 = vmatmul.mubr.bf16.gmra.mrb[0].mxu0 %v2090
        %v2129 = vpop.f32.mrb[0].mxu0
        %v2130 = vadd.f32 %v446, %v2129
        %v2131 = vpop.f32.mrb[0].mxu0
        %v2132 = vpop.f32.mrb[0].mxu0
        %v2133 = vadd.f32 %v447, %v2132
        %v2134 = vpop.f32.mrb[0].mxu0
        %2135 = vdwg.mxu0
        %2137 = vrot.lane.b32.xlu0 %v1979, 104
        %v2138 = vpop.permute.xlu0 %2137
        %2139 = vrot.lane.b32.xlu0 %v1979, 72
        %v2140 = vpop.permute.xlu0 %2139
        %v2142 = vsel %vm455, %v2138, 0
        %v2145 = vsel %vm455, %v2140, 0
        %2147 = vmatprep.subr.bf16.mxu0 0
        %2148 = vmatpush1.bf16.xpose.msra.mxu0 %v2145
        %2149 = vmatprep.subr.bf16.mxu0 0
        %2150 = vmatpush1.bf16.xpose.msra.mxu0 0
        %2151 = vmatprep.subr.bf16.mxu0 0
        %2152 = vmatpush1.bf16.xpose.msra.mxu0 0
        %2153 = vmatprep.subr.bf16.mxu0 0
        %2154 = vmatpush1.bf16.xpose.msra.mxu0 0
        %2155 = vmatprep.subr.bf16.mxu0 0
        %2156 = vmatpush1.bf16.xpose.msra.mxu0 0
        %2157 = vmatprep.subr.bf16.mxu0 0
        %2158 = vmatpush1.bf16.xpose.msra.mxu0 0
        %2159 = vmatprep.subr.bf16.mxu0 0
        %2160 = vmatpush1.bf16.xpose.msra.mxu0 0
        %2161 = vmatprep.subr.bf16.mxu0 0
        %2162 = vmatpush1.bf16.xpose.msra.mxu0 0
        %2163 = vmatprep.subr.bf16.mxu0 0
        %2164 = vmatpush1.bf16.xpose.msra.mxu0 0
        %2165 = vmatprep.subr.bf16.mxu0 0
        %2166 = vmatpush1.bf16.xpose.msra.mxu0 0
        %2167 = vmatprep.subr.bf16.mxu0 0
        %2168 = vmatpush1.bf16.xpose.msra.mxu0 0
        %2169 = vmatprep.subr.bf16.mxu0 0
        %2170 = vmatpush1.bf16.xpose.msra.mxu0 0
        %2171 = vmatprep.subr.bf16.mxu0 0
        %2172 = vmatpush1.bf16.xpose.msra.mxu0 0
        %2173 = vmatprep.subr.bf16.mxu0 0
        %2174 = vmatpush1.bf16.xpose.msra.mxu0 0
        %2175 = vmatprep.subr.bf16.mxu0 0
        %2176 = vmatpush1.bf16.xpose.msra.mxu0 0
        %2177 = vmatprep.subr.bf16.mxu0 0
        %2178 = vmatpush1.bf16.xpose.msra.mxu0 0
        %2179 = vmatprep.mubr.bf16.mxu0 0
        %2180 = vmatmul.mubr.bf16.gmra.mrb[0].mxu0 %v2142
        %v2181 = vpop.f32.mrb[0].mxu0
        %v2182 = vadd.f32 %v446, %v2181
        %v2183 = vpop.f32.mrb[0].mxu0
        %v2184 = vpop.f32.mrb[0].mxu0
        %v2185 = vadd.f32 %v447, %v2184
        %v2186 = vpop.f32.mrb[0].mxu0
        %2187 = vdwg.mxu0
        %v2188 = vsel %vm653, %v2026, -inf
        %2189 = vmax.xlane.f32.xlu0 %v2188
        %v2190 = vpop.xlane.xlu0 %2189
        %v2191 = vsel %vm653, %v2029, -inf
        %2192 = vmax.xlane.f32.xlu0 %v2191
        %v2193 = vpop.xlane.xlu0 %2192
        %v2194 = vsel %vm653, %v2078, -inf
        %2195 = vmax.xlane.f32.xlu0 %v2194
        %v2196 = vpop.xlane.xlu0 %2195
        %v2197 = vsel %vm653, %v2081, -inf
        %2198 = vmax.xlane.f32.xlu0 %v2197
        %v2199 = vpop.xlane.xlu0 %2198
        %v2200 = vsel %vm653, %v2130, -inf
        %2201 = vmax.xlane.f32.xlu0 %v2200
        %v2202 = vpop.xlane.xlu0 %2201
        %v2203 = vsel %vm653, %v2133, -inf
        %2204 = vmax.xlane.f32.xlu0 %v2203
        %v2205 = vpop.xlane.xlu0 %2204
        %v2206 = vsel %vm653, %v2182, -inf
        %2207 = vmax.xlane.f32.xlu0 %v2206
        %v2208 = vpop.xlane.xlu0 %2207
        %v2209 = vsel %vm653, %v2185, -inf
        %2210 = vmax.xlane.f32.xlu0 %v2209
        %v2211 = vpop.xlane.xlu0 %2210
        %v2212 = vsub.f32 %v2026, %v2190
        %v2213 = vsub.f32 %v2029, %v2193
        %v2214 = vsub.f32 %v2078, %v2196
        %v2215 = vsub.f32 %v2081, %v2199
        %v2216 = vsub.f32 %v2130, %v2202
        %v2217 = vsub.f32 %v2133, %v2205
        %v2218 = vsub.f32 %v2182, %v2208
        %v2219 = vsub.f32 %v2185, %v2211
        %v2220 = vmul.f32 %v2212, 1.442695
        %v2221 = vpow.pop %v2220
        %v2222 = vmul.f32 %v2213, 1.442695
        %v2223 = vpow.pop %v2222
        %v2224 = vmul.f32 %v2214, 1.442695
        %v2225 = vpow.pop %v2224
        %v2226 = vmul.f32 %v2215, 1.442695
        %v2227 = vpow.pop %v2226
        %v2228 = vmul.f32 %v2216, 1.442695
        %v2229 = vpow.pop %v2228
        %v2230 = vmul.f32 %v2217, 1.442695
        %v2231 = vpow.pop %v2230
        %v2232 = vmul.f32 %v2218, 1.442695
        %v2233 = vpow.pop %v2232
        %v2234 = vmul.f32 %v2219, 1.442695
        %v2235 = vpow.pop %v2234
        %v2236 = vsel %vm653, %v2221, 0.0
        %2237 = vadd.xlane.f32.xlu0 %v2236
        %v2238 = vpop.xlane.xlu0 %2237
        %v2239 = vsel %vm653, %v2223, 0.0
        %2240 = vadd.xlane.f32.xlu0 %v2239
        %v2241 = vpop.xlane.xlu0 %2240
        %v2242 = vsel %vm653, %v2225, 0.0
        %2243 = vadd.xlane.f32.xlu0 %v2242
        %v2244 = vpop.xlane.xlu0 %2243
        %v2245 = vsel %vm653, %v2227, 0.0
        %2246 = vadd.xlane.f32.xlu0 %v2245
        %v2247 = vpop.xlane.xlu0 %2246
        %v2248 = vsel %vm653, %v2229, 0.0
        %2249 = vadd.xlane.f32.xlu0 %v2248
        %v2250 = vpop.xlane.xlu0 %2249
        %v2251 = vsel %vm653, %v2231, 0.0
        %2252 = vadd.xlane.f32.xlu0 %v2251
        %v2253 = vpop.xlane.xlu0 %2252
        %v2254 = vsel %vm653, %v2233, 0.0
        %2255 = vadd.xlane.f32.xlu0 %v2254
        %v2256 = vpop.xlane.xlu0 %2255
        %v2257 = vsel %vm653, %v2235, 0.0
        %2258 = vadd.xlane.f32.xlu0 %v2257
        %v2259 = vpop.xlane.xlu0 %2258
        %v2260 = vrcp.pop %v2238
        %v2261 = vrcp.pop %v2241
        %v2262 = vrcp.pop %v2244
        %v2263 = vrcp.pop %v2247
        %v2264 = vrcp.pop %v2250
        %v2265 = vrcp.pop %v2253
        %v2266 = vrcp.pop %v2256
        %v2267 = vrcp.pop %v2259
        %v2268 = vmul.f32 %v2221, %v2260
        %v2269 = vmul.f32 %v2223, %v2261
        %v2270 = vmul.f32 %v2225, %v2262
        %v2271 = vmul.f32 %v2227, %v2263
        %v2272 = vmul.f32 %v2229, %v2264
        %v2273 = vmul.f32 %v2231, %v2265
        %v2274 = vmul.f32 %v2233, %v2266
        %v2275 = vmul.f32 %v2235, %v2267
        %v2276 = vpack.c.bf16 %v2269, %v2268
        %v2277 = vpack.c.bf16 %v2271, %v2270
        %v2278 = vpack.c.bf16 %v2273, %v2272
        %v2279 = vpack.c.bf16 %v2275, %v2274
        %2280 = vrot.lane.b32.xlu0 %v1976, 40
        %v2281 = vpop.permute.xlu0 %2280
        %v2284 = vsel %vm653, %v2276, 0
        %2286 = vmatprep.subr.bf16.mxu0 0
        %2287 = vmatpush1.bf16.msra.mxu0 %v2281
        %2288 = vmatprep.subr.bf16.mxu0 0
        %2289 = vmatpush1.bf16.msra.mxu0 0
        %2290 = vmatprep.subr.bf16.mxu0 0
        %2291 = vmatpush1.bf16.msra.mxu0 0
        %2292 = vmatprep.subr.bf16.mxu0 0
        %2293 = vmatpush1.bf16.msra.mxu0 0
        %2294 = vmatprep.subr.bf16.mxu0 0
        %2295 = vmatpush1.bf16.msra.mxu0 0
        %2296 = vmatprep.subr.bf16.mxu0 0
        %2297 = vmatpush1.bf16.msra.mxu0 0
        %2298 = vmatprep.subr.bf16.mxu0 0
        %2299 = vmatpush1.bf16.msra.mxu0 0
        %2300 = vmatprep.subr.bf16.mxu0 0
        %2301 = vmatpush1.bf16.msra.mxu0 0
        %2302 = vmatprep.subr.bf16.mxu0 0
        %2303 = vmatpush1.bf16.msra.mxu0 0
        %2304 = vmatprep.subr.bf16.mxu0 0
        %2305 = vmatpush1.bf16.msra.mxu0 0
        %2306 = vmatprep.subr.bf16.mxu0 0
        %2307 = vmatpush1.bf16.msra.mxu0 0
        %2308 = vmatprep.subr.bf16.mxu0 0
        %2309 = vmatpush1.bf16.msra.mxu0 0
        %2310 = vmatprep.subr.bf16.mxu0 0
        %2311 = vmatpush1.bf16.msra.mxu0 0
        %2312 = vmatprep.subr.bf16.mxu0 0
        %2313 = vmatpush1.bf16.msra.mxu0 0
        %2314 = vmatprep.subr.bf16.mxu0 0
        %2315 = vmatpush1.bf16.msra.mxu0 0
        %2316 = vmatprep.subr.bf16.mxu0 0
        %2317 = vmatpush1.bf16.msra.mxu0 0
        %2318 = vmatprep.mubr.bf16.mxu0 0
        %2319 = vmatmul.mubr.bf16.gmra.mrb[0].mxu0 %v2284
        %v2320 = vpop.f32.mrb[0].mxu0
        %v2321 = vadd.f32 0.0, %v2320
        %v2322 = vpop.f32.mrb[0].mxu0
        %v2323 = vpop.f32.mrb[0].mxu0
        %v2324 = vadd.f32 0.0, %v2323
        %v2325 = vpop.f32.mrb[0].mxu0
        %2326 = vdwg.mxu0
        %2327 = vrot.lane.b32.xlu0 %v1977, 40
        %v2328 = vpop.permute.xlu0 %2327
        %v2331 = vsel %vm653, %v2277, 0
        %2333 = vmatprep.subr.bf16.mxu0 0
        %2334 = vmatpush1.bf16.msra.mxu0 %v2328
        %2335 = vmatprep.subr.bf16.mxu0 0
        %2336 = vmatpush1.bf16.msra.mxu0 0
        %2337 = vmatprep.subr.bf16.mxu0 0
        %2338 = vmatpush1.bf16.msra.mxu0 0
        %2339 = vmatprep.subr.bf16.mxu0 0
        %2340 = vmatpush1.bf16.msra.mxu0 0
        %2341 = vmatprep.subr.bf16.mxu0 0
        %2342 = vmatpush1.bf16.msra.mxu0 0
        %2343 = vmatprep.subr.bf16.mxu0 0
        %2344 = vmatpush1.bf16.msra.mxu0 0
        %2345 = vmatprep.subr.bf16.mxu0 0
        %2346 = vmatpush1.bf16.msra.mxu0 0
        %2347 = vmatprep.subr.bf16.mxu0 0
        %2348 = vmatpush1.bf16.msra.mxu0 0
        %2349 = vmatprep.subr.bf16.mxu0 0
        %2350 = vmatpush1.bf16.msra.mxu0 0
        %2351 = vmatprep.subr.bf16.mxu0 0
        %2352 = vmatpush1.bf16.msra.mxu0 0
        %2353 = vmatprep.subr.bf16.mxu0 0
        %2354 = vmatpush1.bf16.msra.mxu0 0
        %2355 = vmatprep.subr.bf16.mxu0 0
        %2356 = vmatpush1.bf16.msra.mxu0 0
        %2357 = vmatprep.subr.bf16.mxu0 0
        %2358 = vmatpush1.bf16.msra.mxu0 0
        %2359 = vmatprep.subr.bf16.mxu0 0
        %2360 = vmatpush1.bf16.msra.mxu0 0
        %2361 = vmatprep.subr.bf16.mxu0 0
        %2362 = vmatpush1.bf16.msra.mxu0 0
        %2363 = vmatprep.subr.bf16.mxu0 0
        %2364 = vmatpush1.bf16.msra.mxu0 0
        %2365 = vmatprep.mubr.bf16.mxu0 0
        %2366 = vmatmul.mubr.bf16.gmra.mrb[0].mxu0 %v2331
        %v2367 = vpop.f32.mrb[0].mxu0
        %v2368 = vadd.f32 0.0, %v2367
        %v2369 = vpop.f32.mrb[0].mxu0
        %v2370 = vpop.f32.mrb[0].mxu0
        %v2371 = vadd.f32 0.0, %v2370
        %v2372 = vpop.f32.mrb[0].mxu0
        %2373 = vdwg.mxu0
        %2374 = vrot.lane.b32.xlu0 %v1978, 40
        %v2375 = vpop.permute.xlu0 %2374
        %v2378 = vsel %vm653, %v2278, 0
        %2380 = vmatprep.subr.bf16.mxu0 0
        %2381 = vmatpush1.bf16.msra.mxu0 %v2375
        %2382 = vmatprep.subr.bf16.mxu0 0
        %2383 = vmatpush1.bf16.msra.mxu0 0
        %2384 = vmatprep.subr.bf16.mxu0 0
        %2385 = vmatpush1.bf16.msra.mxu0 0
        %2386 = vmatprep.subr.bf16.mxu0 0
        %2387 = vmatpush1.bf16.msra.mxu0 0
        %2388 = vmatprep.subr.bf16.mxu0 0
        %2389 = vmatpush1.bf16.msra.mxu0 0
        %2390 = vmatprep.subr.bf16.mxu0 0
        %2391 = vmatpush1.bf16.msra.mxu0 0
        %2392 = vmatprep.subr.bf16.mxu0 0
        %2393 = vmatpush1.bf16.msra.mxu0 0
        %2394 = vmatprep.subr.bf16.mxu0 0
        %2395 = vmatpush1.bf16.msra.mxu0 0
        %2396 = vmatprep.subr.bf16.mxu0 0
        %2397 = vmatpush1.bf16.msra.mxu0 0
        %2398 = vmatprep.subr.bf16.mxu0 0
        %2399 = vmatpush1.bf16.msra.mxu0 0
        %2400 = vmatprep.subr.bf16.mxu0 0
        %2401 = vmatpush1.bf16.msra.mxu0 0
        %2402 = vmatprep.subr.bf16.mxu0 0
        %2403 = vmatpush1.bf16.msra.mxu0 0
        %2404 = vmatprep.subr.bf16.mxu0 0
        %2405 = vmatpush1.bf16.msra.mxu0 0
        %2406 = vmatprep.subr.bf16.mxu0 0
        %2407 = vmatpush1.bf16.msra.mxu0 0
        %2408 = vmatprep.subr.bf16.mxu0 0
        %2409 = vmatpush1.bf16.msra.mxu0 0
        %2410 = vmatprep.subr.bf16.mxu0 0
        %2411 = vmatpush1.bf16.msra.mxu0 0
        %2412 = vmatprep.mubr.bf16.mxu0 0
        %2413 = vmatmul.mubr.bf16.gmra.mrb[0].mxu0 %v2378
        %v2414 = vpop.f32.mrb[0].mxu0
        %v2415 = vadd.f32 0.0, %v2414
        %v2416 = vpop.f32.mrb[0].mxu0
        %v2417 = vpop.f32.mrb[0].mxu0
        %v2418 = vadd.f32 0.0, %v2417
        %v2419 = vpop.f32.mrb[0].mxu0
        %2420 = vdwg.mxu0
        %2421 = vrot.lane.b32.xlu0 %v1979, 40
        %v2422 = vpop.permute.xlu0 %2421
        %v2425 = vsel %vm653, %v2279, 0
        %2427 = vmatprep.subr.bf16.mxu0 0
        %2428 = vmatpush1.bf16.msra.mxu0 %v2422
        %2429 = vmatprep.subr.bf16.mxu0 0
        %2430 = vmatpush1.bf16.msra.mxu0 0
        %2431 = vmatprep.subr.bf16.mxu0 0
        %2432 = vmatpush1.bf16.msra.mxu0 0
        %2433 = vmatprep.subr.bf16.mxu0 0
        %2434 = vmatpush1.bf16.msra.mxu0 0
        %2435 = vmatprep.subr.bf16.mxu0 0
        %2436 = vmatpush1.bf16.msra.mxu0 0
        %2437 = vmatprep.subr.bf16.mxu0 0
        %2438 = vmatpush1.bf16.msra.mxu0 0
        %2439 = vmatprep.subr.bf16.mxu0 0
        %2440 = vmatpush1.bf16.msra.mxu0 0
        %2441 = vmatprep.subr.bf16.mxu0 0
        %2442 = vmatpush1.bf16.msra.mxu0 0
        %2443 = vmatprep.subr.bf16.mxu0 0
        %2444 = vmatpush1.bf16.msra.mxu0 0
        %2445 = vmatprep.subr.bf16.mxu0 0
        %2446 = vmatpush1.bf16.msra.mxu0 0
        %2447 = vmatprep.subr.bf16.mxu0 0
        %2448 = vmatpush1.bf16.msra.mxu0 0
        %2449 = vmatprep.subr.bf16.mxu0 0
        %2450 = vmatpush1.bf16.msra.mxu0 0
        %2451 = vmatprep.subr.bf16.mxu0 0
        %2452 = vmatpush1.bf16.msra.mxu0 0
        %2453 = vmatprep.subr.bf16.mxu0 0
        %2454 = vmatpush1.bf16.msra.mxu0 0
        %2455 = vmatprep.subr.bf16.mxu0 0
        %2456 = vmatpush1.bf16.msra.mxu0 0
        %2457 = vmatprep.subr.bf16.mxu0 0
        %2458 = vmatpush1.bf16.msra.mxu0 0
        %2459 = vmatprep.mubr.bf16.mxu0 0
        %2460 = vmatmul.mubr.bf16.gmra.mrb[0].mxu0 %v2425
        %v2461 = vpop.f32.mrb[0].mxu0
        %v2462 = vadd.f32 0.0, %v2461
        %v2463 = vpop.f32.mrb[0].mxu0
        %v2464 = vpop.f32.mrb[0].mxu0
        %v2465 = vadd.f32 0.0, %v2464
        %v2466 = vpop.f32.mrb[0].mxu0
        %2467 = vdwg.mxu0
        %v2468 = vpack.c.bf16 %v2324, %v2321
        %v2469 = vpack.c.bf16 %v2371, %v2368
        %v2470 = vpack.c.bf16 %v2418, %v2415
        %v2471 = vpack.c.bf16 %v2465, %v2462
        %2476 = vrot.lane.b32.xlu0 %v2468, 24
        %v2477 = vpop.permute.xlu0 %2476
        %2478 = vrot.lane.b32.xlu0 %v2469, 24
        %v2479 = vpop.permute.xlu0 %2478
        %2480 = vrot.lane.b32.xlu0 %v2470, 24
        %v2481 = vpop.permute.xlu0 %2480
        %2482 = vrot.lane.b32.xlu0 %v2471, 24
        %v2483 = vpop.permute.xlu0 %2482
        %vm2488 = vcmask 261312
        %2489 = vst.msk [vmem:[#allocation3] sm:$0xff] %vm2488, %v2477
        %2490 = vst.msk [vmem:[#allocation3 + $0x8] sm:$0xff] %vm2488, %v2479
        %2491 = vst.msk [vmem:[#allocation3 + $0x10] sm:$0xff] %vm2488, %v2481
        %2492 = vst.msk [vmem:[#allocation3 + $0x18] sm:$0xff] %vm2488, %v2483
        %v2493 = vld [vmem:[#allocation3] sm:$0xff]
        %v2494 = vld [vmem:[#allocation3 + $0x8] sm:$0xff]
        %v2495 = vld [vmem:[#allocation3 + $0x10] sm:$0xff]
        %v2496 = vld [vmem:[#allocation3 + $0x18] sm:$0xff]
        %v2497 = vld [vmem:[#allocation9] sm:$0xf]
        %v2498 = vld [vmem:[#allocation9 + $0x4] sm:$0xf]
        %v2499 = vld [vmem:[#allocation9 + $0x8] sm:$0xf]
        %v2500 = vld [vmem:[#allocation9 + $0xc] sm:$0xf]
        %v2501 = vld [vmem:[%s4] sm:$0x1]
        %v2503 = vlaneseq
        %v2504 = vshrl.u32 %v2503, 7
        %v2505 = vsub.s32 0, %v2504
        %v2506 = vrot.slane %v2501, %v2505
        %v2512 = vunpack.c.l.b16 %v2497
        %v2513 = vunpack.c.l.b16 %v2498
        %v2514 = vunpack.c.l.b16 %v2499
        %v2515 = vunpack.c.l.b16 %v2500
        %v2516 = vpack.c.b16 %v2513, %v2512
        %v2517 = vpack.c.b16 %v2515, %v2514
        %v2521 = vsel %vm353, %v2493, 0
        %v2524 = vsel %vm353, %v2494, 0
        %v2527 = vsel %vm353, %v2495, 0
        %v2530 = vsel %vm353, %v2496, 0
        %2532 = vmatprep.subr.bf16.mxu0 0
        %2533 = vmatpush1.bf16.msra.mxu0 %v2516
        %2534 = vmatprep.subr.bf16.mxu0 0
        %2535 = vmatpush1.bf16.msra.mxu0 %v2517
        %2536 = vmatprep.subr.bf16.mxu0 0
        %2537 = vmatpush1.bf16.msra.mxu0 0
        %2538 = vmatprep.subr.bf16.mxu0 0
        %2539 = vmatpush1.bf16.msra.mxu0 0
        %2540 = vmatprep.subr.bf16.mxu0 0
        %2541 = vmatpush1.bf16.msra.mxu0 0
        %2542 = vmatprep.subr.bf16.mxu0 0
        %2543 = vmatpush1.bf16.msra.mxu0 0
        %2544 = vmatprep.subr.bf16.mxu0 0
        %2545 = vmatpush1.bf16.msra.mxu0 0
        %2546 = vmatprep.subr.bf16.mxu0 0
        %2547 = vmatpush1.bf16.msra.mxu0 0
        %2548 = vmatprep.subr.bf16.mxu0 0
        %2549 = vmatpush1.bf16.msra.mxu0 0
        %2550 = vmatprep.subr.bf16.mxu0 0
        %2551 = vmatpush1.bf16.msra.mxu0 0
        %2552 = vmatprep.subr.bf16.mxu0 0
        %2553 = vmatpush1.bf16.msra.mxu0 0
        %2554 = vmatprep.subr.bf16.mxu0 0
        %2555 = vmatpush1.bf16.msra.mxu0 0
        %2556 = vmatprep.subr.bf16.mxu0 0
        %2557 = vmatpush1.bf16.msra.mxu0 0
        %2558 = vmatprep.subr.bf16.mxu0 0
        %2559 = vmatpush1.bf16.msra.mxu0 0
        %2560 = vmatprep.subr.bf16.mxu0 0
        %2561 = vmatpush1.bf16.msra.mxu0 0
        %2562 = vmatprep.subr.bf16.mxu0 0
        %2563 = vmatpush1.bf16.msra.mxu0 0
        %2564 = vmatprep.mubr.bf16.mxu0 0
        %2565 = vmatmul.mubr.bf16.gmra.mrb[0].mxu0 %v2521
        %v2566 = vpop.f32.mrb[0].mxu0
        %v2567 = vadd.f32 %v2506, %v2566
        %v2568 = vpop.f32.mrb[0].mxu0
        %v2569 = vpop.f32.mrb[0].mxu0
        %v2570 = vadd.f32 %v2506, %v2569
        %v2571 = vpop.f32.mrb[0].mxu0
        %2572 = vmatprep.mubr.bf16.mxu0 0
        %2573 = vmatmul.mubr.bf16.gmra.mrb[0].mxu0 %v2524
        %v2574 = vpop.f32.mrb[0].mxu0
        %v2575 = vadd.f32 %v2506, %v2574
        %v2576 = vpop.f32.mrb[0].mxu0
        %v2577 = vpop.f32.mrb[0].mxu0
        %v2578 = vadd.f32 %v2506, %v2577
        %v2579 = vpop.f32.mrb[0].mxu0
        %2580 = vmatprep.mubr.bf16.mxu0 0
        %2581 = vmatmul.mubr.bf16.gmra.mrb[0].mxu0 %v2527
        %v2582 = vpop.f32.mrb[0].mxu0
        %v2583 = vadd.f32 %v2506, %v2582
        %v2584 = vpop.f32.mrb[0].mxu0
        %v2585 = vpop.f32.mrb[0].mxu0
        %v2586 = vadd.f32 %v2506, %v2585
        %v2587 = vpop.f32.mrb[0].mxu0
        %2588 = vmatprep.mubr.bf16.mxu0 0
        %2589 = vmatmul.mubr.bf16.gmra.mrb[0].mxu0 %v2530
        %v2590 = vpop.f32.mrb[0].mxu0
        %v2591 = vadd.f32 %v2506, %v2590
        %v2592 = vpop.f32.mrb[0].mxu0
        %v2593 = vpop.f32.mrb[0].mxu0
        %v2594 = vadd.f32 %v2506, %v2593
        %v2595 = vpop.f32.mrb[0].mxu0
        %2596 = vdwg.mxu0
        %2597 = vst.msk [vmem:[%s314] sm:$0xff] %vm353, %v2567
        %2598 = vst.msk [vmem:[%s314 + $0x8] sm:$0xff] %vm353, %v2570
        %2599 = vst.msk [vmem:[%s314 + $0x10] sm:$0xff] %vm353, %v2575
        %2600 = vst.msk [vmem:[%s314 + $0x18] sm:$0xff] %vm353, %v2578
        %2601 = vst.msk [vmem:[%s314 + $0x20] sm:$0xff] %vm353, %v2583
        %2602 = vst.msk [vmem:[%s314 + $0x28] sm:$0xff] %vm353, %v2586
        %2603 = vst.msk [vmem:[%s314 + $0x30] sm:$0xff] %vm353, %v2591
        %2604 = vst.msk [vmem:[%s314 + $0x38] sm:$0xff] %vm353, %v2594
        %s2605 = sand.u32 %s164, 1
        %s2606 = scalar_lea.sflag [#allocation6], %s2605
        %s2607 = sand.u32 %s164, 1
        %s2608 = smul.addr %s2607, 64
        %s2609 = scalar_lea.vmem [#allocation12], %s2608
        // Predicated region
        $region61: #{tpu_custom_call.1} parent=43 // pred_check
          %p2610 = pneg %p174
        $region62: #{tpu_custom_call.1} parent=43 // pred_check_branch
          %2612 = sbr.rel (%p2610) target = $region64
        $region63: #{tpu_custom_call.1} parent=43 // pred_region
          %s2613 = smul.u32 4, %s25
          %s2615 = ssub.s32 1024, 1024
          %2616 = vsyncadd %s2606, %s2615
          %s2617 = smul.addr %s2613, 2
          %s2618 = smul.addr %s2617, 128
          %s2619 = scalar_lea.hbm %s6, %s2618
          %s2620 = sshll.u32 %s2609, 4
          %s2621 = int_to_ptr.vmem [resolvable:$true] %s2620
          %2626 = dma.vmem_to_hbm [thread:$0]  %s2621, 1024, %s2619, %s2606, 128, 128, 8
        $region64: #{tpu_custom_call.1} parent=43 // pred_fallthru
          _
      $region44: #{tpu_custom_call.1} parent=5 // pred_fallthru
        _
      %p2627 = scmp.le.s32.totalorder 2, %s20
      // Predicated region
      $region65: #{tpu_custom_call.1} parent=5 // pred_check
        %p2628 = pneg %p2627
      $region66: #{tpu_custom_call.1} parent=5 // pred_check_branch
        %2630 = sbr.rel (%p2628) target = $region68
      $region67: #{tpu_custom_call.1} parent=5 // pred_region
        %s2631 = ssub.s32 %s20, 2
        // Predicated region
        $region69: #{tpu_custom_call.1} parent=67 // pred_check
          %p2632 = pneg %p180
        $region70: #{tpu_custom_call.1} parent=67 // pred_check_branch
          %2634 = sbr.rel (%p2632) target = $region72
        $region71: #{tpu_custom_call.1} parent=67 // pred_region
          %s2635 = sand.u32 %s165, 1
          %s2636 = scalar_lea.sflag [#allocation6], %s2635
          %s2637 = sand.u32 %s165, 1
          %s2638 = smul.addr %s2637, 64
          %s2639 = scalar_lea.vmem [#allocation12], %s2638
          %2640 = dma.done %s2636, 1024
        $region72: #{tpu_custom_call.1} parent=67 // pred_fallthru
          _
      $region68: #{tpu_custom_call.1} parent=5 // pred_fallthru
        _
    $region6: #{tpu_custom_call.1} parent=1 // loop_footer
      %s24 = sadd.s32 1, %s20
    $region7: #{tpu_custom_call.1} parent=1 // loop_footer_branch
      %19 = sbr.rel target = $region3
    $region8: #{tpu_custom_call.1} parent=1 // loop_exit
      _
    %2641 = vsyncpa [#allocation5], 1
    %s2642 = scalar_lea.sflag [#allocation5], 1
    %2643 = vsyncpa %s2642, 1
    %2644 = vsyncpa [#allocation8], 1
    %2645 = vsyncpa [#allocation11], 1
    %2646 = vsyncpa [#allocation6], 1
    %s2647 = scalar_lea.sflag [#allocation6], 1
    %2648 = vsyncpa %s2647, 1

// kernel: tpu_custom_call.1
$region0: #{tpu_custom_call.1}
  #allocation0 [shape = 'u32[]', space=smem, size = 0x4, offset = 0x4, fixed_abs, tag = 'smem constant byte address 0x4 - core index']
  #allocation1 [shape = 'u32[144,128]{1,0:T(1,128)}', space=vmem, size = 0x12000, scoped, tag = 'internal scratch']
  #allocation2 [shape = 'bf16[64,96]{1,0:T(16,128)(2,1)}', space=vmem, size = 0x4000, scoped, tag = 'scratch operand']
  #allocation3 [shape = 'bf16[64,32]{1,0:T(16,128)(2,1)}', space=vmem, size = 0x4000, scoped, tag = 'scratch operand']
  %s0 = inlined_call_operand.hbm [shape: f32[8,16,32], index: 0, kind: input, shape index: {}]
  %s1 = inlined_call_operand.hbm [shape: bf16[32,96], index: 1, kind: input, shape index: {}]
  %s2 = inlined_call_operand.vmem [shape: f32[1,96], index: 2, kind: input, shape index: {}]
  %s3 = inlined_call_operand.hbm [shape: bf16[32,32], index: 3, kind: input, shape index: {}]
  %s4 = inlined_call_operand.vmem [shape: f32[1,32], index: 4, kind: input, shape index: {}]
  %s5 = inlined_call_operand.hbm [shape: f32[1,4,16,16], index: 5, kind: input, shape index: {}]
  %s6 = inlined_call_operand.hbm [shape: f32[8,16,32], index: 6, kind: output, shape index: {}]
  %s7 = sld [smem:[#allocation0]]
  $region73: #{tpu_custom_call.1} parent=0
    _
  %s9 = ssub.s32 1, %s7
  %s10 = scalar_select 0, %s9, %s7
  $region1: #{tpu_custom_call.1} parent=0
    #allocation4 [shape = 'u8[65536]{0}', space=vmem, size = 0x10000, scoped, tag = 'input window, operand 0']
    #allocation5 [shape = 's32[2]{0}', space=sflag, size = 0x8, scoped, tag = 'scoped memory for tpu_custom_call.1']
    #allocation6 [shape = 's32[2]{0}', space=sflag, size = 0x8, scoped, tag = 'scoped memory for tpu_custom_call.1']
    #allocation7 [shape = 'u8[8192]{0}', space=vmem, size = 0x2000, scoped, tag = 'input window, operand 1, single buffered']
    #allocation8 [shape = 's32[1]{0}', space=sflag, size = 0x4, scoped, tag = 'scoped memory for tpu_custom_call.1']
    #allocation9 [shape = 'u8[8192]{0}', space=vmem, size = 0x2000, scoped, tag = 'input window, operand 3, single buffered']
    #allocation10 [shape = 'u8[32768]{0}', space=vmem, size = 0x8000, scoped, tag = 'input window, operand 5, single buffered']
    #allocation11 [shape = 's32[1]{0}', space=sflag, size = 0x4, scoped, tag = 'scoped memory for tpu_custom_call.1']
    #allocation12 [shape = 'u8[65536]{0}', space=vmem, size = 0x10000, scoped, tag = 'output window, operand 0']
    %11 = vsyncpa [#allocation5], 0
    %s12 = scalar_lea.sflag [#allocation5], 1
    %13 = vsyncpa %s12, 0
    %14 = vsyncpa [#allocation8], 0
    %15 = vsyncpa [#allocation11], 0
    %16 = vsyncpa [#allocation6], 0
    %s17 = scalar_lea.sflag [#allocation6], 1
    %18 = vsyncpa %s17, 0
    loop: start=0, step=1, limit=4
    $region2: #{tpu_custom_call.1} parent=1 // loop_pre_header
      _
    $region3: #{tpu_custom_call.1} parent=1 // loop_header
      %s20 = sphi 0, %s24
      %p21 = scmp.ge.s32.totalorder %s20, 4
      %s30 = sphi 0, %s32
      %s33 = sphi 0, %s30
      %s34 = sphi 0, %s33
      %s50 = sphi 0, %s34
      %s54 = sphi 0, %s54
      %s56 = sphi 0, %s54
      %s57 = sphi 0, %s56
      %s71 = sphi 0, %s57
      %s75 = sphi 0, %s75
      %s77 = sphi 0, %s75
      %s78 = sphi 0, %s77
      %s92 = sphi 0, %s78
      %s96 = sphi 0, %s96
      %s98 = sphi 0, %s96
      %s99 = sphi 0, %s98
      %s113 = sphi 0, %s99
      %s117 = sphi 0, %s117
      %s119 = sphi 0, %s117
      %s120 = sphi 0, %s119
      %s134 = sphi 0, %s120
      %s138 = sphi 0, %s138
      %s140 = sphi 0, %s138
      %s141 = sphi 0, %s140
      %s155 = sphi 0, %s141
      %s161 = sphi 0, %s163
      %s164 = sphi 0, %s161
      %s165 = sphi 0, %s164
      %s181 = sphi 0, %s165
    $region4: #{tpu_custom_call.1} parent=1 // loop_header_branch
      %23 = sbr.rel (%p21) target = $region8
    $region5: #{tpu_custom_call.1} parent=1 // loop_body
      %s25 = ssub.s32 %s20, 1
      %s26 = ssub.s32 %s20, 2
      %s27 = sadd.s32 %s20, 1
      %s28 = ssub.s32 %s20, %s27
      %p29 = scmp.eq.s32.totalorder %s28, 0
      %s31 = sadd.s32 %s30, 1
      %s32 = scalar_select %p29, %s30, %s31
      %p35 = pneg %p29
      %p36 = scmp.eq.s32.totalorder %s20, 1
      %p37 = por %p35, %p36
      %p38 = scmp.ne.s32.totalorder %s30, %s33
      %p39 = scmp.eq.s32.totalorder %s20, 0
      %p40 = por %p38, %p39
      %p41 = scmp.ne.s32.totalorder %s30, %s33
      %p42 = scmp.eq.s32.totalorder %s25, 1
      %p43 = por %p41, %p42
      %p44 = scmp.ne.s32.totalorder %s33, %s34
      %p45 = scmp.eq.s32.totalorder %s25, 0
      %p46 = por %p44, %p45
      %p47 = scmp.ne.s32.totalorder %s33, %s34
      %p48 = scmp.eq.s32.totalorder %s26, 1
      %p49 = por %p47, %p48
      %p51 = scmp.ne.s32.totalorder %s34, %s50
      %p52 = scmp.eq.s32.totalorder %s26, 0
      %p53 = por %p51, %p52
      %s55 = sadd.s32 %s54, 1
      %p58 = scmp.eq.s32.totalorder %s20, 1
      %p59 = scmp.ne.s32.totalorder %s54, %s56
      %p60 = scmp.eq.s32.totalorder %s20, 0
      %p61 = por %p59, %p60
      %p62 = scmp.ne.s32.totalorder %s54, %s56
      %p63 = scmp.eq.s32.totalorder %s25, 1
      %p64 = por %p62, %p63
      %p65 = scmp.ne.s32.totalorder %s56, %s57
      %p66 = scmp.eq.s32.totalorder %s25, 0
      %p67 = por %p65, %p66
      %p68 = scmp.ne.s32.totalorder %s56, %s57
      %p69 = scmp.eq.s32.totalorder %s26, 1
      %p70 = por %p68, %p69
      %p72 = scmp.ne.s32.totalorder %s57, %s71
      %p73 = scmp.eq.s32.totalorder %s26, 0
      %p74 = por %p72, %p73
      %s76 = sadd.s32 %s75, 1
      %p79 = scmp.eq.s32.totalorder %s20, 1
      %p80 = scmp.ne.s32.totalorder %s75, %s77
      %p81 = scmp.eq.s32.totalorder %s20, 0
      %p82 = por %p80, %p81
      %p83 = scmp.ne.s32.totalorder %s75, %s77
      %p84 = scmp.eq.s32.totalorder %s25, 1
      %p85 = por %p83, %p84
      %p86 = scmp.ne.s32.totalorder %s77, %s78
      %p87 = scmp.eq.s32.totalorder %s25, 0
      %p88 = por %p86, %p87
      %p89 = scmp.ne.s32.totalorder %s77, %s78
      %p90 = scmp.eq.s32.totalorder %s26, 1
      %p91 = por %p89, %p90
      %p93 = scmp.ne.s32.totalorder %s78, %s92
      %p94 = scmp.eq.s32.totalorder %s26, 0
      %p95 = por %p93, %p94
      %s97 = sadd.s32 %s96, 1
      %p100 = scmp.eq.s32.totalorder %s20, 1
      %p101 = scmp.ne.s32.totalorder %s96, %s98
      %p102 = scmp.eq.s32.totalorder %s20, 0
      %p103 = por %p101, %p102
      %p104 = scmp.ne.s32.totalorder %s96, %s98
      %p105 = scmp.eq.s32.totalorder %s25, 1
      %p106 = por %p104, %p105
      %p107 = scmp.ne.s32.totalorder %s98, %s99
      %p108 = scmp.eq.s32.totalorder %s25, 0
      %p109 = por %p107, %p108
      %p110 = scmp.ne.s32.totalorder %s98, %s99
      %p111 = scmp.eq.s32.totalorder %s26, 1
      %p112 = por %p110, %p111
      %p114 = scmp.ne.s32.totalorder %s99, %s113
      %p115 = scmp.eq.s32.totalorder %s26, 0
      %p116 = por %p114, %p115
      %s118 = sadd.s32 %s117, 1
      %p121 = scmp.eq.s32.totalorder %s20, 1
      %p122 = scmp.ne.s32.totalorder %s117, %s119
      %p123 = scmp.eq.s32.totalorder %s20, 0
      %p124 = por %p122, %p123
      %p125 = scmp.ne.s32.totalorder %s117, %s119
      %p126 = scmp.eq.s32.totalorder %s25, 1
      %p127 = por %p125, %p126
      %p128 = scmp.ne.s32.totalorder %s119, %s120
      %p129 = scmp.eq.s32.totalorder %s25, 0
      %p130 = por %p128, %p129
      %p131 = scmp.ne.s32.totalorder %s119, %s120
      %p132 = scmp.eq.s32.totalorder %s26, 1
      %p133 = por %p131, %p132
      %p135 = scmp.ne.s32.totalorder %s120, %s134
      %p136 = scmp.eq.s32.totalorder %s26, 0
      %p137 = por %p135, %p136
      %s139 = sadd.s32 %s138, 1
      %p142 = scmp.eq.s32.totalorder %s20, 1
      %p143 = scmp.ne.s32.totalorder %s138, %s140
      %p144 = scmp.eq.s32.totalorder %s20, 0
      %p145 = por %p143, %p144
      %p146 = scmp.ne.s32.totalorder %s138, %s140
      %p147 = scmp.eq.s32.totalorder %s25, 1
      %p148 = por %p146, %p147
      %p149 = scmp.ne.s32.totalorder %s140, %s141
      %p150 = scmp.eq.s32.totalorder %s25, 0
      %p151 = por %p149, %p150
      %p152 = scmp.ne.s32.totalorder %s140, %s141
      %p153 = scmp.eq.s32.totalorder %s26, 1
      %p154 = por %p152, %p153
      %p156 = scmp.ne.s32.totalorder %s141, %s155
      %p157 = scmp.eq.s32.totalorder %s26, 0
      %p158 = por %p156, %p157
      %s159 = ssub.s32 %s20, %s27
      %p160 = scmp.eq.s32.totalorder %s159, 0
      %s162 = sadd.s32 %s161, 1
      %s163 = scalar_select %p160, %s161, %s162
      %p166 = pneg %p160
      %p167 = scmp.eq.s32.totalorder %s20, 1
      %p168 = por %p166, %p167
      %p169 = scmp.ne.s32.totalorder %s161, %s164
      %p170 = scmp.eq.s32.totalorder %s20, 0
      %p171 = por %p169, %p170
      %p172 = scmp.ne.s32.totalorder %s161, %s164
      %p173 = scmp.eq.s32.totalorder %s25, 1
      %p174 = por %p172, %p173
      %p175 = scmp.ne.s32.totalorder %s164, %s165
      %p176 = scmp.eq.s32.totalorder %s25, 0
      %p177 = por %p175, %p176
      %p178 = scmp.ne.s32.totalorder %s164, %s165
      %p179 = scmp.eq.s32.totalorder %s26, 1
      %p180 = por %p178, %p179
      %p182 = scmp.ne.s32.totalorder %s165, %s181
      %p183 = scmp.eq.s32.totalorder %s26, 0
      %p184 = por %p182, %p183
      %p185 = scmp.le.s32.totalorder 1, %s20
      %p186 = scmp.lt.s32.totalorder %s20, 3
      %p187 = pnand %p185, %p186
      %p188 = pneg %p187
      // Predicated region
      $region9: #{tpu_custom_call.1} parent=5 // pred_check
        _
      $region10: #{tpu_custom_call.1} parent=5 // pred_check_branch
        %190 = sbr.rel (%p187) target = $region12
      $region11: #{tpu_custom_call.1} parent=5 // pred_region
        %s191 = ssub.s32 %s20, 1
        // Predicated region
        $region13: #{tpu_custom_call.1} parent=11 // pred_check
          %p192 = pneg %p67
        $region14: #{tpu_custom_call.1} parent=11 // pred_check_branch
          %194 = sbr.rel (%p192) target = $region16
        $region15: #{tpu_custom_call.1} parent=11 // pred_region
          %s196 = ssub.s32 256, 256
          %197 = vsyncadd [#allocation8], %s196
          %s198 = sshll.u32 [#allocation7], 4
          %s199 = int_to_ptr.vmem [resolvable:$true] %s198
          %204 = dma.hbm_to_vmem [thread:$0]  %s1, 256, %s199, [#allocation8], 64, 64, 4
        $region16: #{tpu_custom_call.1} parent=11 // pred_fallthru
          _
        // Predicated region
        $region17: #{tpu_custom_call.1} parent=11 // pred_check
          %p205 = pneg %p88
        $region18: #{tpu_custom_call.1} parent=11 // pred_check_branch
          %207 = sbr.rel (%p205) target = $region20
        $region19: #{tpu_custom_call.1} parent=11 // pred_region
          _
        $region20: #{tpu_custom_call.1} parent=11 // pred_fallthru
          _
        // Predicated region
        $region21: #{tpu_custom_call.1} parent=11 // pred_check
          %p208 = pneg %p109
        $region22: #{tpu_custom_call.1} parent=11 // pred_check_branch
          %210 = sbr.rel (%p208) target = $region24
        $region23: #{tpu_custom_call.1} parent=11 // pred_region
          %s212 = ssub.s32 256, 256
          %213 = vsyncadd [#allocation8], %s212
          %s214 = sshll.u32 [#allocation9], 4
          %s215 = int_to_ptr.vmem [resolvable:$true] %s214
          %220 = dma.hbm_to_vmem [thread:$0]  %s3, 256, %s215, [#allocation8], 64, 64, 4
        $region24: #{tpu_custom_call.1} parent=11 // pred_fallthru
          _
        // Predicated region
        $region25: #{tpu_custom_call.1} parent=11 // pred_check
          %p221 = pneg %p130
        $region26: #{tpu_custom_call.1} parent=11 // pred_check_branch
          %223 = sbr.rel (%p221) target = $region28
        $region27: #{tpu_custom_call.1} parent=11 // pred_region
          _
        $region28: #{tpu_custom_call.1} parent=11 // pred_fallthru
          _
        // Predicated region
        $region29: #{tpu_custom_call.1} parent=11 // pred_check
          %p224 = pneg %p151
        $region30: #{tpu_custom_call.1} parent=11 // pred_check_branch
          %226 = sbr.rel (%p224) target = $region32
        $region31: #{tpu_custom_call.1} parent=11 // pred_region
          %s228 = ssub.s32 1024, 1024
          %229 = vsyncadd [#allocation11], %s228
          %s230 = sshll.u32 [#allocation10], 4
          %s231 = int_to_ptr.vmem [resolvable:$true] %s230
          %236 = dma.hbm_to_vmem [thread:$0]  %s5, 1024, %s231, [#allocation11], 128, 128, 8
        $region32: #{tpu_custom_call.1} parent=11 // pred_fallthru
          _
      $region12: #{tpu_custom_call.1} parent=5 // pred_fallthru
        _
      %p237 = scmp.lt.s32.totalorder %s20, 2
      // Predicated region
      $region33: #{tpu_custom_call.1} parent=5 // pred_check
        %p238 = pneg %p237
      $region34: #{tpu_custom_call.1} parent=5 // pred_check_branch
        %240 = sbr.rel (%p238) target = $region36
      $region35: #{tpu_custom_call.1} parent=5 // pred_region
        // Predicated region
        $region37: #{tpu_custom_call.1} parent=35 // pred_check
          %p241 = pneg %p40
        $region38: #{tpu_custom_call.1} parent=35 // pred_check_branch
          %243 = sbr.rel (%p241) target = $region40
        $region39: #{tpu_custom_call.1} parent=35 // pred_region
          %s244 = sand.u32 %s30, 1
          %s245 = scalar_lea.sflag [#allocation5], %s244
          %s246 = sand.u32 %s30, 1
          %s247 = smul.addr %s246, 64
          %s248 = scalar_lea.vmem [#allocation4], %s247
          %s249 = smul.u32 4, %s20
          %s251 = ssub.s32 1024, 1024
          %252 = vsyncadd %s245, %s251
          %s253 = smul.addr %s249, 2
          %s254 = smul.addr %s253, 128
          %s255 = scalar_lea.hbm %s0, %s254
          %s256 = sshll.u32 %s248, 4
          %s257 = int_to_ptr.vmem [resolvable:$true] %s256
          %262 = dma.hbm_to_vmem [thread:$0]  %s255, 1024, %s257, %s245, 128, 128, 8
        $region40: #{tpu_custom_call.1} parent=35 // pred_fallthru
          _
      $region36: #{tpu_custom_call.1} parent=5 // pred_fallthru
        _
      %p263 = scmp.le.s32.totalorder 1, %s20
      %p264 = scmp.lt.s32.totalorder %s20, 3
      %p265 = pnand %p263, %p264
      %p266 = pneg %p265
      // Predicated region
      $region41: #{tpu_custom_call.1} parent=5 // pred_check
        _
      $region42: #{tpu_custom_call.1} parent=5 // pred_check_branch
        %268 = sbr.rel (%p265) target = $region44
      $region43: #{tpu_custom_call.1} parent=5 // pred_region
        %s269 = ssub.s32 %s20, 1
        %s270 = sand.u32 %s33, 1
        %s271 = scalar_lea.sflag [#allocation5], %s270
        %s272 = sand.u32 %s33, 1
        %s273 = smul.addr %s272, 64
        %s274 = scalar_lea.vmem [#allocation4], %s273
        // Predicated region
        $region45: #{tpu_custom_call.1} parent=43 // pred_check
          %p275 = pneg %p46
        $region46: #{tpu_custom_call.1} parent=43 // pred_check_branch
          %277 = sbr.rel (%p275) target = $region48
        $region47: #{tpu_custom_call.1} parent=43 // pred_region
          %278 = dma.done %s271, 1024
        $region48: #{tpu_custom_call.1} parent=43 // pred_fallthru
          _
        // Predicated region
        $region49: #{tpu_custom_call.1} parent=43 // pred_check
          %p279 = pneg %p67
        $region50: #{tpu_custom_call.1} parent=43 // pred_check_branch
          %281 = sbr.rel (%p279) target = $region52
        $region51: #{tpu_custom_call.1} parent=43 // pred_region
          %282 = dma.done [#allocation8], 256
        $region52: #{tpu_custom_call.1} parent=43 // pred_fallthru
          _
        // Predicated region
        $region53: #{tpu_custom_call.1} parent=43 // pred_check
          %p283 = pneg %p109
        $region54: #{tpu_custom_call.1} parent=43 // pred_check_branch
          %285 = sbr.rel (%p283) target = $region56
        $region55: #{tpu_custom_call.1} parent=43 // pred_region
          %286 = dma.done [#allocation8], 256
        $region56: #{tpu_custom_call.1} parent=43 // pred_fallthru
          _
        // Predicated region
        $region57: #{tpu_custom_call.1} parent=43 // pred_check
          %p287 = pneg %p151
        $region58: #{tpu_custom_call.1} parent=43 // pred_check_branch
          %289 = sbr.rel (%p287) target = $region60
        $region59: #{tpu_custom_call.1} parent=43 // pred_region
          %290 = dma.done [#allocation11], 1024
        $region60: #{tpu_custom_call.1} parent=43 // pred_fallthru
          _
        %s291 = sand.u32 %s33, 1
        %s292 = scalar_lea.sflag [#allocation5], %s291
        %s293 = sand.u32 %s33, 1
        %s294 = smul.addr %s293, 64
        %s295 = scalar_lea.vmem [#allocation4], %s294
        %p296 = pneg %p46
        %p297 = pneg %p43
        %p298 = pneg %p67
        %p299 = pneg %p64
        %p300 = pneg %p88
        %p301 = pneg %p85
        %p302 = pneg %p109
        %p303 = pneg %p106
        %p304 = pneg %p130
        %p305 = pneg %p127
        %p306 = pneg %p151
        %p307 = pneg %p148
        %p308 = pneg %p177
        %p309 = pneg %p174
        %s310 = sand.u32 %s164, 1
        %s311 = scalar_lea.sflag [#allocation6], %s310
        %s312 = sand.u32 %s164, 1
        %s313 = smul.addr %s312, 64
        %s314 = scalar_lea.vmem [#allocation12], %s313
        %s315 = smul.u32 4, %s25
        %s316 = smul.u32 4, %s25
        %v318 = vld [vmem:[%s274] sm:$0xff]
        %v319 = vld [vmem:[%s274 + $0x8] sm:$0xff]
        %v320 = vld [vmem:[%s274 + $0x10] sm:$0xff]
        %v321 = vld [vmem:[%s274 + $0x18] sm:$0xff]
        %v322 = vld [vmem:[%s274 + $0x20] sm:$0xff]
        %v323 = vld [vmem:[%s274 + $0x28] sm:$0xff]
        %v324 = vld [vmem:[%s274 + $0x30] sm:$0xff]
        %v325 = vld [vmem:[%s274 + $0x38] sm:$0xff]
        %v326 = vpack.c.bf16 %v319, %v318
        %v327 = vpack.c.bf16 %v321, %v320
        %v328 = vpack.c.bf16 %v323, %v322
        %v329 = vpack.c.bf16 %v325, %v324
        %v330 = vld [vmem:[#allocation7] sm:$0xf]
        %v331 = vld [vmem:[#allocation7 + $0x4] sm:$0xf]
        %v332 = vld [vmem:[#allocation7 + $0x8] sm:$0xf]
        %v333 = vld [vmem:[#allocation7 + $0xc] sm:$0xf]
        %v334 = vld [vmem:[%s2] sm:$0x1]
        %v336 = vlaneseq
        %v337 = vshrl.u32 %v336, 7
        %v338 = vsub.s32 0, %v337
        %v339 = vrot.slane %v334, %v338
        %v345 = vunpack.c.l.b16 %v330
        %v346 = vunpack.c.l.b16 %v331
        %v347 = vunpack.c.l.b16 %v332
        %v348 = vunpack.c.l.b16 %v333
        %v349 = vpack.c.b16 %v346, %v345
        %v350 = vpack.c.b16 %v348, %v347
        %vm353 = vcmask 261120
        %v355 = vsel %vm353, %v326, 0
        %v358 = vsel %vm353, %v327, 0
        %v361 = vsel %vm353, %v328, 0
        %v364 = vsel %vm353, %v329, 0
        %366 = vmatprep.subr.bf16.mxu0 0
        %367 = vmatpush1.bf16.msra.mxu0 %v349
        %368 = vmatprep.subr.bf16.mxu0 0
        %369 = vmatpush1.bf16.msra.mxu0 %v350
        %370 = vmatprep.subr.bf16.mxu0 0
        %371 = vmatpush1.bf16.msra.mxu0 0
        %372 = vmatprep.subr.bf16.mxu0 0
        %373 = vmatpush1.bf16.msra.mxu0 0
        %374 = vmatprep.subr.bf16.mxu0 0
        %375 = vmatpush1.bf16.msra.mxu0 0
        %376 = vmatprep.subr.bf16.mxu0 0
        %377 = vmatpush1.bf16.msra.mxu0 0
        %378 = vmatprep.subr.bf16.mxu0 0
        %379 = vmatpush1.bf16.msra.mxu0 0
        %380 = vmatprep.subr.bf16.mxu0 0
        %381 = vmatpush1.bf16.msra.mxu0 0
        %382 = vmatprep.subr.bf16.mxu0 0
        %383 = vmatpush1.bf16.msra.mxu0 0
        %384 = vmatprep.subr.bf16.mxu0 0
        %385 = vmatpush1.bf16.msra.mxu0 0
        %386 = vmatprep.subr.bf16.mxu0 0
        %387 = vmatpush1.bf16.msra.mxu0 0
        %388 = vmatprep.subr.bf16.mxu0 0
        %389 = vmatpush1.bf16.msra.mxu0 0
        %390 = vmatprep.subr.bf16.mxu0 0
        %391 = vmatpush1.bf16.msra.mxu0 0
        %392 = vmatprep.subr.bf16.mxu0 0
        %393 = vmatpush1.bf16.msra.mxu0 0
        %394 = vmatprep.subr.bf16.mxu0 0
        %395 = vmatpush1.bf16.msra.mxu0 0
        %396 = vmatprep.subr.bf16.mxu0 0
        %397 = vmatpush1.bf16.msra.mxu0 0
        %398 = vmatprep.mubr.bf16.mxu0 0
        %399 = vmatmul.mubr.bf16.gmra.mrb[0].mxu0 %v355
        %v400 = vpop.f32.mrb[0].mxu0
        %v401 = vadd.f32 %v339, %v400
        %v402 = vpop.f32.mrb[0].mxu0
        %v403 = vpop.f32.mrb[0].mxu0
        %v404 = vadd.f32 %v339, %v403
        %v405 = vpop.f32.mrb[0].mxu0
        %406 = vmatprep.mubr.bf16.mxu0 0
        %407 = vmatmul.mubr.bf16.gmra.mrb[0].mxu0 %v358
        %v408 = vpop.f32.mrb[0].mxu0
        %v409 = vadd.f32 %v339, %v408
        %v410 = vpop.f32.mrb[0].mxu0
        %v411 = vpop.f32.mrb[0].mxu0
        %v412 = vadd.f32 %v339, %v411
        %v413 = vpop.f32.mrb[0].mxu0
        %414 = vmatprep.mubr.bf16.mxu0 0
        %415 = vmatmul.mubr.bf16.gmra.mrb[0].mxu0 %v361
        %v416 = vpop.f32.mrb[0].mxu0
        %v417 = vadd.f32 %v339, %v416
        %v418 = vpop.f32.mrb[0].mxu0
        %v419 = vpop.f32.mrb[0].mxu0
        %v420 = vadd.f32 %v339, %v419
        %v421 = vpop.f32.mrb[0].mxu0
        %422 = vmatprep.mubr.bf16.mxu0 0
        %423 = vmatmul.mubr.bf16.gmra.mrb[0].mxu0 %v364
        %v424 = vpop.f32.mrb[0].mxu0
        %v425 = vadd.f32 %v339, %v424
        %v426 = vpop.f32.mrb[0].mxu0
        %v427 = vpop.f32.mrb[0].mxu0
        %v428 = vadd.f32 %v339, %v427
        %v429 = vpop.f32.mrb[0].mxu0
        %430 = vdwg.mxu0
        %v431 = vpack.c.bf16 %v404, %v401
        %v432 = vpack.c.bf16 %v412, %v409
        %v433 = vpack.c.bf16 %v420, %v417
        %v434 = vpack.c.bf16 %v428, %v425
        %vm435 = vcmask 785408
        %436 = vst.msk [vmem:[#allocation2] sm:$0xff] %vm435, %v431
        %437 = vst.msk [vmem:[#allocation2 + $0x8] sm:$0xff] %vm435, %v432
        %438 = vst.msk [vmem:[#allocation2 + $0x10] sm:$0xff] %vm435, %v433
        %439 = vst.msk [vmem:[#allocation2 + $0x18] sm:$0xff] %vm435, %v434
        %v440 = vld [vmem:[#allocation10] sm:$0xff]
        %v441 = vld [vmem:[#allocation10 + $0x8] sm:$0xff]
        %v442 = vld [vmem:[#allocation10 + $0x10] sm:$0xff]
        %v443 = vld [vmem:[#allocation10 + $0x18] sm:$0xff]
        %v444 = vld [vmem:[#allocation10 + $0x20] sm:$0xff]
        %v445 = vld [vmem:[#allocation10 + $0x28] sm:$0xff]
        %v446 = vld [vmem:[#allocation10 + $0x30] sm:$0xff]
        %v447 = vld [vmem:[#allocation10 + $0x38] sm:$0xff]
        %v448 = vld [vmem:[#allocation2] sm:$0xff]
        %v449 = vld [vmem:[#allocation2 + $0x8] sm:$0xff]
        %v450 = vld [vmem:[#allocation2 + $0x10] sm:$0xff]
        %v451 = vld [vmem:[#allocation2 + $0x18] sm:$0xff]
        %453 = vrot.lane.b32.xlu0 %v448, 96
        %v454 = vpop.permute.xlu0 %453
        %vm455 = vcmask 64512
        %v457 = vsel %vm455, %v448, 0
        %v460 = vsel %vm455, %v454, 0
        %462 = vmatprep.subr.bf16.mxu0 0
        %463 = vmatpush1.bf16.xpose.msra.mxu0 %v460
        %464 = vmatprep.subr.bf16.mxu0 0
        %465 = vmatpush1.bf16.xpose.msra.mxu0 0
        %466 = vmatprep.subr.bf16.mxu0 0
        %467 = vmatpush1.bf16.xpose.msra.mxu0 0
        %468 = vmatprep.subr.bf16.mxu0 0
        %469 = vmatpush1.bf16.xpose.msra.mxu0 0
        %470 = vmatprep.subr.bf16.mxu0 0
        %471 = vmatpush1.bf16.xpose.msra.mxu0 0
        %472 = vmatprep.subr.bf16.mxu0 0
        %473 = vmatpush1.bf16.xpose.msra.mxu0 0
        %474 = vmatprep.subr.bf16.mxu0 0
        %475 = vmatpush1.bf16.xpose.msra.mxu0 0
        %476 = vmatprep.subr.bf16.mxu0 0
        %477 = vmatpush1.bf16.xpose.msra.mxu0 0
        %478 = vmatprep.subr.bf16.mxu0 0
        %479 = vmatpush1.bf16.xpose.msra.mxu0 0
        %480 = vmatprep.subr.bf16.mxu0 0
        %481 = vmatpush1.bf16.xpose.msra.mxu0 0
        %482 = vmatprep.subr.bf16.mxu0 0
        %483 = vmatpush1.bf16.xpose.msra.mxu0 0
        %484 = vmatprep.subr.bf16.mxu0 0
        %485 = vmatpush1.bf16.xpose.msra.mxu0 0
        %486 = vmatprep.subr.bf16.mxu0 0
        %487 = vmatpush1.bf16.xpose.msra.mxu0 0
        %488 = vmatprep.subr.bf16.mxu0 0
        %489 = vmatpush1.bf16.xpose.msra.mxu0 0
        %490 = vmatprep.subr.bf16.mxu0 0
        %491 = vmatpush1.bf16.xpose.msra.mxu0 0
        %492 = vmatprep.subr.bf16.mxu0 0
        %493 = vmatpush1.bf16.xpose.msra.mxu0 0
        %494 = vmatprep.mubr.bf16.mxu0 0
        %495 = vmatmul.mubr.bf16.gmra.mrb[0].mxu0 %v457
        %v496 = vpop.f32.mrb[0].mxu0
        %v497 = vadd.f32 %v440, %v496
        %v498 = vpop.f32.mrb[0].mxu0
        %v499 = vpop.f32.mrb[0].mxu0
        %v500 = vadd.f32 %v441, %v499
        %v501 = vpop.f32.mrb[0].mxu0
        %502 = vdwg.mxu0
        %504 = vrot.lane.b32.xlu0 %v449, 96
        %v505 = vpop.permute.xlu0 %504
        %v507 = vsel %vm455, %v449, 0
        %v510 = vsel %vm455, %v505, 0
        %512 = vmatprep.subr.bf16.mxu0 0
        %513 = vmatpush1.bf16.xpose.msra.mxu0 %v510
        %514 = vmatprep.subr.bf16.mxu0 0
        %515 = vmatpush1.bf16.xpose.msra.mxu0 0
        %516 = vmatprep.subr.bf16.mxu0 0
        %517 = vmatpush1.bf16.xpose.msra.mxu0 0
        %518 = vmatprep.subr.bf16.mxu0 0
        %519 = vmatpush1.bf16.xpose.msra.mxu0 0
        %520 = vmatprep.subr.bf16.mxu0 0
        %521 = vmatpush1.bf16.xpose.msra.mxu0 0
        %522 = vmatprep.subr.bf16.mxu0 0
        %523 = vmatpush1.bf16.xpose.msra.mxu0 0
        %524 = vmatprep.subr.bf16.mxu0 0
        %525 = vmatpush1.bf16.xpose.msra.mxu0 0
        %526 = vmatprep.subr.bf16.mxu0 0
        %527 = vmatpush1.bf16.xpose.msra.mxu0 0
        %528 = vmatprep.subr.bf16.mxu0 0
        %529 = vmatpush1.bf16.xpose.msra.mxu0 0
        %530 = vmatprep.subr.bf16.mxu0 0
        %531 = vmatpush1.bf16.xpose.msra.mxu0 0
        %532 = vmatprep.subr.bf16.mxu0 0
        %533 = vmatpush1.bf16.xpose.msra.mxu0 0
        %534 = vmatprep.subr.bf16.mxu0 0
        %535 = vmatpush1.bf16.xpose.msra.mxu0 0
        %536 = vmatprep.subr.bf16.mxu0 0
        %537 = vmatpush1.bf16.xpose.msra.mxu0 0
        %538 = vmatprep.subr.bf16.mxu0 0
        %539 = vmatpush1.bf16.xpose.msra.mxu0 0
        %540 = vmatprep.subr.bf16.mxu0 0
        %541 = vmatpush1.bf16.xpose.msra.mxu0 0
        %542 = vmatprep.subr.bf16.mxu0 0
        %543 = vmatpush1.bf16.xpose.msra.mxu0 0
        %544 = vmatprep.mubr.bf16.mxu0 0
        %545 = vmatmul.mubr.bf16.gmra.mrb[0].mxu0 %v507
        %v546 = vpop.f32.mrb[0].mxu0
        %v547 = vadd.f32 %v440, %v546
        %v548 = vpop.f32.mrb[0].mxu0
        %v549 = vpop.f32.mrb[0].mxu0
        %v550 = vadd.f32 %v441, %v549
        %v551 = vpop.f32.mrb[0].mxu0
        %552 = vdwg.mxu0
        %554 = vrot.lane.b32.xlu0 %v450, 96
        %v555 = vpop.permute.xlu0 %554
        %v557 = vsel %vm455, %v450, 0
        %v560 = vsel %vm455, %v555, 0
        %562 = vmatprep.subr.bf16.mxu0 0
        %563 = vmatpush1.bf16.xpose.msra.mxu0 %v560
        %564 = vmatprep.subr.bf16.mxu0 0
        %565 = vmatpush1.bf16.xpose.msra.mxu0 0
        %566 = vmatprep.subr.bf16.mxu0 0
        %567 = vmatpush1.bf16.xpose.msra.mxu0 0
        %568 = vmatprep.subr.bf16.mxu0 0
        %569 = vmatpush1.bf16.xpose.msra.mxu0 0
        %570 = vmatprep.subr.bf16.mxu0 0
        %571 = vmatpush1.bf16.xpose.msra.mxu0 0
        %572 = vmatprep.subr.bf16.mxu0 0
        %573 = vmatpush1.bf16.xpose.msra.mxu0 0
        %574 = vmatprep.subr.bf16.mxu0 0
        %575 = vmatpush1.bf16.xpose.msra.mxu0 0
        %576 = vmatprep.subr.bf16.mxu0 0
        %577 = vmatpush1.bf16.xpose.msra.mxu0 0
        %578 = vmatprep.subr.bf16.mxu0 0
        %579 = vmatpush1.bf16.xpose.msra.mxu0 0
        %580 = vmatprep.subr.bf16.mxu0 0
        %581 = vmatpush1.bf16.xpose.msra.mxu0 0
        %582 = vmatprep.subr.bf16.mxu0 0
        %583 = vmatpush1.bf16.xpose.msra.mxu0 0
        %584 = vmatprep.subr.bf16.mxu0 0
        %585 = vmatpush1.bf16.xpose.msra.mxu0 0
        %586 = vmatprep.subr.bf16.mxu0 0
        %587 = vmatpush1.bf16.xpose.msra.mxu0 0
        %588 = vmatprep.subr.bf16.mxu0 0
        %589 = vmatpush1.bf16.xpose.msra.mxu0 0
        %590 = vmatprep.subr.bf16.mxu0 0
        %591 = vmatpush1.bf16.xpose.msra.mxu0 0
        %592 = vmatprep.subr.bf16.mxu0 0
        %593 = vmatpush1.bf16.xpose.msra.mxu0 0
        %594 = vmatprep.mubr.bf16.mxu0 0
        %595 = vmatmul.mubr.bf16.gmra.mrb[0].mxu0 %v557
        %v596 = vpop.f32.mrb[0].mxu0
        %v597 = vadd.f32 %v440, %v596
        %v598 = vpop.f32.mrb[0].mxu0
        %v599 = vpop.f32.mrb[0].mxu0
        %v600 = vadd.f32 %v441, %v599
        %v601 = vpop.f32.mrb[0].mxu0
        %602 = vdwg.mxu0
        %604 = vrot.lane.b32.xlu0 %v451, 96
        %v605 = vpop.permute.xlu0 %604
        %v607 = vsel %vm455, %v451, 0
        %v610 = vsel %vm455, %v605, 0
        %612 = vmatprep.subr.bf16.mxu0 0
        %613 = vmatpush1.bf16.xpose.msra.mxu0 %v610
        %614 = vmatprep.subr.bf16.mxu0 0
        %615 = vmatpush1.bf16.xpose.msra.mxu0 0
        %616 = vmatprep.subr.bf16.mxu0 0
        %617 = vmatpush1.bf16.xpose.msra.mxu0 0
        %618 = vmatprep.subr.bf16.mxu0 0
        %619 = vmatpush1.bf16.xpose.msra.mxu0 0
        %620 = vmatprep.subr.bf16.mxu0 0
        %621 = vmatpush1.bf16.xpose.msra.mxu0 0
        %622 = vmatprep.subr.bf16.mxu0 0
        %623 = vmatpush1.bf16.xpose.msra.mxu0 0
        %624 = vmatprep.subr.bf16.mxu0 0
        %625 = vmatpush1.bf16.xpose.msra.mxu0 0
        %626 = vmatprep.subr.bf16.mxu0 0
        %627 = vmatpush1.bf16.xpose.msra.mxu0 0
        %628 = vmatprep.subr.bf16.mxu0 0
        %629 = vmatpush1.bf16.xpose.msra.mxu0 0
        %630 = vmatprep.subr.bf16.mxu0 0
        %631 = vmatpush1.bf16.xpose.msra.mxu0 0
        %632 = vmatprep.subr.bf16.mxu0 0
        %633 = vmatpush1.bf16.xpose.msra.mxu0 0
        %634 = vmatprep.subr.bf16.mxu0 0
        %635 = vmatpush1.bf16.xpose.msra.mxu0 0
        %636 = vmatprep.subr.bf16.mxu0 0
        %637 = vmatpush1.bf16.xpose.msra.mxu0 0
        %638 = vmatprep.subr.bf16.mxu0 0
        %639 = vmatpush1.bf16.xpose.msra.mxu0 0
        %640 = vmatprep.subr.bf16.mxu0 0
        %641 = vmatpush1.bf16.xpose.msra.mxu0 0
        %642 = vmatprep.subr.bf16.mxu0 0
        %643 = vmatpush1.bf16.xpose.msra.mxu0 0
        %644 = vmatprep.mubr.bf16.mxu0 0
        %645 = vmatmul.mubr.bf16.gmra.mrb[0].mxu0 %v607
        %v646 = vpop.f32.mrb[0].mxu0
        %v647 = vadd.f32 %v440, %v646
        %v648 = vpop.f32.mrb[0].mxu0
        %v649 = vpop.f32.mrb[0].mxu0
        %v650 = vadd.f32 %v441, %v649
        %v651 = vpop.f32.mrb[0].mxu0
        %652 = vdwg.mxu0
        %vm653 = vcmask 130048
        %v654 = vsel %vm653, %v497, -inf
        %655 = vmax.xlane.f32.xlu0 %v654
        %v656 = vpop.xlane.xlu0 %655
        %v657 = vsel %vm653, %v500, -inf
        %658 = vmax.xlane.f32.xlu0 %v657
        %v659 = vpop.xlane.xlu0 %658
        %v660 = vsel %vm653, %v547, -inf
        %661 = vmax.xlane.f32.xlu0 %v660
        %v662 = vpop.xlane.xlu0 %661
        %v663 = vsel %vm653, %v550, -inf
        %664 = vmax.xlane.f32.xlu0 %v663
        %v665 = vpop.xlane.xlu0 %664
        %v666 = vsel %vm653, %v597, -inf
        %667 = vmax.xlane.f32.xlu0 %v666
        %v668 = vpop.xlane.xlu0 %667
        %v669 = vsel %vm653, %v600, -inf
        %670 = vmax.xlane.f32.xlu0 %v669
        %v671 = vpop.xlane.xlu0 %670
        %v672 = vsel %vm653, %v647, -inf
        %673 = vmax.xlane.f32.xlu0 %v672
        %v674 = vpop.xlane.xlu0 %673
        %v675 = vsel %vm653, %v650, -inf
        %676 = vmax.xlane.f32.xlu0 %v675
        %v677 = vpop.xlane.xlu0 %676
        %v678 = vsub.f32 %v497, %v656
        %v679 = vsub.f32 %v500, %v659
        %v680 = vsub.f32 %v547, %v662
        %v681 = vsub.f32 %v550, %v665
        %v682 = vsub.f32 %v597, %v668
        %v683 = vsub.f32 %v600, %v671
        %v684 = vsub.f32 %v647, %v674
        %v685 = vsub.f32 %v650, %v677
        %v686 = vmul.f32 %v678, 1.442695
        %v687 = vpow.pop %v686
        %v688 = vmul.f32 %v679, 1.442695
        %v689 = vpow.pop %v688
        %v690 = vmul.f32 %v680, 1.442695
        %v691 = vpow.pop %v690
        %v692 = vmul.f32 %v681, 1.442695
        %v693 = vpow.pop %v692
        %v694 = vmul.f32 %v682, 1.442695
        %v695 = vpow.pop %v694
        %v696 = vmul.f32 %v683, 1.442695
        %v697 = vpow.pop %v696
        %v698 = vmul.f32 %v684, 1.442695
        %v699 = vpow.pop %v698
        %v700 = vmul.f32 %v685, 1.442695
        %v701 = vpow.pop %v700
        %v702 = vsel %vm653, %v687, 0.0
        %703 = vadd.xlane.f32.xlu0 %v702
        %v704 = vpop.xlane.xlu0 %703
        %v705 = vsel %vm653, %v689, 0.0
        %706 = vadd.xlane.f32.xlu0 %v705
        %v707 = vpop.xlane.xlu0 %706
        %v708 = vsel %vm653, %v691, 0.0
        %709 = vadd.xlane.f32.xlu0 %v708
        %v710 = vpop.xlane.xlu0 %709
        %v711 = vsel %vm653, %v693, 0.0
        %712 = vadd.xlane.f32.xlu0 %v711
        %v713 = vpop.xlane.xlu0 %712
        %v714 = vsel %vm653, %v695, 0.0
        %715 = vadd.xlane.f32.xlu0 %v714
        %v716 = vpop.xlane.xlu0 %715
        %v717 = vsel %vm653, %v697, 0.0
        %718 = vadd.xlane.f32.xlu0 %v717
        %v719 = vpop.xlane.xlu0 %718
        %v720 = vsel %vm653, %v699, 0.0
        %721 = vadd.xlane.f32.xlu0 %v720
        %v722 = vpop.xlane.xlu0 %721
        %v723 = vsel %vm653, %v701, 0.0
        %724 = vadd.xlane.f32.xlu0 %v723
        %v725 = vpop.xlane.xlu0 %724
        %v726 = vrcp.pop %v704
        %v727 = vrcp.pop %v707
        %v728 = vrcp.pop %v710
        %v729 = vrcp.pop %v713
        %v730 = vrcp.pop %v716
        %v731 = vrcp.pop %v719
        %v732 = vrcp.pop %v722
        %v733 = vrcp.pop %v725
        %v734 = vmul.f32 %v687, %v726
        %v735 = vmul.f32 %v689, %v727
        %v736 = vmul.f32 %v691, %v728
        %v737 = vmul.f32 %v693, %v729
        %v738 = vmul.f32 %v695, %v730
        %v739 = vmul.f32 %v697, %v731
        %v740 = vmul.f32 %v699, %v732
        %v741 = vmul.f32 %v701, %v733
        %v742 = vpack.c.bf16 %v735, %v734
        %v743 = vpack.c.bf16 %v737, %v736
        %v744 = vpack.c.bf16 %v739, %v738
        %v745 = vpack.c.bf16 %v741, %v740
        %746 = vrot.lane.b32.xlu0 %v448, 64
        %v747 = vpop.permute.xlu0 %746
        %v750 = vsel %vm653, %v742, 0
        %752 = vmatprep.subr.bf16.mxu0 0
        %753 = vmatpush1.bf16.msra.mxu0 %v747
        %754 = vmatprep.subr.bf16.mxu0 0
        %755 = vmatpush1.bf16.msra.mxu0 0
        %756 = vmatprep.subr.bf16.mxu0 0
        %757 = vmatpush1.bf16.msra.mxu0 0
        %758 = vmatprep.subr.bf16.mxu0 0
        %759 = vmatpush1.bf16.msra.mxu0 0
        %760 = vmatprep.subr.bf16.mxu0 0
        %761 = vmatpush1.bf16.msra.mxu0 0
        %762 = vmatprep.subr.bf16.mxu0 0
        %763 = vmatpush1.bf16.msra.mxu0 0
        %764 = vmatprep.subr.bf16.mxu0 0
        %765 = vmatpush1.bf16.msra.mxu0 0
        %766 = vmatprep.subr.bf16.mxu0 0
        %767 = vmatpush1.bf16.msra.mxu0 0
        %768 = vmatprep.subr.bf16.mxu0 0
        %769 = vmatpush1.bf16.msra.mxu0 0
        %770 = vmatprep.subr.bf16.mxu0 0
        %771 = vmatpush1.bf16.msra.mxu0 0
        %772 = vmatprep.subr.bf16.mxu0 0
        %773 = vmatpush1.bf16.msra.mxu0 0
        %774 = vmatprep.subr.bf16.mxu0 0
        %775 = vmatpush1.bf16.msra.mxu0 0
        %776 = vmatprep.subr.bf16.mxu0 0
        %777 = vmatpush1.bf16.msra.mxu0 0
        %778 = vmatprep.subr.bf16.mxu0 0
        %779 = vmatpush1.bf16.msra.mxu0 0
        %780 = vmatprep.subr.bf16.mxu0 0
        %781 = vmatpush1.bf16.msra.mxu0 0
        %782 = vmatprep.subr.bf16.mxu0 0
        %783 = vmatpush1.bf16.msra.mxu0 0
        %784 = vmatprep.mubr.bf16.mxu0 0
        %785 = vmatmul.mubr.bf16.gmra.mrb[0].mxu0 %v750
        %v786 = vpop.f32.mrb[0].mxu0
        %v787 = vadd.f32 0.0, %v786
        %v788 = vpop.f32.mrb[0].mxu0
        %v789 = vpop.f32.mrb[0].mxu0
        %v790 = vadd.f32 0.0, %v789
        %v791 = vpop.f32.mrb[0].mxu0
        %792 = vdwg.mxu0
        %793 = vrot.lane.b32.xlu0 %v449, 64
        %v794 = vpop.permute.xlu0 %793
        %v797 = vsel %vm653, %v743, 0
        %799 = vmatprep.subr.bf16.mxu0 0
        %800 = vmatpush1.bf16.msra.mxu0 %v794
        %801 = vmatprep.subr.bf16.mxu0 0
        %802 = vmatpush1.bf16.msra.mxu0 0
        %803 = vmatprep.subr.bf16.mxu0 0
        %804 = vmatpush1.bf16.msra.mxu0 0
        %805 = vmatprep.subr.bf16.mxu0 0
        %806 = vmatpush1.bf16.msra.mxu0 0
        %807 = vmatprep.subr.bf16.mxu0 0
        %808 = vmatpush1.bf16.msra.mxu0 0
        %809 = vmatprep.subr.bf16.mxu0 0
        %810 = vmatpush1.bf16.msra.mxu0 0
        %811 = vmatprep.subr.bf16.mxu0 0
        %812 = vmatpush1.bf16.msra.mxu0 0
        %813 = vmatprep.subr.bf16.mxu0 0
        %814 = vmatpush1.bf16.msra.mxu0 0
        %815 = vmatprep.subr.bf16.mxu0 0
        %816 = vmatpush1.bf16.msra.mxu0 0
        %817 = vmatprep.subr.bf16.mxu0 0
        %818 = vmatpush1.bf16.msra.mxu0 0
        %819 = vmatprep.subr.bf16.mxu0 0
        %820 = vmatpush1.bf16.msra.mxu0 0
        %821 = vmatprep.subr.bf16.mxu0 0
        %822 = vmatpush1.bf16.msra.mxu0 0
        %823 = vmatprep.subr.bf16.mxu0 0
        %824 = vmatpush1.bf16.msra.mxu0 0
        %825 = vmatprep.subr.bf16.mxu0 0
        %826 = vmatpush1.bf16.msra.mxu0 0
        %827 = vmatprep.subr.bf16.mxu0 0
        %828 = vmatpush1.bf16.msra.mxu0 0
        %829 = vmatprep.subr.bf16.mxu0 0
        %830 = vmatpush1.bf16.msra.mxu0 0
        %831 = vmatprep.mubr.bf16.mxu0 0
        %832 = vmatmul.mubr.bf16.gmra.mrb[0].mxu0 %v797
        %v833 = vpop.f32.mrb[0].mxu0
        %v834 = vadd.f32 0.0, %v833
        %v835 = vpop.f32.mrb[0].mxu0
        %v836 = vpop.f32.mrb[0].mxu0
        %v837 = vadd.f32 0.0, %v836
        %v838 = vpop.f32.mrb[0].mxu0
        %839 = vdwg.mxu0
        %840 = vrot.lane.b32.xlu0 %v450, 64
        %v841 = vpop.permute.xlu0 %840
        %v844 = vsel %vm653, %v744, 0
        %846 = vmatprep.subr.bf16.mxu0 0
        %847 = vmatpush1.bf16.msra.mxu0 %v841
        %848 = vmatprep.subr.bf16.mxu0 0
        %849 = vmatpush1.bf16.msra.mxu0 0
        %850 = vmatprep.subr.bf16.mxu0 0
        %851 = vmatpush1.bf16.msra.mxu0 0
        %852 = vmatprep.subr.bf16.mxu0 0
        %853 = vmatpush1.bf16.msra.mxu0 0
        %854 = vmatprep.subr.bf16.mxu0 0
        %855 = vmatpush1.bf16.msra.mxu0 0
        %856 = vmatprep.subr.bf16.mxu0 0
        %857 = vmatpush1.bf16.msra.mxu0 0
        %858 = vmatprep.subr.bf16.mxu0 0
        %859 = vmatpush1.bf16.msra.mxu0 0
        %860 = vmatprep.subr.bf16.mxu0 0
        %861 = vmatpush1.bf16.msra.mxu0 0
        %862 = vmatprep.subr.bf16.mxu0 0
        %863 = vmatpush1.bf16.msra.mxu0 0
        %864 = vmatprep.subr.bf16.mxu0 0
        %865 = vmatpush1.bf16.msra.mxu0 0
        %866 = vmatprep.subr.bf16.mxu0 0
        %867 = vmatpush1.bf16.msra.mxu0 0
        %868 = vmatprep.subr.bf16.mxu0 0
        %869 = vmatpush1.bf16.msra.mxu0 0
        %870 = vmatprep.subr.bf16.mxu0 0
        %871 = vmatpush1.bf16.msra.mxu0 0
        %872 = vmatprep.subr.bf16.mxu0 0
        %873 = vmatpush1.bf16.msra.mxu0 0
        %874 = vmatprep.subr.bf16.mxu0 0
        %875 = vmatpush1.bf16.msra.mxu0 0
        %876 = vmatprep.subr.bf16.mxu0 0
        %877 = vmatpush1.bf16.msra.mxu0 0
        %878 = vmatprep.mubr.bf16.mxu0 0
        %879 = vmatmul.mubr.bf16.gmra.mrb[0].mxu0 %v844
        %v880 = vpop.f32.mrb[0].mxu0
        %v881 = vadd.f32 0.0, %v880
        %v882 = vpop.f32.mrb[0].mxu0
        %v883 = vpop.f32.mrb[0].mxu0
        %v884 = vadd.f32 0.0, %v883
        %v885 = vpop.f32.mrb[0].mxu0
        %886 = vdwg.mxu0
        %887 = vrot.lane.b32.xlu0 %v451, 64
        %v888 = vpop.permute.xlu0 %887
        %v891 = vsel %vm653, %v745, 0
        %893 = vmatprep.subr.bf16.mxu0 0
        %894 = vmatpush1.bf16.msra.mxu0 %v888
        %895 = vmatprep.subr.bf16.mxu0 0
        %896 = vmatpush1.bf16.msra.mxu0 0
        %897 = vmatprep.subr.bf16.mxu0 0
        %898 = vmatpush1.bf16.msra.mxu0 0
        %899 = vmatprep.subr.bf16.mxu0 0
        %900 = vmatpush1.bf16.msra.mxu0 0
        %901 = vmatprep.subr.bf16.mxu0 0
        %902 = vmatpush1.bf16.msra.mxu0 0
        %903 = vmatprep.subr.bf16.mxu0 0
        %904 = vmatpush1.bf16.msra.mxu0 0
        %905 = vmatprep.subr.bf16.mxu0 0
        %906 = vmatpush1.bf16.msra.mxu0 0
        %907 = vmatprep.subr.bf16.mxu0 0
        %908 = vmatpush1.bf16.msra.mxu0 0
        %909 = vmatprep.subr.bf16.mxu0 0
        %910 = vmatpush1.bf16.msra.mxu0 0
        %911 = vmatprep.subr.bf16.mxu0 0
        %912 = vmatpush1.bf16.msra.mxu0 0
        %913 = vmatprep.subr.bf16.mxu0 0
        %914 = vmatpush1.bf16.msra.mxu0 0
        %915 = vmatprep.subr.bf16.mxu0 0
        %916 = vmatpush1.bf16.msra.mxu0 0
        %917 = vmatprep.subr.bf16.mxu0 0
        %918 = vmatpush1.bf16.msra.mxu0 0
        %919 = vmatprep.subr.bf16.mxu0 0
        %920 = vmatpush1.bf16.msra.mxu0 0
        %921 = vmatprep.subr.bf16.mxu0 0
        %922 = vmatpush1.bf16.msra.mxu0 0
        %923 = vmatprep.subr.bf16.mxu0 0
        %924 = vmatpush1.bf16.msra.mxu0 0
        %925 = vmatprep.mubr.bf16.mxu0 0
        %926 = vmatmul.mubr.bf16.gmra.mrb[0].mxu0 %v891
        %v927 = vpop.f32.mrb[0].mxu0
        %v928 = vadd.f32 0.0, %v927
        %v929 = vpop.f32.mrb[0].mxu0
        %v930 = vpop.f32.mrb[0].mxu0
        %v931 = vadd.f32 0.0, %v930
        %v932 = vpop.f32.mrb[0].mxu0
        %933 = vdwg.mxu0
        %v934 = vpack.c.bf16 %v790, %v787
        %v935 = vpack.c.bf16 %v837, %v834
        %v936 = vpack.c.bf16 %v884, %v881
        %v937 = vpack.c.bf16 %v931, %v928
        %938 = vst.msk [vmem:[#allocation3] sm:$0xff] %vm455, %v934
        %939 = vst.msk [vmem:[#allocation3 + $0x8] sm:$0xff] %vm455, %v935
        %940 = vst.msk [vmem:[#allocation3 + $0x10] sm:$0xff] %vm455, %v936
        %941 = vst.msk [vmem:[#allocation3 + $0x18] sm:$0xff] %vm455, %v937
        %v942 = vld [vmem:[#allocation2] sm:$0xff]
        %v943 = vld [vmem:[#allocation2 + $0x8] sm:$0xff]
        %v944 = vld [vmem:[#allocation2 + $0x10] sm:$0xff]
        %v945 = vld [vmem:[#allocation2 + $0x18] sm:$0xff]
        %947 = vrot.lane.b32.xlu0 %v942, 120
        %v948 = vpop.permute.xlu0 %947
        %949 = vrot.lane.b32.xlu0 %v942, 88
        %v950 = vpop.permute.xlu0 %949
        %v952 = vsel %vm455, %v948, 0
        %v955 = vsel %vm455, %v950, 0
        %957 = vmatprep.subr.bf16.mxu0 0
        %958 = vmatpush1.bf16.xpose.msra.mxu0 %v955
        %959 = vmatprep.subr.bf16.mxu0 0
        %960 = vmatpush1.bf16.xpose.msra.mxu0 0
        %961 = vmatprep.subr.bf16.mxu0 0
        %962 = vmatpush1.bf16.xpose.msra.mxu0 0
        %963 = vmatprep.subr.bf16.mxu0 0
        %964 = vmatpush1.bf16.xpose.msra.mxu0 0
        %965 = vmatprep.subr.bf16.mxu0 0
        %966 = vmatpush1.bf16.xpose.msra.mxu0 0
        %967 = vmatprep.subr.bf16.mxu0 0
        %968 = vmatpush1.bf16.xpose.msra.mxu0 0
        %969 = vmatprep.subr.bf16.mxu0 0
        %970 = vmatpush1.bf16.xpose.msra.mxu0 0
        %971 = vmatprep.subr.bf16.mxu0 0
        %972 = vmatpush1.bf16.xpose.msra.mxu0 0
        %973 = vmatprep.subr.bf16.mxu0 0
        %974 = vmatpush1.bf16.xpose.msra.mxu0 0
        %975 = vmatprep.subr.bf16.mxu0 0
        %976 = vmatpush1.bf16.xpose.msra.mxu0 0
        %977 = vmatprep.subr.bf16.mxu0 0
        %978 = vmatpush1.bf16.xpose.msra.mxu0 0
        %979 = vmatprep.subr.bf16.mxu0 0
        %980 = vmatpush1.bf16.xpose.msra.mxu0 0
        %981 = vmatprep.subr.bf16.mxu0 0
        %982 = vmatpush1.bf16.xpose.msra.mxu0 0
        %983 = vmatprep.subr.bf16.mxu0 0
        %984 = vmatpush1.bf16.xpose.msra.mxu0 0
        %985 = vmatprep.subr.bf16.mxu0 0
        %986 = vmatpush1.bf16.xpose.msra.mxu0 0
        %987 = vmatprep.subr.bf16.mxu0 0
        %988 = vmatpush1.bf16.xpose.msra.mxu0 0
        %989 = vmatprep.mubr.bf16.mxu0 0
        %990 = vmatmul.mubr.bf16.gmra.mrb[0].mxu0 %v952
        %v991 = vpop.f32.mrb[0].mxu0
        %v992 = vadd.f32 %v442, %v991
        %v993 = vpop.f32.mrb[0].mxu0
        %v994 = vpop.f32.mrb[0].mxu0
        %v995 = vadd.f32 %v443, %v994
        %v996 = vpop.f32.mrb[0].mxu0
        %997 = vdwg.mxu0
        %999 = vrot.lane.b32.xlu0 %v943, 120
        %v1000 = vpop.permute.xlu0 %999
        %1001 = vrot.lane.b32.xlu0 %v943, 88
        %v1002 = vpop.permute.xlu0 %1001
        %v1004 = vsel %vm455, %v1000, 0
        %v1007 = vsel %vm455, %v1002, 0
        %1009 = vmatprep.subr.bf16.mxu0 0
        %1010 = vmatpush1.bf16.xpose.msra.mxu0 %v1007
        %1011 = vmatprep.subr.bf16.mxu0 0
        %1012 = vmatpush1.bf16.xpose.msra.mxu0 0
        %1013 = vmatprep.subr.bf16.mxu0 0
        %1014 = vmatpush1.bf16.xpose.msra.mxu0 0
        %1015 = vmatprep.subr.bf16.mxu0 0
        %1016 = vmatpush1.bf16.xpose.msra.mxu0 0
        %1017 = vmatprep.subr.bf16.mxu0 0
        %1018 = vmatpush1.bf16.xpose.msra.mxu0 0
        %1019 = vmatprep.subr.bf16.mxu0 0
        %1020 = vmatpush1.bf16.xpose.msra.mxu0 0
        %1021 = vmatprep.subr.bf16.mxu0 0
        %1022 = vmatpush1.bf16.xpose.msra.mxu0 0
        %1023 = vmatprep.subr.bf16.mxu0 0
        %1024 = vmatpush1.bf16.xpose.msra.mxu0 0
        %1025 = vmatprep.subr.bf16.mxu0 0
        %1026 = vmatpush1.bf16.xpose.msra.mxu0 0
        %1027 = vmatprep.subr.bf16.mxu0 0
        %1028 = vmatpush1.bf16.xpose.msra.mxu0 0
        %1029 = vmatprep.subr.bf16.mxu0 0
        %1030 = vmatpush1.bf16.xpose.msra.mxu0 0
        %1031 = vmatprep.subr.bf16.mxu0 0
        %1032 = vmatpush1.bf16.xpose.msra.mxu0 0
        %1033 = vmatprep.subr.bf16.mxu0 0
        %1034 = vmatpush1.bf16.xpose.msra.mxu0 0
        %1035 = vmatprep.subr.bf16.mxu0 0
        %1036 = vmatpush1.bf16.xpose.msra.mxu0 0
        %1037 = vmatprep.subr.bf16.mxu0 0
        %1038 = vmatpush1.bf16.xpose.msra.mxu0 0
        %1039 = vmatprep.subr.bf16.mxu0 0
        %1040 = vmatpush1.bf16.xpose.msra.mxu0 0
        %1041 = vmatprep.mubr.bf16.mxu0 0
        %1042 = vmatmul.mubr.bf16.gmra.mrb[0].mxu0 %v1004
        %v1043 = vpop.f32.mrb[0].mxu0
        %v1044 = vadd.f32 %v442, %v1043
        %v1045 = vpop.f32.mrb[0].mxu0
        %v1046 = vpop.f32.mrb[0].mxu0
        %v1047 = vadd.f32 %v443, %v1046
        %v1048 = vpop.f32.mrb[0].mxu0
        %1049 = vdwg.mxu0
        %1051 = vrot.lane.b32.xlu0 %v944, 120
        %v1052 = vpop.permute.xlu0 %1051
        %1053 = vrot.lane.b32.xlu0 %v944, 88
        %v1054 = vpop.permute.xlu0 %1053
        %v1056 = vsel %vm455, %v1052, 0
        %v1059 = vsel %vm455, %v1054, 0
        %1061 = vmatprep.subr.bf16.mxu0 0
        %1062 = vmatpush1.bf16.xpose.msra.mxu0 %v1059
        %1063 = vmatprep.subr.bf16.mxu0 0
        %1064 = vmatpush1.bf16.xpose.msra.mxu0 0
        %1065 = vmatprep.subr.bf16.mxu0 0
        %1066 = vmatpush1.bf16.xpose.msra.mxu0 0
        %1067 = vmatprep.subr.bf16.mxu0 0
        %1068 = vmatpush1.bf16.xpose.msra.mxu0 0
        %1069 = vmatprep.subr.bf16.mxu0 0
        %1070 = vmatpush1.bf16.xpose.msra.mxu0 0
        %1071 = vmatprep.subr.bf16.mxu0 0
        %1072 = vmatpush1.bf16.xpose.msra.mxu0 0
        %1073 = vmatprep.subr.bf16.mxu0 0
        %1074 = vmatpush1.bf16.xpose.msra.mxu0 0
        %1075 = vmatprep.subr.bf16.mxu0 0
        %1076 = vmatpush1.bf16.xpose.msra.mxu0 0
        %1077 = vmatprep.subr.bf16.mxu0 0
        %1078 = vmatpush1.bf16.xpose.msra.mxu0 0
        %1079 = vmatprep.subr.bf16.mxu0 0
        %1080 = vmatpush1.bf16.xpose.msra.mxu0 0
        %1081 = vmatprep.subr.bf16.mxu0 0
        %1082 = vmatpush1.bf16.xpose.msra.mxu0 0
        %1083 = vmatprep.subr.bf16.mxu0 0
        %1084 = vmatpush1.bf16.xpose.msra.mxu0 0
        %1085 = vmatprep.subr.bf16.mxu0 0
        %1086 = vmatpush1.bf16.xpose.msra.mxu0 0
        %1087 = vmatprep.subr.bf16.mxu0 0
        %1088 = vmatpush1.bf16.xpose.msra.mxu0 0
        %1089 = vmatprep.subr.bf16.mxu0 0
        %1090 = vmatpush1.bf16.xpose.msra.mxu0 0
        %1091 = vmatprep.subr.bf16.mxu0 0
        %1092 = vmatpush1.bf16.xpose.msra.mxu0 0
        %1093 = vmatprep.mubr.bf16.mxu0 0
        %1094 = vmatmul.mubr.bf16.gmra.mrb[0].mxu0 %v1056
        %v1095 = vpop.f32.mrb[0].mxu0
        %v1096 = vadd.f32 %v442, %v1095
        %v1097 = vpop.f32.mrb[0].mxu0
        %v1098 = vpop.f32.mrb[0].mxu0
        %v1099 = vadd.f32 %v443, %v1098
        %v1100 = vpop.f32.mrb[0].mxu0
        %1101 = vdwg.mxu0
        %1103 = vrot.lane.b32.xlu0 %v945, 120
        %v1104 = vpop.permute.xlu0 %1103
        %1105 = vrot.lane.b32.xlu0 %v945, 88
        %v1106 = vpop.permute.xlu0 %1105
        %v1108 = vsel %vm455, %v1104, 0
        %v1111 = vsel %vm455, %v1106, 0
        %1113 = vmatprep.subr.bf16.mxu0 0
        %1114 = vmatpush1.bf16.xpose.msra.mxu0 %v1111
        %1115 = vmatprep.subr.bf16.mxu0 0
        %1116 = vmatpush1.bf16.xpose.msra.mxu0 0
        %1117 = vmatprep.subr.bf16.mxu0 0
        %1118 = vmatpush1.bf16.xpose.msra.mxu0 0
        %1119 = vmatprep.subr.bf16.mxu0 0
        %1120 = vmatpush1.bf16.xpose.msra.mxu0 0
        %1121 = vmatprep.subr.bf16.mxu0 0
        %1122 = vmatpush1.bf16.xpose.msra.mxu0 0
        %1123 = vmatprep.subr.bf16.mxu0 0
        %1124 = vmatpush1.bf16.xpose.msra.mxu0 0
        %1125 = vmatprep.subr.bf16.mxu0 0
        %1126 = vmatpush1.bf16.xpose.msra.mxu0 0
        %1127 = vmatprep.subr.bf16.mxu0 0
        %1128 = vmatpush1.bf16.xpose.msra.mxu0 0
        %1129 = vmatprep.subr.bf16.mxu0 0
        %1130 = vmatpush1.bf16.xpose.msra.mxu0 0
        %1131 = vmatprep.subr.bf16.mxu0 0
        %1132 = vmatpush1.bf16.xpose.msra.mxu0 0
        %1133 = vmatprep.subr.bf16.mxu0 0
        %1134 = vmatpush1.bf16.xpose.msra.mxu0 0
        %1135 = vmatprep.subr.bf16.mxu0 0
        %1136 = vmatpush1.bf16.xpose.msra.mxu0 0
        %1137 = vmatprep.subr.bf16.mxu0 0
        %1138 = vmatpush1.bf16.xpose.msra.mxu0 0
        %1139 = vmatprep.subr.bf16.mxu0 0
        %1140 = vmatpush1.bf16.xpose.msra.mxu0 0
        %1141 = vmatprep.subr.bf16.mxu0 0
        %1142 = vmatpush1.bf16.xpose.msra.mxu0 0
        %1143 = vmatprep.subr.bf16.mxu0 0
        %1144 = vmatpush1.bf16.xpose.msra.mxu0 0
        %1145 = vmatprep.mubr.bf16.mxu0 0
        %1146 = vmatmul.mubr.bf16.gmra.mrb[0].mxu0 %v1108
        %v1147 = vpop.f32.mrb[0].mxu0
        %v1148 = vadd.f32 %v442, %v1147
        %v1149 = vpop.f32.mrb[0].mxu0
        %v1150 = vpop.f32.mrb[0].mxu0
        %v1151 = vadd.f32 %v443, %v1150
        %v1152 = vpop.f32.mrb[0].mxu0
        %1153 = vdwg.mxu0
        %v1154 = vsel %vm653, %v992, -inf
        %1155 = vmax.xlane.f32.xlu0 %v1154
        %v1156 = vpop.xlane.xlu0 %1155
        %v1157 = vsel %vm653, %v995, -inf
        %1158 = vmax.xlane.f32.xlu0 %v1157
        %v1159 = vpop.xlane.xlu0 %1158
        %v1160 = vsel %vm653, %v1044, -inf
        %1161 = vmax.xlane.f32.xlu0 %v1160
        %v1162 = vpop.xlane.xlu0 %1161
        %v1163 = vsel %vm653, %v1047, -inf
        %1164 = vmax.xlane.f32.xlu0 %v1163
        %v1165 = vpop.xlane.xlu0 %1164
        %v1166 = vsel %vm653, %v1096, -inf
        %1167 = vmax.xlane.f32.xlu0 %v1166
        %v1168 = vpop.xlane.xlu0 %1167
        %v1169 = vsel %vm653, %v1099, -inf
        %1170 = vmax.xlane.f32.xlu0 %v1169
        %v1171 = vpop.xlane.xlu0 %1170
        %v1172 = vsel %vm653, %v1148, -inf
        %1173 = vmax.xlane.f32.xlu0 %v1172
        %v1174 = vpop.xlane.xlu0 %1173
        %v1175 = vsel %vm653, %v1151, -inf
        %1176 = vmax.xlane.f32.xlu0 %v1175
        %v1177 = vpop.xlane.xlu0 %1176
        %v1178 = vsub.f32 %v992, %v1156
        %v1179 = vsub.f32 %v995, %v1159
        %v1180 = vsub.f32 %v1044, %v1162
        %v1181 = vsub.f32 %v1047, %v1165
        %v1182 = vsub.f32 %v1096, %v1168
        %v1183 = vsub.f32 %v1099, %v1171
        %v1184 = vsub.f32 %v1148, %v1174
        %v1185 = vsub.f32 %v1151, %v1177
        %v1186 = vmul.f32 %v1178, 1.442695
        %v1187 = vpow.pop %v1186
        %v1188 = vmul.f32 %v1179, 1.442695
        %v1189 = vpow.pop %v1188
        %v1190 = vmul.f32 %v1180, 1.442695
        %v1191 = vpow.pop %v1190
        %v1192 = vmul.f32 %v1181, 1.442695
        %v1193 = vpow.pop %v1192
        %v1194 = vmul.f32 %v1182, 1.442695
        %v1195 = vpow.pop %v1194
        %v1196 = vmul.f32 %v1183, 1.442695
        %v1197 = vpow.pop %v1196
        %v1198 = vmul.f32 %v1184, 1.442695
        %v1199 = vpow.pop %v1198
        %v1200 = vmul.f32 %v1185, 1.442695
        %v1201 = vpow.pop %v1200
        %v1202 = vsel %vm653, %v1187, 0.0
        %1203 = vadd.xlane.f32.xlu0 %v1202
        %v1204 = vpop.xlane.xlu0 %1203
        %v1205 = vsel %vm653, %v1189, 0.0
        %1206 = vadd.xlane.f32.xlu0 %v1205
        %v1207 = vpop.xlane.xlu0 %1206
        %v1208 = vsel %vm653, %v1191, 0.0
        %1209 = vadd.xlane.f32.xlu0 %v1208
        %v1210 = vpop.xlane.xlu0 %1209
        %v1211 = vsel %vm653, %v1193, 0.0
        %1212 = vadd.xlane.f32.xlu0 %v1211
        %v1213 = vpop.xlane.xlu0 %1212
        %v1214 = vsel %vm653, %v1195, 0.0
        %1215 = vadd.xlane.f32.xlu0 %v1214
        %v1216 = vpop.xlane.xlu0 %1215
        %v1217 = vsel %vm653, %v1197, 0.0
        %1218 = vadd.xlane.f32.xlu0 %v1217
        %v1219 = vpop.xlane.xlu0 %1218
        %v1220 = vsel %vm653, %v1199, 0.0
        %1221 = vadd.xlane.f32.xlu0 %v1220
        %v1222 = vpop.xlane.xlu0 %1221
        %v1223 = vsel %vm653, %v1201, 0.0
        %1224 = vadd.xlane.f32.xlu0 %v1223
        %v1225 = vpop.xlane.xlu0 %1224
        %v1226 = vrcp.pop %v1204
        %v1227 = vrcp.pop %v1207
        %v1228 = vrcp.pop %v1210
        %v1229 = vrcp.pop %v1213
        %v1230 = vrcp.pop %v1216
        %v1231 = vrcp.pop %v1219
        %v1232 = vrcp.pop %v1222
        %v1233 = vrcp.pop %v1225
        %v1234 = vmul.f32 %v1187, %v1226
        %v1235 = vmul.f32 %v1189, %v1227
        %v1236 = vmul.f32 %v1191, %v1228
        %v1237 = vmul.f32 %v1193, %v1229
        %v1238 = vmul.f32 %v1195, %v1230
        %v1239 = vmul.f32 %v1197, %v1231
        %v1240 = vmul.f32 %v1199, %v1232
        %v1241 = vmul.f32 %v1201, %v1233
        %v1242 = vpack.c.bf16 %v1235, %v1234
        %v1243 = vpack.c.bf16 %v1237, %v1236
        %v1244 = vpack.c.bf16 %v1239, %v1238
        %v1245 = vpack.c.bf16 %v1241, %v1240
        %1246 = vrot.lane.b32.xlu0 %v942, 56
        %v1247 = vpop.permute.xlu0 %1246
        %v1250 = vsel %vm653, %v1242, 0
        %1252 = vmatprep.subr.bf16.mxu0 0
        %1253 = vmatpush1.bf16.msra.mxu0 %v1247
        %1254 = vmatprep.subr.bf16.mxu0 0
        %1255 = vmatpush1.bf16.msra.mxu0 0
        %1256 = vmatprep.subr.bf16.mxu0 0
        %1257 = vmatpush1.bf16.msra.mxu0 0
        %1258 = vmatprep.subr.bf16.mxu0 0
        %1259 = vmatpush1.bf16.msra.mxu0 0
        %1260 = vmatprep.subr.bf16.mxu0 0
        %1261 = vmatpush1.bf16.msra.mxu0 0
        %1262 = vmatprep.subr.bf16.mxu0 0
        %1263 = vmatpush1.bf16.msra.mxu0 0
        %1264 = vmatprep.subr.bf16.mxu0 0
        %1265 = vmatpush1.bf16.msra.mxu0 0
        %1266 = vmatprep.subr.bf16.mxu0 0
        %1267 = vmatpush1.bf16.msra.mxu0 0
        %1268 = vmatprep.subr.bf16.mxu0 0
        %1269 = vmatpush1.bf16.msra.mxu0 0
        %1270 = vmatprep.subr.bf16.mxu0 0
        %1271 = vmatpush1.bf16.msra.mxu0 0
        %1272 = vmatprep.subr.bf16.mxu0 0
        %1273 = vmatpush1.bf16.msra.mxu0 0
        %1274 = vmatprep.subr.bf16.mxu0 0
        %1275 = vmatpush1.bf16.msra.mxu0 0
        %1276 = vmatprep.subr.bf16.mxu0 0
        %1277 = vmatpush1.bf16.msra.mxu0 0
        %1278 = vmatprep.subr.bf16.mxu0 0
        %1279 = vmatpush1.bf16.msra.mxu0 0
        %1280 = vmatprep.subr.bf16.mxu0 0
        %1281 = vmatpush1.bf16.msra.mxu0 0
        %1282 = vmatprep.subr.bf16.mxu0 0
        %1283 = vmatpush1.bf16.msra.mxu0 0
        %1284 = vmatprep.mubr.bf16.mxu0 0
        %1285 = vmatmul.mubr.bf16.gmra.mrb[0].mxu0 %v1250
        %v1286 = vpop.f32.mrb[0].mxu0
        %v1287 = vadd.f32 0.0, %v1286
        %v1288 = vpop.f32.mrb[0].mxu0
        %v1289 = vpop.f32.mrb[0].mxu0
        %v1290 = vadd.f32 0.0, %v1289
        %v1291 = vpop.f32.mrb[0].mxu0
        %1292 = vdwg.mxu0
        %1293 = vrot.lane.b32.xlu0 %v943, 56
        %v1294 = vpop.permute.xlu0 %1293
        %v1297 = vsel %vm653, %v1243, 0
        %1299 = vmatprep.subr.bf16.mxu0 0
        %1300 = vmatpush1.bf16.msra.mxu0 %v1294
        %1301 = vmatprep.subr.bf16.mxu0 0
        %1302 = vmatpush1.bf16.msra.mxu0 0
        %1303 = vmatprep.subr.bf16.mxu0 0
        %1304 = vmatpush1.bf16.msra.mxu0 0
        %1305 = vmatprep.subr.bf16.mxu0 0
        %1306 = vmatpush1.bf16.msra.mxu0 0
        %1307 = vmatprep.subr.bf16.mxu0 0
        %1308 = vmatpush1.bf16.msra.mxu0 0
        %1309 = vmatprep.subr.bf16.mxu0 0
        %1310 = vmatpush1.bf16.msra.mxu0 0
        %1311 = vmatprep.subr.bf16.mxu0 0
        %1312 = vmatpush1.bf16.msra.mxu0 0
        %1313 = vmatprep.subr.bf16.mxu0 0
        %1314 = vmatpush1.bf16.msra.mxu0 0
        %1315 = vmatprep.subr.bf16.mxu0 0
        %1316 = vmatpush1.bf16.msra.mxu0 0
        %1317 = vmatprep.subr.bf16.mxu0 0
        %1318 = vmatpush1.bf16.msra.mxu0 0
        %1319 = vmatprep.subr.bf16.mxu0 0
        %1320 = vmatpush1.bf16.msra.mxu0 0
        %1321 = vmatprep.subr.bf16.mxu0 0
        %1322 = vmatpush1.bf16.msra.mxu0 0
        %1323 = vmatprep.subr.bf16.mxu0 0
        %1324 = vmatpush1.bf16.msra.mxu0 0
        %1325 = vmatprep.subr.bf16.mxu0 0
        %1326 = vmatpush1.bf16.msra.mxu0 0
        %1327 = vmatprep.subr.bf16.mxu0 0
        %1328 = vmatpush1.bf16.msra.mxu0 0
        %1329 = vmatprep.subr.bf16.mxu0 0
        %1330 = vmatpush1.bf16.msra.mxu0 0
        %1331 = vmatprep.mubr.bf16.mxu0 0
        %1332 = vmatmul.mubr.bf16.gmra.mrb[0].mxu0 %v1297
        %v1333 = vpop.f32.mrb[0].mxu0
        %v1334 = vadd.f32 0.0, %v1333
        %v1335 = vpop.f32.mrb[0].mxu0
        %v1336 = vpop.f32.mrb[0].mxu0
        %v1337 = vadd.f32 0.0, %v1336
        %v1338 = vpop.f32.mrb[0].mxu0
        %1339 = vdwg.mxu0
        %1340 = vrot.lane.b32.xlu0 %v944, 56
        %v1341 = vpop.permute.xlu0 %1340
        %v1344 = vsel %vm653, %v1244, 0
        %1346 = vmatprep.subr.bf16.mxu0 0
        %1347 = vmatpush1.bf16.msra.mxu0 %v1341
        %1348 = vmatprep.subr.bf16.mxu0 0
        %1349 = vmatpush1.bf16.msra.mxu0 0
        %1350 = vmatprep.subr.bf16.mxu0 0
        %1351 = vmatpush1.bf16.msra.mxu0 0
        %1352 = vmatprep.subr.bf16.mxu0 0
        %1353 = vmatpush1.bf16.msra.mxu0 0
        %1354 = vmatprep.subr.bf16.mxu0 0
        %1355 = vmatpush1.bf16.msra.mxu0 0
        %1356 = vmatprep.subr.bf16.mxu0 0
        %1357 = vmatpush1.bf16.msra.mxu0 0
        %1358 = vmatprep.subr.bf16.mxu0 0
        %1359 = vmatpush1.bf16.msra.mxu0 0
        %1360 = vmatprep.subr.bf16.mxu0 0
        %1361 = vmatpush1.bf16.msra.mxu0 0
        %1362 = vmatprep.subr.bf16.mxu0 0
        %1363 = vmatpush1.bf16.msra.mxu0 0
        %1364 = vmatprep.subr.bf16.mxu0 0
        %1365 = vmatpush1.bf16.msra.mxu0 0
        %1366 = vmatprep.subr.bf16.mxu0 0
        %1367 = vmatpush1.bf16.msra.mxu0 0
        %1368 = vmatprep.subr.bf16.mxu0 0
        %1369 = vmatpush1.bf16.msra.mxu0 0
        %1370 = vmatprep.subr.bf16.mxu0 0
        %1371 = vmatpush1.bf16.msra.mxu0 0
        %1372 = vmatprep.subr.bf16.mxu0 0
        %1373 = vmatpush1.bf16.msra.mxu0 0
        %1374 = vmatprep.subr.bf16.mxu0 0
        %1375 = vmatpush1.bf16.msra.mxu0 0
        %1376 = vmatprep.subr.bf16.mxu0 0
        %1377 = vmatpush1.bf16.msra.mxu0 0
        %1378 = vmatprep.mubr.bf16.mxu0 0
        %1379 = vmatmul.mubr.bf16.gmra.mrb[0].mxu0 %v1344
        %v1380 = vpop.f32.mrb[0].mxu0
        %v1381 = vadd.f32 0.0, %v1380
        %v1382 = vpop.f32.mrb[0].mxu0
        %v1383 = vpop.f32.mrb[0].mxu0
        %v1384 = vadd.f32 0.0, %v1383
        %v1385 = vpop.f32.mrb[0].mxu0
        %1386 = vdwg.mxu0
        %1387 = vrot.lane.b32.xlu0 %v945, 56
        %v1388 = vpop.permute.xlu0 %1387
        %v1391 = vsel %vm653, %v1245, 0
        %1393 = vmatprep.subr.bf16.mxu0 0
        %1394 = vmatpush1.bf16.msra.mxu0 %v1388
        %1395 = vmatprep.subr.bf16.mxu0 0
        %1396 = vmatpush1.bf16.msra.mxu0 0
        %1397 = vmatprep.subr.bf16.mxu0 0
        %1398 = vmatpush1.bf16.msra.mxu0 0
        %1399 = vmatprep.subr.bf16.mxu0 0
        %1400 = vmatpush1.bf16.msra.mxu0 0
        %1401 = vmatprep.subr.bf16.mxu0 0
        %1402 = vmatpush1.bf16.msra.mxu0 0
        %1403 = vmatprep.subr.bf16.mxu0 0
        %1404 = vmatpush1.bf16.msra.mxu0 0
        %1405 = vmatprep.subr.bf16.mxu0 0
        %1406 = vmatpush1.bf16.msra.mxu0 0
        %1407 = vmatprep.subr.bf16.mxu0 0
        %1408 = vmatpush1.bf16.msra.mxu0 0
        %1409 = vmatprep.subr.bf16.mxu0 0
        %1410 = vmatpush1.bf16.msra.mxu0 0
        %1411 = vmatprep.subr.bf16.mxu0 0
        %1412 = vmatpush1.bf16.msra.mxu0 0
        %1413 = vmatprep.subr.bf16.mxu0 0
        %1414 = vmatpush1.bf16.msra.mxu0 0
        %1415 = vmatprep.subr.bf16.mxu0 0
        %1416 = vmatpush1.bf16.msra.mxu0 0
        %1417 = vmatprep.subr.bf16.mxu0 0
        %1418 = vmatpush1.bf16.msra.mxu0 0
        %1419 = vmatprep.subr.bf16.mxu0 0
        %1420 = vmatpush1.bf16.msra.mxu0 0
        %1421 = vmatprep.subr.bf16.mxu0 0
        %1422 = vmatpush1.bf16.msra.mxu0 0
        %1423 = vmatprep.subr.bf16.mxu0 0
        %1424 = vmatpush1.bf16.msra.mxu0 0
        %1425 = vmatprep.mubr.bf16.mxu0 0
        %1426 = vmatmul.mubr.bf16.gmra.mrb[0].mxu0 %v1391
        %v1427 = vpop.f32.mrb[0].mxu0
        %v1428 = vadd.f32 0.0, %v1427
        %v1429 = vpop.f32.mrb[0].mxu0
        %v1430 = vpop.f32.mrb[0].mxu0
        %v1431 = vadd.f32 0.0, %v1430
        %v1432 = vpop.f32.mrb[0].mxu0
        %1433 = vdwg.mxu0
        %v1434 = vpack.c.bf16 %v1290, %v1287
        %v1435 = vpack.c.bf16 %v1337, %v1334
        %v1436 = vpack.c.bf16 %v1384, %v1381
        %v1437 = vpack.c.bf16 %v1431, %v1428
        %1442 = vrot.lane.b32.xlu0 %v1434, 8
        %v1443 = vpop.permute.xlu0 %1442
        %1444 = vrot.lane.b32.xlu0 %v1435, 8
        %v1445 = vpop.permute.xlu0 %1444
        %1446 = vrot.lane.b32.xlu0 %v1436, 8
        %v1447 = vpop.permute.xlu0 %1446
        %1448 = vrot.lane.b32.xlu0 %v1437, 8
        %v1449 = vpop.permute.xlu0 %1448
        %vm1454 = vcmask 130112
        %1455 = vst.msk [vmem:[#allocation3] sm:$0xff] %vm1454, %v1443
        %1456 = vst.msk [vmem:[#allocation3 + $0x8] sm:$0xff] %vm1454, %v1445
        %1457 = vst.msk [vmem:[#allocation3 + $0x10] sm:$0xff] %vm1454, %v1447
        %1458 = vst.msk [vmem:[#allocation3 + $0x18] sm:$0xff] %vm1454, %v1449
        %v1459 = vld [vmem:[#allocation2] sm:$0xff]
        %v1460 = vld [vmem:[#allocation2 + $0x8] sm:$0xff]
        %v1461 = vld [vmem:[#allocation2 + $0x10] sm:$0xff]
        %v1462 = vld [vmem:[#allocation2 + $0x18] sm:$0xff]
        %1464 = vrot.lane.b32.xlu0 %v1459, 112
        %v1465 = vpop.permute.xlu0 %1464
        %1466 = vrot.lane.b32.xlu0 %v1459, 80
        %v1467 = vpop.permute.xlu0 %1466
        %v1469 = vsel %vm455, %v1465, 0
        %v1472 = vsel %vm455, %v1467, 0
        %1474 = vmatprep.subr.bf16.mxu0 0
        %1475 = vmatpush1.bf16.xpose.msra.mxu0 %v1472
        %1476 = vmatprep.subr.bf16.mxu0 0
        %1477 = vmatpush1.bf16.xpose.msra.mxu0 0
        %1478 = vmatprep.subr.bf16.mxu0 0
        %1479 = vmatpush1.bf16.xpose.msra.mxu0 0
        %1480 = vmatprep.subr.bf16.mxu0 0
        %1481 = vmatpush1.bf16.xpose.msra.mxu0 0
        %1482 = vmatprep.subr.bf16.mxu0 0
        %1483 = vmatpush1.bf16.xpose.msra.mxu0 0
        %1484 = vmatprep.subr.bf16.mxu0 0
        %1485 = vmatpush1.bf16.xpose.msra.mxu0 0
        %1486 = vmatprep.subr.bf16.mxu0 0
        %1487 = vmatpush1.bf16.xpose.msra.mxu0 0
        %1488 = vmatprep.subr.bf16.mxu0 0
        %1489 = vmatpush1.bf16.xpose.msra.mxu0 0
        %1490 = vmatprep.subr.bf16.mxu0 0
        %1491 = vmatpush1.bf16.xpose.msra.mxu0 0
        %1492 = vmatprep.subr.bf16.mxu0 0
        %1493 = vmatpush1.bf16.xpose.msra.mxu0 0
        %1494 = vmatprep.subr.bf16.mxu0 0
        %1495 = vmatpush1.bf16.xpose.msra.mxu0 0
        %1496 = vmatprep.subr.bf16.mxu0 0
        %1497 = vmatpush1.bf16.xpose.msra.mxu0 0
        %1498 = vmatprep.subr.bf16.mxu0 0
        %1499 = vmatpush1.bf16.xpose.msra.mxu0 0
        %1500 = vmatprep.subr.bf16.mxu0 0
        %1501 = vmatpush1.bf16.xpose.msra.mxu0 0
        %1502 = vmatprep.subr.bf16.mxu0 0
        %1503 = vmatpush1.bf16.xpose.msra.mxu0 0
        %1504 = vmatprep.subr.bf16.mxu0 0
        %1505 = vmatpush1.bf16.xpose.msra.mxu0 0
        %1506 = vmatprep.mubr.bf16.mxu0 0
        %1507 = vmatmul.mubr.bf16.gmra.mrb[0].mxu0 %v1469
        %v1508 = vpop.f32.mrb[0].mxu0
        %v1509 = vadd.f32 %v444, %v1508
        %v1510 = vpop.f32.mrb[0].mxu0
        %v1511 = vpop.f32.mrb[0].mxu0
        %v1512 = vadd.f32 %v445, %v1511
        %v1513 = vpop.f32.mrb[0].mxu0
        %1514 = vdwg.mxu0
        %1516 = vrot.lane.b32.xlu0 %v1460, 112
        %v1517 = vpop.permute.xlu0 %1516
        %1518 = vrot.lane.b32.xlu0 %v1460, 80
        %v1519 = vpop.permute.xlu0 %1518
        %v1521 = vsel %vm455, %v1517, 0
        %v1524 = vsel %vm455, %v1519, 0
        %1526 = vmatprep.subr.bf16.mxu0 0
        %1527 = vmatpush1.bf16.xpose.msra.mxu0 %v1524
        %1528 = vmatprep.subr.bf16.mxu0 0
        %1529 = vmatpush1.bf16.xpose.msra.mxu0 0
        %1530 = vmatprep.subr.bf16.mxu0 0
        %1531 = vmatpush1.bf16.xpose.msra.mxu0 0
        %1532 = vmatprep.subr.bf16.mxu0 0
        %1533 = vmatpush1.bf16.xpose.msra.mxu0 0
        %1534 = vmatprep.subr.bf16.mxu0 0
        %1535 = vmatpush1.bf16.xpose.msra.mxu0 0
        %1536 = vmatprep.subr.bf16.mxu0 0
        %1537 = vmatpush1.bf16.xpose.msra.mxu0 0
        %1538 = vmatprep.subr.bf16.mxu0 0
        %1539 = vmatpush1.bf16.xpose.msra.mxu0 0
        %1540 = vmatprep.subr.bf16.mxu0 0
        %1541 = vmatpush1.bf16.xpose.msra.mxu0 0
        %1542 = vmatprep.subr.bf16.mxu0 0
        %1543 = vmatpush1.bf16.xpose.msra.mxu0 0
        %1544 = vmatprep.subr.bf16.mxu0 0
        %1545 = vmatpush1.bf16.xpose.msra.mxu0 0
        %1546 = vmatprep.subr.bf16.mxu0 0
        %1547 = vmatpush1.bf16.xpose.msra.mxu0 0
        %1548 = vmatprep.subr.bf16.mxu0 0
        %1549 = vmatpush1.bf16.xpose.msra.mxu0 0
        %1550 = vmatprep.subr.bf16.mxu0 0
        %1551 = vmatpush1.bf16.xpose.msra.mxu0 0
        %1552 = vmatprep.subr.bf16.mxu0 0
        %1553 = vmatpush1.bf16.xpose.msra.mxu0 0
        %1554 = vmatprep.subr.bf16.mxu0 0
        %1555 = vmatpush1.bf16.xpose.msra.mxu0 0
        %1556 = vmatprep.subr.bf16.mxu0 0
        %1557 = vmatpush1.bf16.xpose.msra.mxu0 0
        %1558 = vmatprep.mubr.bf16.mxu0 0
        %1559 = vmatmul.mubr.bf16.gmra.mrb[0].mxu0 %v1521
        %v1560 = vpop.f32.mrb[0].mxu0
        %v1561 = vadd.f32 %v444, %v1560
        %v1562 = vpop.f32.mrb[0].mxu0
        %v1563 = vpop.f32.mrb[0].mxu0
        %v1564 = vadd.f32 %v445, %v1563
        %v1565 = vpop.f32.mrb[0].mxu0
        %1566 = vdwg.mxu0
        %1568 = vrot.lane.b32.xlu0 %v1461, 112
        %v1569 = vpop.permute.xlu0 %1568
        %1570 = vrot.lane.b32.xlu0 %v1461, 80
        %v1571 = vpop.permute.xlu0 %1570
        %v1573 = vsel %vm455, %v1569, 0
        %v1576 = vsel %vm455, %v1571, 0
        %1578 = vmatprep.subr.bf16.mxu0 0
        %1579 = vmatpush1.bf16.xpose.msra.mxu0 %v1576
        %1580 = vmatprep.subr.bf16.mxu0 0
        %1581 = vmatpush1.bf16.xpose.msra.mxu0 0
        %1582 = vmatprep.subr.bf16.mxu0 0
        %1583 = vmatpush1.bf16.xpose.msra.mxu0 0
        %1584 = vmatprep.subr.bf16.mxu0 0
        %1585 = vmatpush1.bf16.xpose.msra.mxu0 0
        %1586 = vmatprep.subr.bf16.mxu0 0
        %1587 = vmatpush1.bf16.xpose.msra.mxu0 0
        %1588 = vmatprep.subr.bf16.mxu0 0
        %1589 = vmatpush1.bf16.xpose.msra.mxu0 0
        %1590 = vmatprep.subr.bf16.mxu0 0
        %1591 = vmatpush1.bf16.xpose.msra.mxu0 0
        %1592 = vmatprep.subr.bf16.mxu0 0
        %1593 = vmatpush1.bf16.xpose.msra.mxu0 0
        %1594 = vmatprep.subr.bf16.mxu0 0
        %1595 = vmatpush1.bf16.xpose.msra.mxu0 0
        %1596 = vmatprep.subr.bf16.mxu0 0
        %1597 = vmatpush1.bf16.xpose.msra.mxu0 0
        %1598 = vmatprep.subr.bf16.mxu0 0
        %1599 = vmatpush1.bf16.xpose.msra.mxu0 0
        %1600 = vmatprep.subr.bf16.mxu0 0
        %1601 = vmatpush1.bf16.xpose.msra.mxu0 0
        %1602 = vmatprep.subr.bf16.mxu0 0
        %1603 = vmatpush1.bf16.xpose.msra.mxu0 0
        %1604 = vmatprep.subr.bf16.mxu0 0
        %1605 = vmatpush1.bf16.xpose.msra.mxu0 0
        %1606 = vmatprep.subr.bf16.mxu0 0
        %1607 = vmatpush1.bf16.xpose.msra.mxu0 0
        %1608 = vmatprep.subr.bf16.mxu0 0
        %1609 = vmatpush1.bf16.xpose.msra.mxu0 0
        %1610 = vmatprep.mubr.bf16.mxu0 0
        %1611 = vmatmul.mubr.bf16.gmra.mrb[0].mxu0 %v1573
        %v1612 = vpop.f32.mrb[0].mxu0
        %v1613 = vadd.f32 %v444, %v1612
        %v1614 = vpop.f32.mrb[0].mxu0
        %v1615 = vpop.f32.mrb[0].mxu0
        %v1616 = vadd.f32 %v445, %v1615
        %v1617 = vpop.f32.mrb[0].mxu0
        %1618 = vdwg.mxu0
        %1620 = vrot.lane.b32.xlu0 %v1462, 112
        %v1621 = vpop.permute.xlu0 %1620
        %1622 = vrot.lane.b32.xlu0 %v1462, 80
        %v1623 = vpop.permute.xlu0 %1622
        %v1625 = vsel %vm455, %v1621, 0
        %v1628 = vsel %vm455, %v1623, 0
        %1630 = vmatprep.subr.bf16.mxu0 0
        %1631 = vmatpush1.bf16.xpose.msra.mxu0 %v1628
        %1632 = vmatprep.subr.bf16.mxu0 0
        %1633 = vmatpush1.bf16.xpose.msra.mxu0 0
        %1634 = vmatprep.subr.bf16.mxu0 0
        %1635 = vmatpush1.bf16.xpose.msra.mxu0 0
        %1636 = vmatprep.subr.bf16.mxu0 0
        %1637 = vmatpush1.bf16.xpose.msra.mxu0 0
        %1638 = vmatprep.subr.bf16.mxu0 0
        %1639 = vmatpush1.bf16.xpose.msra.mxu0 0
        %1640 = vmatprep.subr.bf16.mxu0 0
        %1641 = vmatpush1.bf16.xpose.msra.mxu0 0
        %1642 = vmatprep.subr.bf16.mxu0 0
        %1643 = vmatpush1.bf16.xpose.msra.mxu0 0
        %1644 = vmatprep.subr.bf16.mxu0 0
        %1645 = vmatpush1.bf16.xpose.msra.mxu0 0
        %1646 = vmatprep.subr.bf16.mxu0 0
        %1647 = vmatpush1.bf16.xpose.msra.mxu0 0
        %1648 = vmatprep.subr.bf16.mxu0 0
        %1649 = vmatpush1.bf16.xpose.msra.mxu0 0
        %1650 = vmatprep.subr.bf16.mxu0 0
        %1651 = vmatpush1.bf16.xpose.msra.mxu0 0
        %1652 = vmatprep.subr.bf16.mxu0 0
        %1653 = vmatpush1.bf16.xpose.msra.mxu0 0
        %1654 = vmatprep.subr.bf16.mxu0 0
        %1655 = vmatpush1.bf16.xpose.msra.mxu0 0
        %1656 = vmatprep.subr.bf16.mxu0 0
        %1657 = vmatpush1.bf16.xpose.msra.mxu0 0
        %1658 = vmatprep.subr.bf16.mxu0 0
        %1659 = vmatpush1.bf16.xpose.msra.mxu0 0
        %1660 = vmatprep.subr.bf16.mxu0 0
        %1661 = vmatpush1.bf16.xpose.msra.mxu0 0
        %1662 = vmatprep.mubr.bf16.mxu0 0
        %1663 = vmatmul.mubr.bf16.gmra.mrb[0].mxu0 %v1625
        %v1664 = vpop.f32.mrb[0].mxu0
        %v1665 = vadd.f32 %v444, %v1664
        %v1666 = vpop.f32.mrb[0].mxu0
        %v1667 = vpop.f32.mrb[0].mxu0
        %v1668 = vadd.f32 %v445, %v1667
        %v1669 = vpop.f32.mrb[0].mxu0
        %1670 = vdwg.mxu0
        %v1671 = vsel %vm653, %v1509, -inf
        %1672 = vmax.xlane.f32.xlu0 %v1671
        %v1673 = vpop.xlane.xlu0 %1672
        %v1674 = vsel %vm653, %v1512, -inf
        %1675 = vmax.xlane.f32.xlu0 %v1674
        %v1676 = vpop.xlane.xlu0 %1675
        %v1677 = vsel %vm653, %v1561, -inf
        %1678 = vmax.xlane.f32.xlu0 %v1677
        %v1679 = vpop.xlane.xlu0 %1678
        %v1680 = vsel %vm653, %v1564, -inf
        %1681 = vmax.xlane.f32.xlu0 %v1680
        %v1682 = vpop.xlane.xlu0 %1681
        %v1683 = vsel %vm653, %v1613, -inf
        %1684 = vmax.xlane.f32.xlu0 %v1683
        %v1685 = vpop.xlane.xlu0 %1684
        %v1686 = vsel %vm653, %v1616, -inf
        %1687 = vmax.xlane.f32.xlu0 %v1686
        %v1688 = vpop.xlane.xlu0 %1687
        %v1689 = vsel %vm653, %v1665, -inf
        %1690 = vmax.xlane.f32.xlu0 %v1689
        %v1691 = vpop.xlane.xlu0 %1690
        %v1692 = vsel %vm653, %v1668, -inf
        %1693 = vmax.xlane.f32.xlu0 %v1692
        %v1694 = vpop.xlane.xlu0 %1693
        %v1695 = vsub.f32 %v1509, %v1673
        %v1696 = vsub.f32 %v1512, %v1676
        %v1697 = vsub.f32 %v1561, %v1679
        %v1698 = vsub.f32 %v1564, %v1682
        %v1699 = vsub.f32 %v1613, %v1685
        %v1700 = vsub.f32 %v1616, %v1688
        %v1701 = vsub.f32 %v1665, %v1691
        %v1702 = vsub.f32 %v1668, %v1694
        %v1703 = vmul.f32 %v1695, 1.442695
        %v1704 = vpow.pop %v1703
        %v1705 = vmul.f32 %v1696, 1.442695
        %v1706 = vpow.pop %v1705
        %v1707 = vmul.f32 %v1697, 1.442695
        %v1708 = vpow.pop %v1707
        %v1709 = vmul.f32 %v1698, 1.442695
        %v1710 = vpow.pop %v1709
        %v1711 = vmul.f32 %v1699, 1.442695
        %v1712 = vpow.pop %v1711
        %v1713 = vmul.f32 %v1700, 1.442695
        %v1714 = vpow.pop %v1713
        %v1715 = vmul.f32 %v1701, 1.442695
        %v1716 = vpow.pop %v1715
        %v1717 = vmul.f32 %v1702, 1.442695
        %v1718 = vpow.pop %v1717
        %v1719 = vsel %vm653, %v1704, 0.0
        %1720 = vadd.xlane.f32.xlu0 %v1719
        %v1721 = vpop.xlane.xlu0 %1720
        %v1722 = vsel %vm653, %v1706, 0.0
        %1723 = vadd.xlane.f32.xlu0 %v1722
        %v1724 = vpop.xlane.xlu0 %1723
        %v1725 = vsel %vm653, %v1708, 0.0
        %1726 = vadd.xlane.f32.xlu0 %v1725
        %v1727 = vpop.xlane.xlu0 %1726
        %v1728 = vsel %vm653, %v1710, 0.0
        %1729 = vadd.xlane.f32.xlu0 %v1728
        %v1730 = vpop.xlane.xlu0 %1729
        %v1731 = vsel %vm653, %v1712, 0.0
        %1732 = vadd.xlane.f32.xlu0 %v1731
        %v1733 = vpop.xlane.xlu0 %1732
        %v1734 = vsel %vm653, %v1714, 0.0
        %1735 = vadd.xlane.f32.xlu0 %v1734
        %v1736 = vpop.xlane.xlu0 %1735
        %v1737 = vsel %vm653, %v1716, 0.0
        %1738 = vadd.xlane.f32.xlu0 %v1737
        %v1739 = vpop.xlane.xlu0 %1738
        %v1740 = vsel %vm653, %v1718, 0.0
        %1741 = vadd.xlane.f32.xlu0 %v1740
        %v1742 = vpop.xlane.xlu0 %1741
        %v1743 = vrcp.pop %v1721
        %v1744 = vrcp.pop %v1724
        %v1745 = vrcp.pop %v1727
        %v1746 = vrcp.pop %v1730
        %v1747 = vrcp.pop %v1733
        %v1748 = vrcp.pop %v1736
        %v1749 = vrcp.pop %v1739
        %v1750 = vrcp.pop %v1742
        %v1751 = vmul.f32 %v1704, %v1743
        %v1752 = vmul.f32 %v1706, %v1744
        %v1753 = vmul.f32 %v1708, %v1745
        %v1754 = vmul.f32 %v1710, %v1746
        %v1755 = vmul.f32 %v1712, %v1747
        %v1756 = vmul.f32 %v1714, %v1748
        %v1757 = vmul.f32 %v1716, %v1749
        %v1758 = vmul.f32 %v1718, %v1750
        %v1759 = vpack.c.bf16 %v1752, %v1751
        %v1760 = vpack.c.bf16 %v1754, %v1753
        %v1761 = vpack.c.bf16 %v1756, %v1755
        %v1762 = vpack.c.bf16 %v1758, %v1757
        %1763 = vrot.lane.b32.xlu0 %v1459, 48
        %v1764 = vpop.permute.xlu0 %1763
        %v1767 = vsel %vm653, %v1759, 0
        %1769 = vmatprep.subr.bf16.mxu0 0
        %1770 = vmatpush1.bf16.msra.mxu0 %v1764
        %1771 = vmatprep.subr.bf16.mxu0 0
        %1772 = vmatpush1.bf16.msra.mxu0 0
        %1773 = vmatprep.subr.bf16.mxu0 0
        %1774 = vmatpush1.bf16.msra.mxu0 0
        %1775 = vmatprep.subr.bf16.mxu0 0
        %1776 = vmatpush1.bf16.msra.mxu0 0
        %1777 = vmatprep.subr.bf16.mxu0 0
        %1778 = vmatpush1.bf16.msra.mxu0 0
        %1779 = vmatprep.subr.bf16.mxu0 0
        %1780 = vmatpush1.bf16.msra.mxu0 0
        %1781 = vmatprep.subr.bf16.mxu0 0
        %1782 = vmatpush1.bf16.msra.mxu0 0
        %1783 = vmatprep.subr.bf16.mxu0 0
        %1784 = vmatpush1.bf16.msra.mxu0 0
        %1785 = vmatprep.subr.bf16.mxu0 0
        %1786 = vmatpush1.bf16.msra.mxu0 0
        %1787 = vmatprep.subr.bf16.mxu0 0
        %1788 = vmatpush1.bf16.msra.mxu0 0
        %1789 = vmatprep.subr.bf16.mxu0 0
        %1790 = vmatpush1.bf16.msra.mxu0 0
        %1791 = vmatprep.subr.bf16.mxu0 0
        %1792 = vmatpush1.bf16.msra.mxu0 0
        %1793 = vmatprep.subr.bf16.mxu0 0
        %1794 = vmatpush1.bf16.msra.mxu0 0
        %1795 = vmatprep.subr.bf16.mxu0 0
        %1796 = vmatpush1.bf16.msra.mxu0 0
        %1797 = vmatprep.subr.bf16.mxu0 0
        %1798 = vmatpush1.bf16.msra.mxu0 0
        %1799 = vmatprep.subr.bf16.mxu0 0
        %1800 = vmatpush1.bf16.msra.mxu0 0
        %1801 = vmatprep.mubr.bf16.mxu0 0
        %1802 = vmatmul.mubr.bf16.gmra.mrb[0].mxu0 %v1767
        %v1803 = vpop.f32.mrb[0].mxu0
        %v1804 = vadd.f32 0.0, %v1803
        %v1805 = vpop.f32.mrb[0].mxu0
        %v1806 = vpop.f32.mrb[0].mxu0
        %v1807 = vadd.f32 0.0, %v1806
        %v1808 = vpop.f32.mrb[0].mxu0
        %1809 = vdwg.mxu0
        %1810 = vrot.lane.b32.xlu0 %v1460, 48
        %v1811 = vpop.permute.xlu0 %1810
        %v1814 = vsel %vm653, %v1760, 0
        %1816 = vmatprep.subr.bf16.mxu0 0
        %1817 = vmatpush1.bf16.msra.mxu0 %v1811
        %1818 = vmatprep.subr.bf16.mxu0 0
        %1819 = vmatpush1.bf16.msra.mxu0 0
        %1820 = vmatprep.subr.bf16.mxu0 0
        %1821 = vmatpush1.bf16.msra.mxu0 0
        %1822 = vmatprep.subr.bf16.mxu0 0
        %1823 = vmatpush1.bf16.msra.mxu0 0
        %1824 = vmatprep.subr.bf16.mxu0 0
        %1825 = vmatpush1.bf16.msra.mxu0 0
        %1826 = vmatprep.subr.bf16.mxu0 0
        %1827 = vmatpush1.bf16.msra.mxu0 0
        %1828 = vmatprep.subr.bf16.mxu0 0
        %1829 = vmatpush1.bf16.msra.mxu0 0
        %1830 = vmatprep.subr.bf16.mxu0 0
        %1831 = vmatpush1.bf16.msra.mxu0 0
        %1832 = vmatprep.subr.bf16.mxu0 0
        %1833 = vmatpush1.bf16.msra.mxu0 0
        %1834 = vmatprep.subr.bf16.mxu0 0
        %1835 = vmatpush1.bf16.msra.mxu0 0
        %1836 = vmatprep.subr.bf16.mxu0 0
        %1837 = vmatpush1.bf16.msra.mxu0 0
        %1838 = vmatprep.subr.bf16.mxu0 0
        %1839 = vmatpush1.bf16.msra.mxu0 0
        %1840 = vmatprep.subr.bf16.mxu0 0
        %1841 = vmatpush1.bf16.msra.mxu0 0
        %1842 = vmatprep.subr.bf16.mxu0 0
        %1843 = vmatpush1.bf16.msra.mxu0 0
        %1844 = vmatprep.subr.bf16.mxu0 0
        %1845 = vmatpush1.bf16.msra.mxu0 0
        %1846 = vmatprep.subr.bf16.mxu0 0
        %1847 = vmatpush1.bf16.msra.mxu0 0
        %1848 = vmatprep.mubr.bf16.mxu0 0
        %1849 = vmatmul.mubr.bf16.gmra.mrb[0].mxu0 %v1814
        %v1850 = vpop.f32.mrb[0].mxu0
        %v1851 = vadd.f32 0.0, %v1850
        %v1852 = vpop.f32.mrb[0].mxu0
        %v1853 = vpop.f32.mrb[0].mxu0
        %v1854 = vadd.f32 0.0, %v1853
        %v1855 = vpop.f32.mrb[0].mxu0
        %1856 = vdwg.mxu0
        %1857 = vrot.lane.b32.xlu0 %v1461, 48
        %v1858 = vpop.permute.xlu0 %1857
        %v1861 = vsel %vm653, %v1761, 0
        %1863 = vmatprep.subr.bf16.mxu0 0
        %1864 = vmatpush1.bf16.msra.mxu0 %v1858
        %1865 = vmatprep.subr.bf16.mxu0 0
        %1866 = vmatpush1.bf16.msra.mxu0 0
        %1867 = vmatprep.subr.bf16.mxu0 0
        %1868 = vmatpush1.bf16.msra.mxu0 0
        %1869 = vmatprep.subr.bf16.mxu0 0
        %1870 = vmatpush1.bf16.msra.mxu0 0
        %1871 = vmatprep.subr.bf16.mxu0 0
        %1872 = vmatpush1.bf16.msra.mxu0 0
        %1873 = vmatprep.subr.bf16.mxu0 0
        %1874 = vmatpush1.bf16.msra.mxu0 0
        %1875 = vmatprep.subr.bf16.mxu0 0
        %1876 = vmatpush1.bf16.msra.mxu0 0
        %1877 = vmatprep.subr.bf16.mxu0 0
        %1878 = vmatpush1.bf16.msra.mxu0 0
        %1879 = vmatprep.subr.bf16.mxu0 0
        %1880 = vmatpush1.bf16.msra.mxu0 0
        %1881 = vmatprep.subr.bf16.mxu0 0
        %1882 = vmatpush1.bf16.msra.mxu0 0
        %1883 = vmatprep.subr.bf16.mxu0 0
        %1884 = vmatpush1.bf16.msra.mxu0 0
        %1885 = vmatprep.subr.bf16.mxu0 0
        %1886 = vmatpush1.bf16.msra.mxu0 0
        %1887 = vmatprep.subr.bf16.mxu0 0
        %1888 = vmatpush1.bf16.msra.mxu0 0
        %1889 = vmatprep.subr.bf16.mxu0 0
        %1890 = vmatpush1.bf16.msra.mxu0 0
        %1891 = vmatprep.subr.bf16.mxu0 0
        %1892 = vmatpush1.bf16.msra.mxu0 0
        %1893 = vmatprep.subr.bf16.mxu0 0
        %1894 = vmatpush1.bf16.msra.mxu0 0
        %1895 = vmatprep.mubr.bf16.mxu0 0
        %1896 = vmatmul.mubr.bf16.gmra.mrb[0].mxu0 %v1861
        %v1897 = vpop.f32.mrb[0].mxu0
        %v1898 = vadd.f32 0.0, %v1897
        %v1899 = vpop.f32.mrb[0].mxu0
        %v1900 = vpop.f32.mrb[0].mxu0
        %v1901 = vadd.f32 0.0, %v1900
        %v1902 = vpop.f32.mrb[0].mxu0
        %1903 = vdwg.mxu0
        %1904 = vrot.lane.b32.xlu0 %v1462, 48
        %v1905 = vpop.permute.xlu0 %1904
        %v1908 = vsel %vm653, %v1762, 0
        %1910 = vmatprep.subr.bf16.mxu0 0
        %1911 = vmatpush1.bf16.msra.mxu0 %v1905
        %1912 = vmatprep.subr.bf16.mxu0 0
        %1913 = vmatpush1.bf16.msra.mxu0 0
        %1914 = vmatprep.subr.bf16.mxu0 0
        %1915 = vmatpush1.bf16.msra.mxu0 0
        %1916 = vmatprep.subr.bf16.mxu0 0
        %1917 = vmatpush1.bf16.msra.mxu0 0
        %1918 = vmatprep.subr.bf16.mxu0 0
        %1919 = vmatpush1.bf16.msra.mxu0 0
        %1920 = vmatprep.subr.bf16.mxu0 0
        %1921 = vmatpush1.bf16.msra.mxu0 0
        %1922 = vmatprep.subr.bf16.mxu0 0
        %1923 = vmatpush1.bf16.msra.mxu0 0
        %1924 = vmatprep.subr.bf16.mxu0 0
        %1925 = vmatpush1.bf16.msra.mxu0 0
        %1926 = vmatprep.subr.bf16.mxu0 0
        %1927 = vmatpush1.bf16.msra.mxu0 0
        %1928 = vmatprep.subr.bf16.mxu0 0
        %1929 = vmatpush1.bf16.msra.mxu0 0
        %1930 = vmatprep.subr.bf16.mxu0 0
        %1931 = vmatpush1.bf16.msra.mxu0 0
        %1932 = vmatprep.subr.bf16.mxu0 0
        %1933 = vmatpush1.bf16.msra.mxu0 0
        %1934 = vmatprep.subr.bf16.mxu0 0
        %1935 = vmatpush1.bf16.msra.mxu0 0
        %1936 = vmatprep.subr.bf16.mxu0 0
        %1937 = vmatpush1.bf16.msra.mxu0 0
        %1938 = vmatprep.subr.bf16.mxu0 0
        %1939 = vmatpush1.bf16.msra.mxu0 0
        %1940 = vmatprep.subr.bf16.mxu0 0
        %1941 = vmatpush1.bf16.msra.mxu0 0
        %1942 = vmatprep.mubr.bf16.mxu0 0
        %1943 = vmatmul.mubr.bf16.gmra.mrb[0].mxu0 %v1908
        %v1944 = vpop.f32.mrb[0].mxu0
        %v1945 = vadd.f32 0.0, %v1944
        %v1946 = vpop.f32.mrb[0].mxu0
        %v1947 = vpop.f32.mrb[0].mxu0
        %v1948 = vadd.f32 0.0, %v1947
        %v1949 = vpop.f32.mrb[0].mxu0
        %1950 = vdwg.mxu0
        %v1951 = vpack.c.bf16 %v1807, %v1804
        %v1952 = vpack.c.bf16 %v1854, %v1851
        %v1953 = vpack.c.bf16 %v1901, %v1898
        %v1954 = vpack.c.bf16 %v1948, %v1945
        %1959 = vrot.lane.b32.xlu0 %v1951, 16
        %v1960 = vpop.permute.xlu0 %1959
        %1961 = vrot.lane.b32.xlu0 %v1952, 16
        %v1962 = vpop.permute.xlu0 %1961
        %1963 = vrot.lane.b32.xlu0 %v1953, 16
        %v1964 = vpop.permute.xlu0 %1963
        %1965 = vrot.lane.b32.xlu0 %v1954, 16
        %v1966 = vpop.permute.xlu0 %1965
        %vm1971 = vcmask 195712
        %1972 = vst.msk [vmem:[#allocation3] sm:$0xff] %vm1971, %v1960
        %1973 = vst.msk [vmem:[#allocation3 + $0x8] sm:$0xff] %vm1971, %v1962
        %1974 = vst.msk [vmem:[#allocation3 + $0x10] sm:$0xff] %vm1971, %v1964
        %1975 = vst.msk [vmem:[#allocation3 + $0x18] sm:$0xff] %vm1971, %v1966
        %v1976 = vld [vmem:[#allocation2] sm:$0xff]
        %v1977 = vld [vmem:[#allocation2 + $0x8] sm:$0xff]
        %v1978 = vld [vmem:[#allocation2 + $0x10] sm:$0xff]
        %v1979 = vld [vmem:[#allocation2 + $0x18] sm:$0xff]
        %1981 = vrot.lane.b32.xlu0 %v1976, 104
        %v1982 = vpop.permute.xlu0 %1981
        %1983 = vrot.lane.b32.xlu0 %v1976, 72
        %v1984 = vpop.permute.xlu0 %1983
        %v1986 = vsel %vm455, %v1982, 0
        %v1989 = vsel %vm455, %v1984, 0
        %1991 = vmatprep.subr.bf16.mxu0 0
        %1992 = vmatpush1.bf16.xpose.msra.mxu0 %v1989
        %1993 = vmatprep.subr.bf16.mxu0 0
        %1994 = vmatpush1.bf16.xpose.msra.mxu0 0
        %1995 = vmatprep.subr.bf16.mxu0 0
        %1996 = vmatpush1.bf16.xpose.msra.mxu0 0
        %1997 = vmatprep.subr.bf16.mxu0 0
        %1998 = vmatpush1.bf16.xpose.msra.mxu0 0
        %1999 = vmatprep.subr.bf16.mxu0 0
        %2000 = vmatpush1.bf16.xpose.msra.mxu0 0
        %2001 = vmatprep.subr.bf16.mxu0 0
        %2002 = vmatpush1.bf16.xpose.msra.mxu0 0
        %2003 = vmatprep.subr.bf16.mxu0 0
        %2004 = vmatpush1.bf16.xpose.msra.mxu0 0
        %2005 = vmatprep.subr.bf16.mxu0 0
        %2006 = vmatpush1.bf16.xpose.msra.mxu0 0
        %2007 = vmatprep.subr.bf16.mxu0 0
        %2008 = vmatpush1.bf16.xpose.msra.mxu0 0
        %2009 = vmatprep.subr.bf16.mxu0 0
        %2010 = vmatpush1.bf16.xpose.msra.mxu0 0
        %2011 = vmatprep.subr.bf16.mxu0 0
        %2012 = vmatpush1.bf16.xpose.msra.mxu0 0
        %2013 = vmatprep.subr.bf16.mxu0 0
        %2014 = vmatpush1.bf16.xpose.msra.mxu0 0
        %2015 = vmatprep.subr.bf16.mxu0 0
        %2016 = vmatpush1.bf16.xpose.msra.mxu0 0
        %2017 = vmatprep.subr.bf16.mxu0 0
        %2018 = vmatpush1.bf16.xpose.msra.mxu0 0
        %2019 = vmatprep.subr.bf16.mxu0 0
        %2020 = vmatpush1.bf16.xpose.msra.mxu0 0
        %2021 = vmatprep.subr.bf16.mxu0 0
        %2022 = vmatpush1.bf16.xpose.msra.mxu0 0
        %2023 = vmatprep.mubr.bf16.mxu0 0
        %2024 = vmatmul.mubr.bf16.gmra.mrb[0].mxu0 %v1986
        %v2025 = vpop.f32.mrb[0].mxu0
        %v2026 = vadd.f32 %v446, %v2025
        %v2027 = vpop.f32.mrb[0].mxu0
        %v2028 = vpop.f32.mrb[0].mxu0
        %v2029 = vadd.f32 %v447, %v2028
        %v2030 = vpop.f32.mrb[0].mxu0
        %2031 = vdwg.mxu0
        %2033 = vrot.lane.b32.xlu0 %v1977, 104
        %v2034 = vpop.permute.xlu0 %2033
        %2035 = vrot.lane.b32.xlu0 %v1977, 72
        %v2036 = vpop.permute.xlu0 %2035
        %v2038 = vsel %vm455, %v2034, 0
        %v2041 = vsel %vm455, %v2036, 0
        %2043 = vmatprep.subr.bf16.mxu0 0
        %2044 = vmatpush1.bf16.xpose.msra.mxu0 %v2041
        %2045 = vmatprep.subr.bf16.mxu0 0
        %2046 = vmatpush1.bf16.xpose.msra.mxu0 0
        %2047 = vmatprep.subr.bf16.mxu0 0
        %2048 = vmatpush1.bf16.xpose.msra.mxu0 0
        %2049 = vmatprep.subr.bf16.mxu0 0
        %2050 = vmatpush1.bf16.xpose.msra.mxu0 0
        %2051 = vmatprep.subr.bf16.mxu0 0
        %2052 = vmatpush1.bf16.xpose.msra.mxu0 0
        %2053 = vmatprep.subr.bf16.mxu0 0
        %2054 = vmatpush1.bf16.xpose.msra.mxu0 0
        %2055 = vmatprep.subr.bf16.mxu0 0
        %2056 = vmatpush1.bf16.xpose.msra.mxu0 0
        %2057 = vmatprep.subr.bf16.mxu0 0
        %2058 = vmatpush1.bf16.xpose.msra.mxu0 0
        %2059 = vmatprep.subr.bf16.mxu0 0
        %2060 = vmatpush1.bf16.xpose.msra.mxu0 0
        %2061 = vmatprep.subr.bf16.mxu0 0
        %2062 = vmatpush1.bf16.xpose.msra.mxu0 0
        %2063 = vmatprep.subr.bf16.mxu0 0
        %2064 = vmatpush1.bf16.xpose.msra.mxu0 0
        %2065 = vmatprep.subr.bf16.mxu0 0
        %2066 = vmatpush1.bf16.xpose.msra.mxu0 0
        %2067 = vmatprep.subr.bf16.mxu0 0
        %2068 = vmatpush1.bf16.xpose.msra.mxu0 0
        %2069 = vmatprep.subr.bf16.mxu0 0
        %2070 = vmatpush1.bf16.xpose.msra.mxu0 0
        %2071 = vmatprep.subr.bf16.mxu0 0
        %2072 = vmatpush1.bf16.xpose.msra.mxu0 0
        %2073 = vmatprep.subr.bf16.mxu0 0
        %2074 = vmatpush1.bf16.xpose.msra.mxu0 0
        %2075 = vmatprep.mubr.bf16.mxu0 0
        %2076 = vmatmul.mubr.bf16.gmra.mrb[0].mxu0 %v2038
        %v2077 = vpop.f32.mrb[0].mxu0
        %v2078 = vadd.f32 %v446, %v2077
        %v2079 = vpop.f32.mrb[0].mxu0
        %v2080 = vpop.f32.mrb[0].mxu0
        %v2081 = vadd.f32 %v447, %v2080
        %v2082 = vpop.f32.mrb[0].mxu0
        %2083 = vdwg.mxu0
        %2085 = vrot.lane.b32.xlu0 %v1978, 104
        %v2086 = vpop.permute.xlu0 %2085
        %2087 = vrot.lane.b32.xlu0 %v1978, 72
        %v2088 = vpop.permute.xlu0 %2087
        %v2090 = vsel %vm455, %v2086, 0
        %v2093 = vsel %vm455, %v2088, 0
        %2095 = vmatprep.subr.bf16.mxu0 0
        %2096 = vmatpush1.bf16.xpose.msra.mxu0 %v2093
        %2097 = vmatprep.subr.bf16.mxu0 0
        %2098 = vmatpush1.bf16.xpose.msra.mxu0 0
        %2099 = vmatprep.subr.bf16.mxu0 0
        %2100 = vmatpush1.bf16.xpose.msra.mxu0 0
        %2101 = vmatprep.subr.bf16.mxu0 0
        %2102 = vmatpush1.bf16.xpose.msra.mxu0 0
        %2103 = vmatprep.subr.bf16.mxu0 0
        %2104 = vmatpush1.bf16.xpose.msra.mxu0 0
        %2105 = vmatprep.subr.bf16.mxu0 0
        %2106 = vmatpush1.bf16.xpose.msra.mxu0 0
        %2107 = vmatprep.subr.bf16.mxu0 0
        %2108 = vmatpush1.bf16.xpose.msra.mxu0 0
        %2109 = vmatprep.subr.bf16.mxu0 0
        %2110 = vmatpush1.bf16.xpose.msra.mxu0 0
        %2111 = vmatprep.subr.bf16.mxu0 0
        %2112 = vmatpush1.bf16.xpose.msra.mxu0 0
        %2113 = vmatprep.subr.bf16.mxu0 0
        %2114 = vmatpush1.bf16.xpose.msra.mxu0 0
        %2115 = vmatprep.subr.bf16.mxu0 0
        %2116 = vmatpush1.bf16.xpose.msra.mxu0 0
        %2117 = vmatprep.subr.bf16.mxu0 0
        %2118 = vmatpush1.bf16.xpose.msra.mxu0 0
        %2119 = vmatprep.subr.bf16.mxu0 0
        %2120 = vmatpush1.bf16.xpose.msra.mxu0 0
        %2121 = vmatprep.subr.bf16.mxu0 0
        %2122 = vmatpush1.bf16.xpose.msra.mxu0 0
        %2123 = vmatprep.subr.bf16.mxu0 0
        %2124 = vmatpush1.bf16.xpose.msra.mxu0 0
        %2125 = vmatprep.subr.bf16.mxu0 0
        %2126 = vmatpush1.bf16.xpose.msra.mxu0 0
        %2127 = vmatprep.mubr.bf16.mxu0 0
        %2128 = vmatmul.mubr.bf16.gmra.mrb[0].mxu0 %v2090
        %v2129 = vpop.f32.mrb[0].mxu0
        %v2130 = vadd.f32 %v446, %v2129
        %v2131 = vpop.f32.mrb[0].mxu0
        %v2132 = vpop.f32.mrb[0].mxu0
        %v2133 = vadd.f32 %v447, %v2132
        %v2134 = vpop.f32.mrb[0].mxu0
        %2135 = vdwg.mxu0
        %2137 = vrot.lane.b32.xlu0 %v1979, 104
        %v2138 = vpop.permute.xlu0 %2137
        %2139 = vrot.lane.b32.xlu0 %v1979, 72
        %v2140 = vpop.permute.xlu0 %2139
        %v2142 = vsel %vm455, %v2138, 0
        %v2145 = vsel %vm455, %v2140, 0
        %2147 = vmatprep.subr.bf16.mxu0 0
        %2148 = vmatpush1.bf16.xpose.msra.mxu0 %v2145
        %2149 = vmatprep.subr.bf16.mxu0 0
        %2150 = vmatpush1.bf16.xpose.msra.mxu0 0
        %2151 = vmatprep.subr.bf16.mxu0 0
        %2152 = vmatpush1.bf16.xpose.msra.mxu0 0
        %2153 = vmatprep.subr.bf16.mxu0 0
        %2154 = vmatpush1.bf16.xpose.msra.mxu0 0
        %2155 = vmatprep.subr.bf16.mxu0 0
        %2156 = vmatpush1.bf16.xpose.msra.mxu0 0
        %2157 = vmatprep.subr.bf16.mxu0 0
        %2158 = vmatpush1.bf16.xpose.msra.mxu0 0
        %2159 = vmatprep.subr.bf16.mxu0 0
        %2160 = vmatpush1.bf16.xpose.msra.mxu0 0
        %2161 = vmatprep.subr.bf16.mxu0 0
        %2162 = vmatpush1.bf16.xpose.msra.mxu0 0
        %2163 = vmatprep.subr.bf16.mxu0 0
        %2164 = vmatpush1.bf16.xpose.msra.mxu0 0
        %2165 = vmatprep.subr.bf16.mxu0 0
        %2166 = vmatpush1.bf16.xpose.msra.mxu0 0
        %2167 = vmatprep.subr.bf16.mxu0 0
        %2168 = vmatpush1.bf16.xpose.msra.mxu0 0
        %2169 = vmatprep.subr.bf16.mxu0 0
        %2170 = vmatpush1.bf16.xpose.msra.mxu0 0
        %2171 = vmatprep.subr.bf16.mxu0 0
        %2172 = vmatpush1.bf16.xpose.msra.mxu0 0
        %2173 = vmatprep.subr.bf16.mxu0 0
        %2174 = vmatpush1.bf16.xpose.msra.mxu0 0
        %2175 = vmatprep.subr.bf16.mxu0 0
        %2176 = vmatpush1.bf16.xpose.msra.mxu0 0
        %2177 = vmatprep.subr.bf16.mxu0 0
        %2178 = vmatpush1.bf16.xpose.msra.mxu0 0
        %2179 = vmatprep.mubr.bf16.mxu0 0
        %2180 = vmatmul.mubr.bf16.gmra.mrb[0].mxu0 %v2142
        %v2181 = vpop.f32.mrb[0].mxu0
        %v2182 = vadd.f32 %v446, %v2181
        %v2183 = vpop.f32.mrb[0].mxu0
        %v2184 = vpop.f32.mrb[0].mxu0
        %v2185 = vadd.f32 %v447, %v2184
        %v2186 = vpop.f32.mrb[0].mxu0
        %2187 = vdwg.mxu0
        %v2188 = vsel %vm653, %v2026, -inf
        %2189 = vmax.xlane.f32.xlu0 %v2188
        %v2190 = vpop.xlane.xlu0 %2189
        %v2191 = vsel %vm653, %v2029, -inf
        %2192 = vmax.xlane.f32.xlu0 %v2191
        %v2193 = vpop.xlane.xlu0 %2192
        %v2194 = vsel %vm653, %v2078, -inf
        %2195 = vmax.xlane.f32.xlu0 %v2194
        %v2196 = vpop.xlane.xlu0 %2195
        %v2197 = vsel %vm653, %v2081, -inf
        %2198 = vmax.xlane.f32.xlu0 %v2197
        %v2199 = vpop.xlane.xlu0 %2198
        %v2200 = vsel %vm653, %v2130, -inf
        %2201 = vmax.xlane.f32.xlu0 %v2200
        %v2202 = vpop.xlane.xlu0 %2201
        %v2203 = vsel %vm653, %v2133, -inf
        %2204 = vmax.xlane.f32.xlu0 %v2203
        %v2205 = vpop.xlane.xlu0 %2204
        %v2206 = vsel %vm653, %v2182, -inf
        %2207 = vmax.xlane.f32.xlu0 %v2206
        %v2208 = vpop.xlane.xlu0 %2207
        %v2209 = vsel %vm653, %v2185, -inf
        %2210 = vmax.xlane.f32.xlu0 %v2209
        %v2211 = vpop.xlane.xlu0 %2210
        %v2212 = vsub.f32 %v2026, %v2190
        %v2213 = vsub.f32 %v2029, %v2193
        %v2214 = vsub.f32 %v2078, %v2196
        %v2215 = vsub.f32 %v2081, %v2199
        %v2216 = vsub.f32 %v2130, %v2202
        %v2217 = vsub.f32 %v2133, %v2205
        %v2218 = vsub.f32 %v2182, %v2208
        %v2219 = vsub.f32 %v2185, %v2211
        %v2220 = vmul.f32 %v2212, 1.442695
        %v2221 = vpow.pop %v2220
        %v2222 = vmul.f32 %v2213, 1.442695
        %v2223 = vpow.pop %v2222
        %v2224 = vmul.f32 %v2214, 1.442695
        %v2225 = vpow.pop %v2224
        %v2226 = vmul.f32 %v2215, 1.442695
        %v2227 = vpow.pop %v2226
        %v2228 = vmul.f32 %v2216, 1.442695
        %v2229 = vpow.pop %v2228
        %v2230 = vmul.f32 %v2217, 1.442695
        %v2231 = vpow.pop %v2230
        %v2232 = vmul.f32 %v2218, 1.442695
        %v2233 = vpow.pop %v2232
        %v2234 = vmul.f32 %v2219, 1.442695
        %v2235 = vpow.pop %v2234
        %v2236 = vsel %vm653, %v2221, 0.0
        %2237 = vadd.xlane.f32.xlu0 %v2236
        %v2238 = vpop.xlane.xlu0 %2237
        %v2239 = vsel %vm653, %v2223, 0.0
        %2240 = vadd.xlane.f32.xlu0 %v2239
        %v2241 = vpop.xlane.xlu0 %2240
        %v2242 = vsel %vm653, %v2225, 0.0
        %2243 = vadd.xlane.f32.xlu0 %v2242
        %v2244 = vpop.xlane.xlu0 %2243
        %v2245 = vsel %vm653, %v2227, 0.0
        %2246 = vadd.xlane.f32.xlu0 %v2245
        %v2247 = vpop.xlane.xlu0 %2246
        %v2248 = vsel %vm653, %v2229, 0.0
        %2249 = vadd.xlane.f32.xlu0 %v2248
        %v2250 = vpop.xlane.xlu0 %2249
        %v2251 = vsel %vm653, %v2231, 0.0
        %2252 = vadd.xlane.f32.xlu0 %v2251
        %v2253 = vpop.xlane.xlu0 %2252
        %v2254 = vsel %vm653, %v2233, 0.0
        %2255 = vadd.xlane.f32.xlu0 %v2254
        %v2256 = vpop.xlane.xlu0 %2255
        %v2257 = vsel %vm653, %v2235, 0.0
        %2258 = vadd.xlane.f32.xlu0 %v2257
        %v2259 = vpop.xlane.xlu0 %2258
        %v2260 = vrcp.pop %v2238
        %v2261 = vrcp.pop %v2241
        %v2262 = vrcp.pop %v2244
        %v2263 = vrcp.pop %v2247
        %v2264 = vrcp.pop %v2250
        %v2265 = vrcp.pop %v2253
        %v2266 = vrcp.pop %v2256
        %v2267 = vrcp.pop %v2259
        %v2268 = vmul.f32 %v2221, %v2260
        %v2269 = vmul.f32 %v2223, %v2261
        %v2270 = vmul.f32 %v2225, %v2262
        %v2271 = vmul.f32 %v2227, %v2263
        %v2272 = vmul.f32 %v2229, %v2264
        %v2273 = vmul.f32 %v2231, %v2265
        %v2274 = vmul.f32 %v2233, %v2266
        %v2275 = vmul.f32 %v2235, %v2267
        %v2276 = vpack.c.bf16 %v2269, %v2268
        %v2277 = vpack.c.bf16 %v2271, %v2270
        %v2278 = vpack.c.bf16 %v2273, %v2272
        %v2279 = vpack.c.bf16 %v2275, %v2274
        %2280 = vrot.lane.b32.xlu0 %v1976, 40
        %v2281 = vpop.permute.xlu0 %2280
        %v2284 = vsel %vm653, %v2276, 0
        %2286 = vmatprep.subr.bf16.mxu0 0
        %2287 = vmatpush1.bf16.msra.mxu0 %v2281
        %2288 = vmatprep.subr.bf16.mxu0 0
        %2289 = vmatpush1.bf16.msra.mxu0 0
        %2290 = vmatprep.subr.bf16.mxu0 0
        %2291 = vmatpush1.bf16.msra.mxu0 0
        %2292 = vmatprep.subr.bf16.mxu0 0
        %2293 = vmatpush1.bf16.msra.mxu0 0
        %2294 = vmatprep.subr.bf16.mxu0 0
        %2295 = vmatpush1.bf16.msra.mxu0 0
        %2296 = vmatprep.subr.bf16.mxu0 0
        %2297 = vmatpush1.bf16.msra.mxu0 0
        %2298 = vmatprep.subr.bf16.mxu0 0
        %2299 = vmatpush1.bf16.msra.mxu0 0
        %2300 = vmatprep.subr.bf16.mxu0 0
        %2301 = vmatpush1.bf16.msra.mxu0 0
        %2302 = vmatprep.subr.bf16.mxu0 0
        %2303 = vmatpush1.bf16.msra.mxu0 0
        %2304 = vmatprep.subr.bf16.mxu0 0
        %2305 = vmatpush1.bf16.msra.mxu0 0
        %2306 = vmatprep.subr.bf16.mxu0 0
        %2307 = vmatpush1.bf16.msra.mxu0 0
        %2308 = vmatprep.subr.bf16.mxu0 0
        %2309 = vmatpush1.bf16.msra.mxu0 0
        %2310 = vmatprep.subr.bf16.mxu0 0
        %2311 = vmatpush1.bf16.msra.mxu0 0
        %2312 = vmatprep.subr.bf16.mxu0 0
        %2313 = vmatpush1.bf16.msra.mxu0 0
        %2314 = vmatprep.subr.bf16.mxu0 0
        %2315 = vmatpush1.bf16.msra.mxu0 0
        %2316 = vmatprep.subr.bf16.mxu0 0
        %2317 = vmatpush1.bf16.msra.mxu0 0
        %2318 = vmatprep.mubr.bf16.mxu0 0
        %2319 = vmatmul.mubr.bf16.gmra.mrb[0].mxu0 %v2284
        %v2320 = vpop.f32.mrb[0].mxu0
        %v2321 = vadd.f32 0.0, %v2320
        %v2322 = vpop.f32.mrb[0].mxu0
        %v2323 = vpop.f32.mrb[0].mxu0
        %v2324 = vadd.f32 0.0, %v2323
        %v2325 = vpop.f32.mrb[0].mxu0
        %2326 = vdwg.mxu0
        %2327 = vrot.lane.b32.xlu0 %v1977, 40
        %v2328 = vpop.permute.xlu0 %2327
        %v2331 = vsel %vm653, %v2277, 0
        %2333 = vmatprep.subr.bf16.mxu0 0
        %2334 = vmatpush1.bf16.msra.mxu0 %v2328
        %2335 = vmatprep.subr.bf16.mxu0 0
        %2336 = vmatpush1.bf16.msra.mxu0 0
        %2337 = vmatprep.subr.bf16.mxu0 0
        %2338 = vmatpush1.bf16.msra.mxu0 0
        %2339 = vmatprep.subr.bf16.mxu0 0
        %2340 = vmatpush1.bf16.msra.mxu0 0
        %2341 = vmatprep.subr.bf16.mxu0 0
        %2342 = vmatpush1.bf16.msra.mxu0 0
        %2343 = vmatprep.subr.bf16.mxu0 0
        %2344 = vmatpush1.bf16.msra.mxu0 0
        %2345 = vmatprep.subr.bf16.mxu0 0
        %2346 = vmatpush1.bf16.msra.mxu0 0
        %2347 = vmatprep.subr.bf16.mxu0 0
        %2348 = vmatpush1.bf16.msra.mxu0 0
        %2349 = vmatprep.subr.bf16.mxu0 0
        %2350 = vmatpush1.bf16.msra.mxu0 0
        %2351 = vmatprep.subr.bf16.mxu0 0
        %2352 = vmatpush1.bf16.msra.mxu0 0
        %2353 = vmatprep.subr.bf16.mxu0 0
        %2354 = vmatpush1.bf16.msra.mxu0 0
        %2355 = vmatprep.subr.bf16.mxu0 0
        %2356 = vmatpush1.bf16.msra.mxu0 0
        %2357 = vmatprep.subr.bf16.mxu0 0
        %2358 = vmatpush1.bf16.msra.mxu0 0
        %2359 = vmatprep.subr.bf16.mxu0 0
        %2360 = vmatpush1.bf16.msra.mxu0 0
        %2361 = vmatprep.subr.bf16.mxu0 0
        %2362 = vmatpush1.bf16.msra.mxu0 0
        %2363 = vmatprep.subr.bf16.mxu0 0
        %2364 = vmatpush1.bf16.msra.mxu0 0
        %2365 = vmatprep.mubr.bf16.mxu0 0
        %2366 = vmatmul.mubr.bf16.gmra.mrb[0].mxu0 %v2331
        %v2367 = vpop.f32.mrb[0].mxu0
        %v2368 = vadd.f32 0.0, %v2367
        %v2369 = vpop.f32.mrb[0].mxu0
        %v2370 = vpop.f32.mrb[0].mxu0
        %v2371 = vadd.f32 0.0, %v2370
        %v2372 = vpop.f32.mrb[0].mxu0
        %2373 = vdwg.mxu0
        %2374 = vrot.lane.b32.xlu0 %v1978, 40
        %v2375 = vpop.permute.xlu0 %2374
        %v2378 = vsel %vm653, %v2278, 0
        %2380 = vmatprep.subr.bf16.mxu0 0
        %2381 = vmatpush1.bf16.msra.mxu0 %v2375
        %2382 = vmatprep.subr.bf16.mxu0 0
        %2383 = vmatpush1.bf16.msra.mxu0 0
        %2384 = vmatprep.subr.bf16.mxu0 0
        %2385 = vmatpush1.bf16.msra.mxu0 0
        %2386 = vmatprep.subr.bf16.mxu0 0
        %2387 = vmatpush1.bf16.msra.mxu0 0
        %2388 = vmatprep.subr.bf16.mxu0 0
        %2389 = vmatpush1.bf16.msra.mxu0 0
        %2390 = vmatprep.subr.bf16.mxu0 0
        %2391 = vmatpush1.bf16.msra.mxu0 0
        %2392 = vmatprep.subr.bf16.mxu0 0
        %2393 = vmatpush1.bf16.msra.mxu0 0
        %2394 = vmatprep.subr.bf16.mxu0 0
        %2395 = vmatpush1.bf16.msra.mxu0 0
        %2396 = vmatprep.subr.bf16.mxu0 0
        %2397 = vmatpush1.bf16.msra.mxu0 0
        %2398 = vmatprep.subr.bf16.mxu0 0
        %2399 = vmatpush1.bf16.msra.mxu0 0
        %2400 = vmatprep.subr.bf16.mxu0 0
        %2401 = vmatpush1.bf16.msra.mxu0 0
        %2402 = vmatprep.subr.bf16.mxu0 0
        %2403 = vmatpush1.bf16.msra.mxu0 0
        %2404 = vmatprep.subr.bf16.mxu0 0
        %2405 = vmatpush1.bf16.msra.mxu0 0
        %2406 = vmatprep.subr.bf16.mxu0 0
        %2407 = vmatpush1.bf16.msra.mxu0 0
        %2408 = vmatprep.subr.bf16.mxu0 0
        %2409 = vmatpush1.bf16.msra.mxu0 0
        %2410 = vmatprep.subr.bf16.mxu0 0
        %2411 = vmatpush1.bf16.msra.mxu0 0
        %2412 = vmatprep.mubr.bf16.mxu0 0
        %2413 = vmatmul.mubr.bf16.gmra.mrb[0].mxu0 %v2378
        %v2414 = vpop.f32.mrb[0].mxu0
        %v2415 = vadd.f32 0.0, %v2414
        %v2416 = vpop.f32.mrb[0].mxu0
        %v2417 = vpop.f32.mrb[0].mxu0
        %v2418 = vadd.f32 0.0, %v2417
        %v2419 = vpop.f32.mrb[0].mxu0
        %2420 = vdwg.mxu0
        %2421 = vrot.lane.b32.xlu0 %v1979, 40
        %v2422 = vpop.permute.xlu0 %2421
        %v2425 = vsel %vm653, %v2279, 0
        %2427 = vmatprep.subr.bf16.mxu0 0
        %2428 = vmatpush1.bf16.msra.mxu0 %v2422
        %2429 = vmatprep.subr.bf16.mxu0 0
        %2430 = vmatpush1.bf16.msra.mxu0 0
        %2431 = vmatprep.subr.bf16.mxu0 0
        %2432 = vmatpush1.bf16.msra.mxu0 0
        %2433 = vmatprep.subr.bf16.mxu0 0
        %2434 = vmatpush1.bf16.msra.mxu0 0
        %2435 = vmatprep.subr.bf16.mxu0 0
        %2436 = vmatpush1.bf16.msra.mxu0 0
        %2437 = vmatprep.subr.bf16.mxu0 0
        %2438 = vmatpush1.bf16.msra.mxu0 0
        %2439 = vmatprep.subr.bf16.mxu0 0
        %2440 = vmatpush1.bf16.msra.mxu0 0
        %2441 = vmatprep.subr.bf16.mxu0 0
        %2442 = vmatpush1.bf16.msra.mxu0 0
        %2443 = vmatprep.subr.bf16.mxu0 0
        %2444 = vmatpush1.bf16.msra.mxu0 0
        %2445 = vmatprep.subr.bf16.mxu0 0
        %2446 = vmatpush1.bf16.msra.mxu0 0
        %2447 = vmatprep.subr.bf16.mxu0 0
        %2448 = vmatpush1.bf16.msra.mxu0 0
        %2449 = vmatprep.subr.bf16.mxu0 0
        %2450 = vmatpush1.bf16.msra.mxu0 0
        %2451 = vmatprep.subr.bf16.mxu0 0
        %2452 = vmatpush1.bf16.msra.mxu0 0
        %2453 = vmatprep.subr.bf16.mxu0 0
        %2454 = vmatpush1.bf16.msra.mxu0 0
        %2455 = vmatprep.subr.bf16.mxu0 0
        %2456 = vmatpush1.bf16.msra.mxu0 0
        %2457 = vmatprep.subr.bf16.mxu0 0
        %2458 = vmatpush1.bf16.msra.mxu0 0
        %2459 = vmatprep.mubr.bf16.mxu0 0
        %2460 = vmatmul.mubr.bf16.gmra.mrb[0].mxu0 %v2425
        %v2461 = vpop.f32.mrb[0].mxu0
        %v2462 = vadd.f32 0.0, %v2461
        %v2463 = vpop.f32.mrb[0].mxu0
        %v2464 = vpop.f32.mrb[0].mxu0
        %v2465 = vadd.f32 0.0, %v2464
        %v2466 = vpop.f32.mrb[0].mxu0
        %2467 = vdwg.mxu0
        %v2468 = vpack.c.bf16 %v2324, %v2321
        %v2469 = vpack.c.bf16 %v2371, %v2368
        %v2470 = vpack.c.bf16 %v2418, %v2415
        %v2471 = vpack.c.bf16 %v2465, %v2462
        %2476 = vrot.lane.b32.xlu0 %v2468, 24
        %v2477 = vpop.permute.xlu0 %2476
        %2478 = vrot.lane.b32.xlu0 %v2469, 24
        %v2479 = vpop.permute.xlu0 %2478
        %2480 = vrot.lane.b32.xlu0 %v2470, 24
        %v2481 = vpop.permute.xlu0 %2480
        %2482 = vrot.lane.b32.xlu0 %v2471, 24
        %v2483 = vpop.permute.xlu0 %2482
        %vm2488 = vcmask 261312
        %2489 = vst.msk [vmem:[#allocation3] sm:$0xff] %vm2488, %v2477
        %2490 = vst.msk [vmem:[#allocation3 + $0x8] sm:$0xff] %vm2488, %v2479
        %2491 = vst.msk [vmem:[#allocation3 + $0x10] sm:$0xff] %vm2488, %v2481
        %2492 = vst.msk [vmem:[#allocation3 + $0x18] sm:$0xff] %vm2488, %v2483
        %v2493 = vld [vmem:[#allocation3] sm:$0xff]
        %v2494 = vld [vmem:[#allocation3 + $0x8] sm:$0xff]
        %v2495 = vld [vmem:[#allocation3 + $0x10] sm:$0xff]
        %v2496 = vld [vmem:[#allocation3 + $0x18] sm:$0xff]
        %v2497 = vld [vmem:[#allocation9] sm:$0xf]
        %v2498 = vld [vmem:[#allocation9 + $0x4] sm:$0xf]
        %v2499 = vld [vmem:[#allocation9 + $0x8] sm:$0xf]
        %v2500 = vld [vmem:[#allocation9 + $0xc] sm:$0xf]
        %v2501 = vld [vmem:[%s4] sm:$0x1]
        %v2503 = vlaneseq
        %v2504 = vshrl.u32 %v2503, 7
        %v2505 = vsub.s32 0, %v2504
        %v2506 = vrot.slane %v2501, %v2505
        %v2512 = vunpack.c.l.b16 %v2497
        %v2513 = vunpack.c.l.b16 %v2498
        %v2514 = vunpack.c.l.b16 %v2499
        %v2515 = vunpack.c.l.b16 %v2500
        %v2516 = vpack.c.b16 %v2513, %v2512
        %v2517 = vpack.c.b16 %v2515, %v2514
        %v2521 = vsel %vm353, %v2493, 0
        %v2524 = vsel %vm353, %v2494, 0
        %v2527 = vsel %vm353, %v2495, 0
        %v2530 = vsel %vm353, %v2496, 0
        %2532 = vmatprep.subr.bf16.mxu0 0
        %2533 = vmatpush1.bf16.msra.mxu0 %v2516
        %2534 = vmatprep.subr.bf16.mxu0 0
        %2535 = vmatpush1.bf16.msra.mxu0 %v2517
        %2536 = vmatprep.subr.bf16.mxu0 0
        %2537 = vmatpush1.bf16.msra.mxu0 0
        %2538 = vmatprep.subr.bf16.mxu0 0
        %2539 = vmatpush1.bf16.msra.mxu0 0
        %2540 = vmatprep.subr.bf16.mxu0 0
        %2541 = vmatpush1.bf16.msra.mxu0 0
        %2542 = vmatprep.subr.bf16.mxu0 0
        %2543 = vmatpush1.bf16.msra.mxu0 0
        %2544 = vmatprep.subr.bf16.mxu0 0
        %2545 = vmatpush1.bf16.msra.mxu0 0
        %2546 = vmatprep.subr.bf16.mxu0 0
        %2547 = vmatpush1.bf16.msra.mxu0 0
        %2548 = vmatprep.subr.bf16.mxu0 0
        %2549 = vmatpush1.bf16.msra.mxu0 0
        %2550 = vmatprep.subr.bf16.mxu0 0
        %2551 = vmatpush1.bf16.msra.mxu0 0
        %2552 = vmatprep.subr.bf16.mxu0 0
        %2553 = vmatpush1.bf16.msra.mxu0 0
        %2554 = vmatprep.subr.bf16.mxu0 0
        %2555 = vmatpush1.bf16.msra.mxu0 0
        %2556 = vmatprep.subr.bf16.mxu0 0
        %2557 = vmatpush1.bf16.msra.mxu0 0
        %2558 = vmatprep.subr.bf16.mxu0 0
        %2559 = vmatpush1.bf16.msra.mxu0 0
        %2560 = vmatprep.subr.bf16.mxu0 0
        %2561 = vmatpush1.bf16.msra.mxu0 0
        %2562 = vmatprep.subr.bf16.mxu0 0
        %2563 = vmatpush1.bf16.msra.mxu0 0
        %2564 = vmatprep.mubr.bf16.mxu0 0
        %2565 = vmatmul.mubr.bf16.gmra.mrb[0].mxu0 %v2521
        %v2566 = vpop.f32.mrb[0].mxu0
        %v2567 = vadd.f32 %v2506, %v2566
        %v2568 = vpop.f32.mrb[0].mxu0
        %v2569 = vpop.f32.mrb[0].mxu0
        %v2570 = vadd.f32 %v2506, %v2569
        %v2571 = vpop.f32.mrb[0].mxu0
        %2572 = vmatprep.mubr.bf16.mxu0 0
        %2573 = vmatmul.mubr.bf16.gmra.mrb[0].mxu0 %v2524
        %v2574 = vpop.f32.mrb[0].mxu0
        %v2575 = vadd.f32 %v2506, %v2574
        %v2576 = vpop.f32.mrb[0].mxu0
        %v2577 = vpop.f32.mrb[0].mxu0
        %v2578 = vadd.f32 %v2506, %v2577
        %v2579 = vpop.f32.mrb[0].mxu0
        %2580 = vmatprep.mubr.bf16.mxu0 0
        %2581 = vmatmul.mubr.bf16.gmra.mrb[0].mxu0 %v2527
        %v2582 = vpop.f32.mrb[0].mxu0
        %v2583 = vadd.f32 %v2506, %v2582
        %v2584 = vpop.f32.mrb[0].mxu0
        %v2585 = vpop.f32.mrb[0].mxu0
        %v2586 = vadd.f32 %v2506, %v2585
        %v2587 = vpop.f32.mrb[0].mxu0
        %2588 = vmatprep.mubr.bf16.mxu0 0
        %2589 = vmatmul.mubr.bf16.gmra.mrb[0].mxu0 %v2530
        %v2590 = vpop.f32.mrb[0].mxu0
        %v2591 = vadd.f32 %v2506, %v2590
        %v2592 = vpop.f32.mrb[0].mxu0
        %v2593 = vpop.f32.mrb[0].mxu0
        %v2594 = vadd.f32 %v2506, %v2593
        %v2595 = vpop.f32.mrb[0].mxu0
        %2596 = vdwg.mxu0
        %2597 = vst.msk [vmem:[%s314] sm:$0xff] %vm353, %v2567
        %2598 = vst.msk [vmem:[%s314 + $0x8] sm:$0xff] %vm353, %v2570
        %2599 = vst.msk [vmem:[%s314 + $0x10] sm:$0xff] %vm353, %v2575
        %2600 = vst.msk [vmem:[%s314 + $0x18] sm:$0xff] %vm353, %v2578
        %2601 = vst.msk [vmem:[%s314 + $0x20] sm:$0xff] %vm353, %v2583
        %2602 = vst.msk [vmem:[%s314 + $0x28] sm:$0xff] %vm353, %v2586
        %2603 = vst.msk [vmem:[%s314 + $0x30] sm:$0xff] %vm353, %v2591
        %2604 = vst.msk [vmem:[%s314 + $0x38] sm:$0xff] %vm353, %v2594
        %s2605 = sand.u32 %s164, 1
        %s2606 = scalar_lea.sflag [#allocation6], %s2605
        %s2607 = sand.u32 %s164, 1
        %s2608 = smul.addr %s2607, 64
        %s2609 = scalar_lea.vmem [#allocation12], %s2608
        // Predicated region
        $region61: #{tpu_custom_call.1} parent=43 // pred_check
          %p2610 = pneg %p174
        $region62: #{tpu_custom_call.1} parent=43 // pred_check_branch
          %2612 = sbr.rel (%p2610) target = $region64
        $region63: #{tpu_custom_call.1} parent=43 // pred_region
          %s2613 = smul.u32 4, %s25
          %s2615 = ssub.s32 1024, 1024
          %2616 = vsyncadd %s2606, %s2615
          %s2617 = smul.addr %s2613, 2
          %s2618 = smul.addr %s2617, 128
          %s2619 = scalar_lea.hbm %s6, %s2618
          %s2620 = sshll.u32 %s2609, 4
          %s2621 = int_to_ptr.vmem [resolvable:$true] %s2620
          %2626 = dma.vmem_to_hbm [thread:$0]  %s2621, 1024, %s2619, %s2606, 128, 128, 8
        $region64: #{tpu_custom_call.1} parent=43 // pred_fallthru
          _
      $region44: #{tpu_custom_call.1} parent=5 // pred_fallthru
        _
      %p2627 = scmp.le.s32.totalorder 2, %s20
      // Predicated region
      $region65: #{tpu_custom_call.1} parent=5 // pred_check
        %p2628 = pneg %p2627
      $region66: #{tpu_custom_call.1} parent=5 // pred_check_branch
        %2630 = sbr.rel (%p2628) target = $region68
      $region67: #{tpu_custom_call.1} parent=5 // pred_region
        %s2631 = ssub.s32 %s20, 2
        // Predicated region
        $region69: #{tpu_custom_call.1} parent=67 // pred_check
          %p2632 = pneg %p180
        $region70: #{tpu_custom_call.1} parent=67 // pred_check_branch
          %2634 = sbr.rel (%p2632) target = $region72
        $region71: #{tpu_custom_call.1} parent=67 // pred_region
          %s2635 = sand.u32 %s165, 1
          %s2636 = scalar_lea.sflag [#allocation6], %s2635
          %s2637 = sand.u32 %s165, 1
          %s2638 = smul.addr %s2637, 64
          %s2639 = scalar_lea.vmem [#allocation12], %s2638
          %2640 = dma.done %s2636, 1024
        $region72: #{tpu_custom_call.1} parent=67 // pred_fallthru
          _
      $region68: #{tpu_custom_call.1} parent=5 // pred_fallthru
        _
    $region6: #{tpu_custom_call.1} parent=1 // loop_footer
      %s24 = sadd.s32 1, %s20
    $region7: #{tpu_custom_call.1} parent=1 // loop_footer_branch
      %19 = sbr.rel target = $region3
    $region8: #{tpu_custom_call.1} parent=1 // loop_exit
      _
    %2641 = vsyncpa [#allocation5], 1
    %s2642 = scalar_lea.sflag [#allocation5], 1
    %2643 = vsyncpa %s2642, 1
    %2644 = vsyncpa [#allocation8], 1
    %2645 = vsyncpa [#allocation11], 1
    %2646 = vsyncpa [#allocation6], 1
    %s2647 = scalar_lea.sflag [#allocation6], 1
    %2648 = vsyncpa %s2647, 1

</llo_original>
